<compile_context>
chip_gen: v5e
topology: v5e:2x2
jax: 0.10.0
libtpu: 0.0.40
codegen_flags: <defaults>
</compile_context>

<pallas_src>
import jax
import jax.numpy as jnp
from jax.experimental import pallas as pl

# ----------------------- small, TPU-friendly config ------------------------
IM_SIZE = 16            # cfg.TRAIN.IM_SIZE
PATCH = 8               # cfg.MODEL.PATCH_SIZE
WIDTH = 128             # cfg.MODEL.WIDTH
LAYERS = 2              # cfg.MODEL.LAYERS
EMB_DIM = 64            # cfg.MODEL.EMB_DIM
HEADS = WIDTH // 64     # = 2
HEAD_DIM = WIDTH // HEADS
BATCH = 2
GRID = IM_SIZE // PATCH
NUM_PATCHES = GRID * GRID           # 4
SEQ = NUM_PATCHES + 1               # 5
SEQ_PAD = 8                         # sublane-aligned per-image sequence length
TOT = BATCH * SEQ_PAD               # 16 rows: full bf16 sublane tile
PATCH_DIM = 3 * PATCH * PATCH       # 192
PATCH_K = 256                       # lane-aligned (zero-padded) patch features
OUT_PAD = 128                       # lane-dense output width (EMB_DIM padded)
LN_EPS = 1e-5
N_LAYER_ARGS = 16                   # weight tensors per transformer block


# ------------------------- fully fused ViT kernel ---------------------------
def _vit_kernel(patches_ref, wpatch_ref, base_ref, lnpre_w, lnpre_b, mask_ref,
                *rest):
    layer_refs = rest[:N_LAYER_ARGS * LAYERS]
    lnpost_w, lnpost_b, proj_ref, o_ref = rest[N_LAYER_ARGS * LAYERS:]

    def ln(v, w_ref, b_ref):
        # single-pass f32 layernorm over the 128-lane axis
        m = jnp.mean(v, axis=-1, keepdims=True)
        msq = jnp.mean(v * v, axis=-1, keepdims=True)
        var = msq - m * m
        return (v - m) * jax.lax.rsqrt(var + LN_EPS) * w_ref[...] + b_ref[...]

    def mm(a, w_ref):                            # bf16 MXU matmul, f32 accum
        return jnp.dot(a.astype(jnp.bfloat16), w_ref[...],
                       preferred_element_type=jnp.float32)

    def bdot(a, b):                              # bf16 activation x activation
        return jnp.dot(a.astype(jnp.bfloat16), b.astype(jnp.bfloat16),
                       preferred_element_type=jnp.float32)

    # patch embedding (conv1 as matmul) + class token + positional embedding.
    # base_ref holds per-image [cls+pos[0]; pos[1:SEQ]; zeros] tiled over batch.
    x = mm(patches_ref[...], wpatch_ref) + base_ref[...]      # (TOT, WIDTH)
    x = ln(x, lnpre_w, lnpre_b)                               # ln_pre

    mask = mask_ref[...]                                      # (TOT, TOT) bias

    for li in range(LAYERS):
        (ln1w, ln1b, wq, bq, wk, bk, wv, bv, wo, bo,
         ln2w, ln2b, wfc, bfc, wpr, bpr) = layer_refs[
            N_LAYER_ARGS * li:N_LAYER_ARGS * (li + 1)]

        # ----- multi-head self-attention (static loop over heads, no reshapes)
        h = ln(x, ln1w, ln1b)
        hb = h.astype(jnp.bfloat16)
        attn_acc = None
        for hh in range(HEADS):
            q = jnp.dot(hb, wq[hh], preferred_element_type=jnp.float32) + bq[hh]
            k = jnp.dot(hb, wk[hh], preferred_element_type=jnp.float32) + bk[hh]
            v = jnp.dot(hb, wv[hh], preferred_element_type=jnp.float32) + bv[hh]
            # scores: q @ k^T (scale already folded into wq/bq), masked softmax
            s = jax.lax.dot_general(
                q.astype(jnp.bfloat16), k.astype(jnp.bfloat16),
                (((1,), (1,)), ((), ())),
                preferred_element_type=jnp.float32)           # (TOT, TOT)
            s = s + mask
            s = s - jnp.max(s, axis=-1, keepdims=True)
            p = jnp.exp(s)
            p = p * pl.reciprocal(jnp.sum(p, axis=-1, keepdims=True),
                                  approx=True)
            av = bdot(p, v)                                   # (TOT, HEAD_DIM)
            contrib = bdot(av, wo[hh])                        # (TOT, WIDTH)
            attn_acc = contrib if attn_acc is None else attn_acc + contrib
        x = x + attn_acc + bo[...]

        # ---------------- MLP with QuickGELU ----------------
        h2 = ln(x, ln2w, ln2b)
        f = mm(h2, wfc) + bfc[...]                            # (TOT, 4W)
        f = f * jax.nn.sigmoid(1.702 * f)
        x = x + mm(f, wpr) + bpr[...]

    # ln_post + final projection on all rows (lane-dense store); the wrapper
    # keeps only the class-token rows and the first EMB_DIM columns.
    cls = ln(x, lnpost_w, lnpost_b)
    o_ref[...] = mm(cls, proj_ref).astype(o_ref.dtype)


# ------------------------------ parameter init ------------------------------
def init_params(key):
    scale = WIDTH ** -0.5
    attn_std = WIDTH ** -0.5
    proj_std = WIDTH ** -0.5 * (2 * LAYERS) ** -0.5
    fc_std = (2 * WIDTH) ** -0.5

    k = jax.random.split(key, 8)
    params = {
        'conv1': jax.random.normal(k[0], (WIDTH, 3, PATCH, PATCH),
                                   jnp.float32) * 0.02,
        'class_embedding': jax.random.normal(k[1], (WIDTH,),
                                             jnp.float32) * scale,
        'pos_embedding': jax.random.normal(k[2], (SEQ, WIDTH),
                                           jnp.float32) * scale,
        'ln_pre_w': jnp.ones((1, WIDTH), jnp.float32),
        'ln_pre_b': jnp.zeros((1, WIDTH), jnp.float32),
        'ln_post_w': jnp.ones((1, WIDTH), jnp.float32),
        'ln_post_b': jnp.zeros((1, WIDTH), jnp.float32),
        'proj': jax.random.normal(k[3], (WIDTH, EMB_DIM), jnp.float32) * scale,
        'blocks': [],
    }
    for layer in range(LAYERS):
        bk = jax.random.split(jax.random.fold_in(key, 100 + layer), 4)
        params['blocks'].append({
            'ln1_w': jnp.ones((1, WIDTH), jnp.float32),
            'ln1_b': jnp.zeros((1, WIDTH), jnp.float32),
            'w_qkv': jax.random.normal(bk[0], (WIDTH, 3 * WIDTH),
                                       jnp.float32) * attn_std,
            'b_qkv': jnp.zeros((1, 3 * WIDTH), jnp.float32),
            'w_out': jax.random.normal(bk[1], (WIDTH, WIDTH),
                                       jnp.float32) * proj_std,
            'b_out': jnp.zeros((1, WIDTH), jnp.float32),
            'ln2_w': jnp.ones((1, WIDTH), jnp.float32),
            'ln2_b': jnp.zeros((1, WIDTH), jnp.float32),
            'w_fc': jax.random.normal(bk[2], (WIDTH, 4 * WIDTH),
                                      jnp.float32) * fc_std,
            'b_fc': jnp.zeros((1, 4 * WIDTH), jnp.float32),
            'w_proj': jax.random.normal(bk[3], (4 * WIDTH, WIDTH),
                                        jnp.float32) * proj_std,
            'b_proj': jnp.zeros((1, WIDTH), jnp.float32),
        })
    return params


def prepare_params(params):
    """One-time conversion to kernel-ready, padded, per-head-split arguments."""
    attn_scale = float(HEAD_DIM) ** -0.5

    w_patch = params['conv1'].reshape(WIDTH, PATCH_DIM).T          # (192, 128)
    w_patch = jnp.pad(w_patch, ((0, PATCH_K - PATCH_DIM), (0, 0))
                      ).astype(jnp.bfloat16)                       # (256, 128)

    base = jnp.pad(params['pos_embedding'], ((0, SEQ_PAD - SEQ), (0, 0)))
    base = base.at[0, :].add(params['class_embedding'])            # (8, 128)
    base = jnp.tile(base, (BATCH, 1))                              # (16, 128)

    # block-diagonal additive key mask: 0 for valid keys of the same image,
    # -1e30 for padded keys / keys of other images.
    idx = jnp.arange(TOT)
    valid = ((idx[None, :] // SEQ_PAD) == (idx[:, None] // SEQ_PAD)) & \
            ((idx[None, :] % SEQ_PAD) < SEQ)
    mask_bias = jnp.where(valid, 0.0, -1e30).astype(jnp.float32)   # (16, 16)

    args = [w_patch, base, params['ln_pre_w'], params['ln_pre_b'], mask_bias]

    def col(mat, sec, h):   # head-h slab of qkv section sec (0=q, 1=k, 2=v)
        lo = sec * WIDTH + h * HEAD_DIM
        return mat[..., lo:lo + HEAD_DIM]

    for blk in params['blocks']:
        wqkv, bqkv = blk['w_qkv'], blk['b_qkv']
        wq = jnp.stack([col(wqkv, 0, h) * attn_scale
                        for h in range(HEADS)]).astype(jnp.bfloat16)
        wk = jnp.stack([col(wqkv, 1, h)
                        for h in range(HEADS)]).astype(jnp.bfloat16)
        wv = jnp.stack([col(wqkv, 2, h)
                        for h in range(HEADS)]).astype(jnp.bfloat16)
        bq = jnp.stack([col(bqkv, 0, h) * attn_scale for h in range(HEADS)])
        bk_ = jnp.stack([col(bqkv, 1, h) for h in range(HEADS)])
        bv = jnp.stack([col(bqkv, 2, h) for h in range(HEADS)])
        wo = jnp.stack([blk['w_out'][h * HEAD_DIM:(h + 1) * HEAD_DIM, :]
                        for h in range(HEADS)]).astype(jnp.bfloat16)
        args += [blk['ln1_w'], blk['ln1_b'],
                 wq, bq, wk, bk_, wv, bv, wo, blk['b_out'],
                 blk['ln2_w'], blk['ln2_b'],
                 blk['w_fc'].astype(jnp.bfloat16), blk['b_fc'],
                 blk['w_proj'].astype(jnp.bfloat16), blk['b_proj']]

    proj_pad = jnp.pad(params['proj'], ((0, 0), (0, OUT_PAD - EMB_DIM))
                       ).astype(jnp.bfloat16)                      # (128, 128)
    args += [params['ln_post_w'], params['ln_post_b'], proj_pad]
    return args


# -------------------------------- forward pass -------------------------------
def vit_forward(x, kargs):
    b = x.shape[0]
    assert b == BATCH, "kernel args were prepared for BATCH images"
    # conv1 (kernel == stride == patch, no bias) == patchify + matmul.
    p = x.reshape(b, 3, GRID, PATCH, GRID, PATCH)
    p = p.transpose(0, 2, 4, 1, 3, 5).reshape(b, NUM_PATCHES, PATCH_DIM)
    # seq slot 0 reserved for the class token; rows 5..7 and K 192..255 are pad.
    patches = jnp.pad(p, ((0, 0),
                          (1, SEQ_PAD - 1 - NUM_PATCHES),
                          (0, PATCH_K - PATCH_DIM)))
    patches = patches.reshape(b * SEQ_PAD, PATCH_K).astype(jnp.bfloat16)

    # Single grid step: whole (16, 128) slab + all weights (<1 MB) fit in VMEM
    # on every generation, so no grid / BlockSpec pipelining is needed.
    # TODO(synk): on v7x a 2-wide "parallel" grid over batch halves could use
    # both TensorCores; kept single-step since the kernel is launch-latency bound.
    out = pl.pallas_call(
        _vit_kernel,
        out_shape=jax.ShapeDtypeStruct((b * SEQ_PAD, OUT_PAD), jnp.float32),
    )(patches, *kargs)
    # keep only class-token rows and the real embedding columns.
    return out.reshape(b, SEQ_PAD, OUT_PAD)[:, 0, :EMB_DIM]


# ------------------------------ plain JAX reference ---------------------------
def reference_forward(x, params):
    def ln(v, w, b):
        m = jnp.mean(v, axis=-1, keepdims=True)
        var = jnp.mean(jnp.square(v - m), axis=-1, keepdims=True)
        return (v - m) * jax.lax.rsqrt(var + LN_EPS) * w + b

    b = x.shape[0]
    p = x.reshape(b, 3, GRID, PATCH, GRID, PATCH)
    p = p.transpose(0, 2, 4, 1, 3, 5).reshape(b * NUM_PATCHES, PATCH_DIM)
    w_patch = params['conv1'].reshape(WIDTH, PATCH_DIM).T
    feat = (p @ w_patch).reshape(b, NUM_PATCHES, WIDTH)
    cls = jnp.broadcast_to(params['class_embedding'][None, None, :],
                           (b, 1, WIDTH))
    xs = jnp.concatenate([cls, feat], axis=1) + params['pos_embedding'][None]
    xs = ln(xs, params['ln_pre_w'], params['ln_pre_b'])

    scale = float(HEAD_DIM) ** -0.5
    for blk in params['blocks']:
        h = ln(xs, blk['ln1_w'], blk['ln1_b'])
        qkv = jnp.einsum('bsd,de->bse', h, blk['w_qkv']) + blk['b_qkv']
        q, k, v = jnp.split(qkv, 3, axis=-1)
        q = q.reshape(b, SEQ, HEADS, HEAD_DIM)
        k = k.reshape(b, SEQ, HEADS, HEAD_DIM)
        v = v.reshape(b, SEQ, HEADS, HEAD_DIM)
        s = jnp.einsum('bqhd,bkhd->bhqk', q * scale, k)
        p_ = jax.nn.softmax(s, axis=-1)
        attn = jnp.einsum('bhqk,bkhd->bqhd', p_, v).reshape(b, SEQ, WIDTH)
        attn = jnp.einsum('bsd,de->bse', attn, blk['w_out']) + blk['b_out']
        xs = xs + attn
        h2 = ln(xs, blk['ln2_w'], blk['ln2_b'])
        f = jnp.einsum('bsd,de->bse', h2, blk['w_fc']) + blk['b_fc']
        f = f * jax.nn.sigmoid(1.702 * f)
        f = jnp.einsum('bsd,de->bse', f, blk['w_proj']) + blk['b_proj']
        xs = xs + f

    cls_tok = ln(xs[:, 0, :], params['ln_post_w'], params['ln_post_b'])
    return cls_tok @ params['proj']


# ----------------------------------- main ------------------------------------
if __name__ == "__main__":
    key = jax.random.PRNGKey(0)
    pkey, xkey = jax.random.split(key)
    params = init_params(pkey)
    x = jax.random.normal(xkey, (BATCH, 3, IM_SIZE, IM_SIZE), jnp.float32)

    kargs = prepare_params(params)
    fwd = jax.jit(vit_forward)
    out = jax.block_until_ready(fwd(x, kargs))

    assert out.shape == (BATCH, EMB_DIM), out.shape
    assert bool(jnp.all(jnp.isfinite(out)))

    with jax.default_matmul_precision('float32'):
        ref = jax.block_until_ready(reference_forward(x, params))
    # bf16 matmul operands (f32 accumulate) => slightly looser tolerance.
    assert bool(jnp.allclose(out, ref, rtol=2e-2, atol=2e-2)), (
        float(jnp.max(jnp.abs(out - ref))))

    print("KERNEL_OK")
</pallas_src>

<mosaic_0001>
module attributes {stable_mosaic.version = 11 : i64} {
  func.func @_vit_kernel(%arg0: memref<16x256xbf16, #tpu.memory_space<vmem>>, %arg1: memref<256x128xbf16, #tpu.memory_space<vmem>>, %arg2: memref<16x128xf32, #tpu.memory_space<vmem>>, %arg3: memref<1x128xf32, #tpu.memory_space<vmem>>, %arg4: memref<1x128xf32, #tpu.memory_space<vmem>>, %arg5: memref<16x16xf32, #tpu.memory_space<vmem>>, %arg6: memref<1x128xf32, #tpu.memory_space<vmem>>, %arg7: memref<1x128xf32, #tpu.memory_space<vmem>>, %arg8: memref<2x128x64xbf16, #tpu.memory_space<vmem>>, %arg9: memref<2x1x64xf32, #tpu.memory_space<vmem>>, %arg10: memref<2x128x64xbf16, #tpu.memory_space<vmem>>, %arg11: memref<2x1x64xf32, #tpu.memory_space<vmem>>, %arg12: memref<2x128x64xbf16, #tpu.memory_space<vmem>>, %arg13: memref<2x1x64xf32, #tpu.memory_space<vmem>>, %arg14: memref<2x64x128xbf16, #tpu.memory_space<vmem>>, %arg15: memref<1x128xf32, #tpu.memory_space<vmem>>, %arg16: memref<1x128xf32, #tpu.memory_space<vmem>>, %arg17: memref<1x128xf32, #tpu.memory_space<vmem>>, %arg18: memref<128x512xbf16, #tpu.memory_space<vmem>>, %arg19: memref<1x512xf32, #tpu.memory_space<vmem>>, %arg20: memref<512x128xbf16, #tpu.memory_space<vmem>>, %arg21: memref<1x128xf32, #tpu.memory_space<vmem>>, %arg22: memref<1x128xf32, #tpu.memory_space<vmem>>, %arg23: memref<1x128xf32, #tpu.memory_space<vmem>>, %arg24: memref<2x128x64xbf16, #tpu.memory_space<vmem>>, %arg25: memref<2x1x64xf32, #tpu.memory_space<vmem>>, %arg26: memref<2x128x64xbf16, #tpu.memory_space<vmem>>, %arg27: memref<2x1x64xf32, #tpu.memory_space<vmem>>, %arg28: memref<2x128x64xbf16, #tpu.memory_space<vmem>>, %arg29: memref<2x1x64xf32, #tpu.memory_space<vmem>>, %arg30: memref<2x64x128xbf16, #tpu.memory_space<vmem>>, %arg31: memref<1x128xf32, #tpu.memory_space<vmem>>, %arg32: memref<1x128xf32, #tpu.memory_space<vmem>>, %arg33: memref<1x128xf32, #tpu.memory_space<vmem>>, %arg34: memref<128x512xbf16, #tpu.memory_space<vmem>>, %arg35: memref<1x512xf32, #tpu.memory_space<vmem>>, %arg36: memref<512x128xbf16, #tpu.memory_space<vmem>>, %arg37: memref<1x128xf32, #tpu.memory_space<vmem>>, %arg38: memref<1x128xf32, #tpu.memory_space<vmem>>, %arg39: memref<1x128xf32, #tpu.memory_space<vmem>>, %arg40: memref<128x128xbf16, #tpu.memory_space<vmem>>, %arg41: memref<16x128xf32, #tpu.memory_space<vmem>>) attributes {dimension_semantics = [], scalar_prefetch = 0 : i64, scratch_operands = 0 : i64, tpu.core_type = #tpu.core_type<tc>} {
    %c0 = arith.constant 0 : index
    %c0_0 = arith.constant 0 : index
    %0 = vector.load %arg0[%c0, %c0_0] : memref<16x256xbf16, #tpu.memory_space<vmem>>, vector<16x256xbf16>
    %c0_1 = arith.constant 0 : index
    %c0_2 = arith.constant 0 : index
    %1 = vector.load %arg1[%c0_1, %c0_2] : memref<256x128xbf16, #tpu.memory_space<vmem>>, vector<256x128xbf16>
    %cst = arith.constant dense<0.000000e+00> : vector<16x128xf32>
    %2 = tpu.matmul %0, %1, %cst {dimension_numbers = #tpu.dot_dimension_numbers<[1], [0], [0], [1], [0, 0, 1, 1], [], []>} : vector<16x256xbf16>, vector<256x128xbf16>, vector<16x128xf32> -> vector<16x128xf32>
    %c0_3 = arith.constant 0 : index
    %c0_4 = arith.constant 0 : index
    %3 = vector.load %arg2[%c0_3, %c0_4] : memref<16x128xf32, #tpu.memory_space<vmem>>, vector<16x128xf32>
    %4 = arith.addf %2, %3 : vector<16x128xf32>
    %cst_5 = arith.constant dense<0.000000e+00> : vector<16xf32>
    %5 = vector.multi_reduction <add>, %4, %cst_5 [1] : vector<16x128xf32> to vector<16xf32>
    %6 = vector.shape_cast %5 : vector<16xf32> to vector<16x1xf32>
    %cst_6 = arith.constant 1.280000e+02 : f32
    %7 = vector.broadcast %cst_6 : f32 to vector<16x1xf32>
    %8 = arith.divf %6, %7 : vector<16x1xf32>
    %9 = arith.mulf %4, %4 : vector<16x128xf32>
    %cst_7 = arith.constant dense<0.000000e+00> : vector<16xf32>
    %10 = vector.multi_reduction <add>, %9, %cst_7 [1] : vector<16x128xf32> to vector<16xf32>
    %11 = vector.shape_cast %10 : vector<16xf32> to vector<16x1xf32>
    %cst_8 = arith.constant 1.280000e+02 : f32
    %12 = vector.broadcast %cst_8 : f32 to vector<16x1xf32>
    %13 = arith.divf %11, %12 : vector<16x1xf32>
    %14 = arith.mulf %8, %8 : vector<16x1xf32>
    %15 = arith.subf %13, %14 : vector<16x1xf32>
    %16 = vector.broadcast %8 : vector<16x1xf32> to vector<16x128xf32>
    %17 = arith.subf %4, %16 : vector<16x128xf32>
    %cst_9 = arith.constant 9.99999974E-6 : f32
    %18 = vector.broadcast %cst_9 : f32 to vector<16x1xf32>
    %19 = arith.addf %15, %18 : vector<16x1xf32>
    %20 = math.rsqrt %19 : vector<16x1xf32>
    %21 = vector.broadcast %20 : vector<16x1xf32> to vector<16x128xf32>
    %22 = arith.mulf %17, %21 : vector<16x128xf32>
    %c0_10 = arith.constant 0 : index
    %c0_11 = arith.constant 0 : index
    %23 = vector.load %arg3[%c0_10, %c0_11] : memref<1x128xf32, #tpu.memory_space<vmem>>, vector<1x128xf32>
    %24 = vector.broadcast %23 : vector<1x128xf32> to vector<16x128xf32>
    %25 = arith.mulf %22, %24 : vector<16x128xf32>
    %c0_12 = arith.constant 0 : index
    %c0_13 = arith.constant 0 : index
    %26 = vector.load %arg4[%c0_12, %c0_13] : memref<1x128xf32, #tpu.memory_space<vmem>>, vector<1x128xf32>
    %27 = vector.broadcast %26 : vector<1x128xf32> to vector<16x128xf32>
    %28 = arith.addf %25, %27 : vector<16x128xf32>
    %c0_14 = arith.constant 0 : index
    %c0_15 = arith.constant 0 : index
    %29 = vector.load %arg5[%c0_14, %c0_15] : memref<16x16xf32, #tpu.memory_space<vmem>>, vector<16x16xf32>
    %cst_16 = arith.constant dense<0.000000e+00> : vector<16xf32>
    %30 = vector.multi_reduction <add>, %28, %cst_16 [1] : vector<16x128xf32> to vector<16xf32>
    %31 = vector.shape_cast %30 : vector<16xf32> to vector<16x1xf32>
    %cst_17 = arith.constant 1.280000e+02 : f32
    %32 = vector.broadcast %cst_17 : f32 to vector<16x1xf32>
    %33 = arith.divf %31, %32 : vector<16x1xf32>
    %34 = arith.mulf %28, %28 : vector<16x128xf32>
    %cst_18 = arith.constant dense<0.000000e+00> : vector<16xf32>
    %35 = vector.multi_reduction <add>, %34, %cst_18 [1] : vector<16x128xf32> to vector<16xf32>
    %36 = vector.shape_cast %35 : vector<16xf32> to vector<16x1xf32>
    %cst_19 = arith.constant 1.280000e+02 : f32
    %37 = vector.broadcast %cst_19 : f32 to vector<16x1xf32>
    %38 = arith.divf %36, %37 : vector<16x1xf32>
    %39 = arith.mulf %33, %33 : vector<16x1xf32>
    %40 = arith.subf %38, %39 : vector<16x1xf32>
    %41 = vector.broadcast %33 : vector<16x1xf32> to vector<16x128xf32>
    %42 = arith.subf %28, %41 : vector<16x128xf32>
    %cst_20 = arith.constant 9.99999974E-6 : f32
    %43 = vector.broadcast %cst_20 : f32 to vector<16x1xf32>
    %44 = arith.addf %40, %43 : vector<16x1xf32>
    %45 = math.rsqrt %44 : vector<16x1xf32>
    %46 = vector.broadcast %45 : vector<16x1xf32> to vector<16x128xf32>
    %47 = arith.mulf %42, %46 : vector<16x128xf32>
    %c0_21 = arith.constant 0 : index
    %c0_22 = arith.constant 0 : index
    %48 = vector.load %arg6[%c0_21, %c0_22] : memref<1x128xf32, #tpu.memory_space<vmem>>, vector<1x128xf32>
    %49 = vector.broadcast %48 : vector<1x128xf32> to vector<16x128xf32>
    %50 = arith.mulf %47, %49 : vector<16x128xf32>
    %c0_23 = arith.constant 0 : index
    %c0_24 = arith.constant 0 : index
    %51 = vector.load %arg7[%c0_23, %c0_24] : memref<1x128xf32, #tpu.memory_space<vmem>>, vector<1x128xf32>
    %52 = vector.broadcast %51 : vector<1x128xf32> to vector<16x128xf32>
    %53 = arith.addf %50, %52 : vector<16x128xf32>
    %54 = arith.truncf %53 : vector<16x128xf32> to vector<16x128xbf16>
    %c0_25 = arith.constant 0 : index
    %c0_26 = arith.constant 0 : index
    %c0_27 = arith.constant 0 : index
    %55 = vector.load %arg8[%c0_25, %c0_26, %c0_27] : memref<2x128x64xbf16, #tpu.memory_space<vmem>>, vector<1x128x64xbf16>
    %56 = vector.shape_cast %55 : vector<1x128x64xbf16> to vector<128x64xbf16>
    %cst_28 = arith.constant dense<0.000000e+00> : vector<16x64xf32>
    %57 = tpu.matmul %54, %56, %cst_28 {dimension_numbers = #tpu.dot_dimension_numbers<[1], [0], [0], [1], [0, 0, 1, 1], [], []>} : vector<16x128xbf16>, vector<128x64xbf16>, vector<16x64xf32> -> vector<16x64xf32>
    %c0_29 = arith.constant 0 : index
    %c0_30 = arith.constant 0 : index
    %c0_31 = arith.constant 0 : index
    %58 = vector.load %arg9[%c0_29, %c0_30, %c0_31] : memref<2x1x64xf32, #tpu.memory_space<vmem>>, vector<1x1x64xf32>
    %59 = vector.shape_cast %58 : vector<1x1x64xf32> to vector<1x64xf32>
    %60 = vector.broadcast %59 : vector<1x64xf32> to vector<16x64xf32>
    %61 = arith.addf %57, %60 : vector<16x64xf32>
    %c0_32 = arith.constant 0 : index
    %c0_33 = arith.constant 0 : index
    %c0_34 = arith.constant 0 : index
    %62 = vector.load %arg10[%c0_32, %c0_33, %c0_34] : memref<2x128x64xbf16, #tpu.memory_space<vmem>>, vector<1x128x64xbf16>
    %63 = vector.shape_cast %62 : vector<1x128x64xbf16> to vector<128x64xbf16>
    %cst_35 = arith.constant dense<0.000000e+00> : vector<16x64xf32>
    %64 = tpu.matmul %54, %63, %cst_35 {dimension_numbers = #tpu.dot_dimension_numbers<[1], [0], [0], [1], [0, 0, 1, 1], [], []>} : vector<16x128xbf16>, vector<128x64xbf16>, vector<16x64xf32> -> vector<16x64xf32>
    %c0_36 = arith.constant 0 : index
    %c0_37 = arith.constant 0 : index
    %c0_38 = arith.constant 0 : index
    %65 = vector.load %arg11[%c0_36, %c0_37, %c0_38] : memref<2x1x64xf32, #tpu.memory_space<vmem>>, vector<1x1x64xf32>
    %66 = vector.shape_cast %65 : vector<1x1x64xf32> to vector<1x64xf32>
    %67 = vector.broadcast %66 : vector<1x64xf32> to vector<16x64xf32>
    %68 = arith.addf %64, %67 : vector<16x64xf32>
    %c0_39 = arith.constant 0 : index
    %c0_40 = arith.constant 0 : index
    %c0_41 = arith.constant 0 : index
    %69 = vector.load %arg12[%c0_39, %c0_40, %c0_41] : memref<2x128x64xbf16, #tpu.memory_space<vmem>>, vector<1x128x64xbf16>
    %70 = vector.shape_cast %69 : vector<1x128x64xbf16> to vector<128x64xbf16>
    %cst_42 = arith.constant dense<0.000000e+00> : vector<16x64xf32>
    %71 = tpu.matmul %54, %70, %cst_42 {dimension_numbers = #tpu.dot_dimension_numbers<[1], [0], [0], [1], [0, 0, 1, 1], [], []>} : vector<16x128xbf16>, vector<128x64xbf16>, vector<16x64xf32> -> vector<16x64xf32>
    %c0_43 = arith.constant 0 : index
    %c0_44 = arith.constant 0 : index
    %c0_45 = arith.constant 0 : index
    %72 = vector.load %arg13[%c0_43, %c0_44, %c0_45] : memref<2x1x64xf32, #tpu.memory_space<vmem>>, vector<1x1x64xf32>
    %73 = vector.shape_cast %72 : vector<1x1x64xf32> to vector<1x64xf32>
    %74 = vector.broadcast %73 : vector<1x64xf32> to vector<16x64xf32>
    %75 = arith.addf %71, %74 : vector<16x64xf32>
    %76 = arith.truncf %61 : vector<16x64xf32> to vector<16x64xbf16>
    %77 = arith.truncf %68 : vector<16x64xf32> to vector<16x64xbf16>
    %cst_46 = arith.constant dense<0.000000e+00> : vector<16x16xf32>
    %78 = tpu.matmul %76, %77, %cst_46 {dimension_numbers = #tpu.dot_dimension_numbers<[1], [1], [0], [0], [0, 0, 1, 0], [], []>} : vector<16x64xbf16>, vector<16x64xbf16>, vector<16x16xf32> -> vector<16x16xf32>
    %79 = arith.addf %78, %29 : vector<16x16xf32>
    %cst_47 = arith.constant dense<0xFF800000> : vector<16xf32>
    %80 = vector.multi_reduction <maximumf>, %79, %cst_47 [1] : vector<16x16xf32> to vector<16xf32>
    %81 = vector.shape_cast %80 : vector<16xf32> to vector<16x1xf32>
    %82 = vector.broadcast %81 : vector<16x1xf32> to vector<16x16xf32>
    %83 = arith.subf %79, %82 : vector<16x16xf32>
    %84 = math.exp %83 : vector<16x16xf32>
    %cst_48 = arith.constant dense<0.000000e+00> : vector<16xf32>
    %85 = vector.multi_reduction <add>, %84, %cst_48 [1] : vector<16x16xf32> to vector<16xf32>
    %86 = vector.shape_cast %85 : vector<16xf32> to vector<16x1xf32>
    %87 = tpu.reciprocal %86 {approx = true} : vector<16x1xf32> -> vector<16x1xf32>
    %88 = vector.broadcast %87 : vector<16x1xf32> to vector<16x16xf32>
    %89 = arith.mulf %84, %88 : vector<16x16xf32>
    %90 = arith.truncf %89 : vector<16x16xf32> to vector<16x16xbf16>
    %91 = arith.truncf %75 : vector<16x64xf32> to vector<16x64xbf16>
    %cst_49 = arith.constant dense<0.000000e+00> : vector<16x64xf32>
    %92 = tpu.matmul %90, %91, %cst_49 {dimension_numbers = #tpu.dot_dimension_numbers<[1], [0], [0], [1], [0, 0, 1, 1], [], []>} : vector<16x16xbf16>, vector<16x64xbf16>, vector<16x64xf32> -> vector<16x64xf32>
    %c0_50 = arith.constant 0 : index
    %c0_51 = arith.constant 0 : index
    %c0_52 = arith.constant 0 : index
    %93 = vector.load %arg14[%c0_50, %c0_51, %c0_52] : memref<2x64x128xbf16, #tpu.memory_space<vmem>>, vector<1x64x128xbf16>
    %94 = vector.shape_cast %93 : vector<1x64x128xbf16> to vector<64x128xbf16>
    %95 = arith.truncf %92 : vector<16x64xf32> to vector<16x64xbf16>
    %cst_53 = arith.constant dense<0.000000e+00> : vector<16x128xf32>
    %96 = tpu.matmul %95, %94, %cst_53 {dimension_numbers = #tpu.dot_dimension_numbers<[1], [0], [0], [1], [0, 0, 1, 1], [], []>} : vector<16x64xbf16>, vector<64x128xbf16>, vector<16x128xf32> -> vector<16x128xf32>
    %c1 = arith.constant 1 : index
    %c0_54 = arith.constant 0 : index
    %c0_55 = arith.constant 0 : index
    %97 = vector.load %arg8[%c1, %c0_54, %c0_55] : memref<2x128x64xbf16, #tpu.memory_space<vmem>>, vector<1x128x64xbf16>
    %98 = vector.shape_cast %97 : vector<1x128x64xbf16> to vector<128x64xbf16>
    %cst_56 = arith.constant dense<0.000000e+00> : vector<16x64xf32>
    %99 = tpu.matmul %54, %98, %cst_56 {dimension_numbers = #tpu.dot_dimension_numbers<[1], [0], [0], [1], [0, 0, 1, 1], [], []>} : vector<16x128xbf16>, vector<128x64xbf16>, vector<16x64xf32> -> vector<16x64xf32>
    %c1_57 = arith.constant 1 : index
    %c0_58 = arith.constant 0 : index
    %c0_59 = arith.constant 0 : index
    %100 = vector.load %arg9[%c1_57, %c0_58, %c0_59] : memref<2x1x64xf32, #tpu.memory_space<vmem>>, vector<1x1x64xf32>
    %101 = vector.shape_cast %100 : vector<1x1x64xf32> to vector<1x64xf32>
    %102 = vector.broadcast %101 : vector<1x64xf32> to vector<16x64xf32>
    %103 = arith.addf %99, %102 : vector<16x64xf32>
    %c1_60 = arith.constant 1 : index
    %c0_61 = arith.constant 0 : index
    %c0_62 = arith.constant 0 : index
    %104 = vector.load %arg10[%c1_60, %c0_61, %c0_62] : memref<2x128x64xbf16, #tpu.memory_space<vmem>>, vector<1x128x64xbf16>
    %105 = vector.shape_cast %104 : vector<1x128x64xbf16> to vector<128x64xbf16>
    %cst_63 = arith.constant dense<0.000000e+00> : vector<16x64xf32>
    %106 = tpu.matmul %54, %105, %cst_63 {dimension_numbers = #tpu.dot_dimension_numbers<[1], [0], [0], [1], [0, 0, 1, 1], [], []>} : vector<16x128xbf16>, vector<128x64xbf16>, vector<16x64xf32> -> vector<16x64xf32>
    %c1_64 = arith.constant 1 : index
    %c0_65 = arith.constant 0 : index
    %c0_66 = arith.constant 0 : index
    %107 = vector.load %arg11[%c1_64, %c0_65, %c0_66] : memref<2x1x64xf32, #tpu.memory_space<vmem>>, vector<1x1x64xf32>
    %108 = vector.shape_cast %107 : vector<1x1x64xf32> to vector<1x64xf32>
    %109 = vector.broadcast %108 : vector<1x64xf32> to vector<16x64xf32>
    %110 = arith.addf %106, %109 : vector<16x64xf32>
    %c1_67 = arith.constant 1 : index
    %c0_68 = arith.constant 0 : index
    %c0_69 = arith.constant 0 : index
    %111 = vector.load %arg12[%c1_67, %c0_68, %c0_69] : memref<2x128x64xbf16, #tpu.memory_space<vmem>>, vector<1x128x64xbf16>
    %112 = vector.shape_cast %111 : vector<1x128x64xbf16> to vector<128x64xbf16>
    %cst_70 = arith.constant dense<0.000000e+00> : vector<16x64xf32>
    %113 = tpu.matmul %54, %112, %cst_70 {dimension_numbers = #tpu.dot_dimension_numbers<[1], [0], [0], [1], [0, 0, 1, 1], [], []>} : vector<16x128xbf16>, vector<128x64xbf16>, vector<16x64xf32> -> vector<16x64xf32>
    %c1_71 = arith.constant 1 : index
    %c0_72 = arith.constant 0 : index
    %c0_73 = arith.constant 0 : index
    %114 = vector.load %arg13[%c1_71, %c0_72, %c0_73] : memref<2x1x64xf32, #tpu.memory_space<vmem>>, vector<1x1x64xf32>
    %115 = vector.shape_cast %114 : vector<1x1x64xf32> to vector<1x64xf32>
    %116 = vector.broadcast %115 : vector<1x64xf32> to vector<16x64xf32>
    %117 = arith.addf %113, %116 : vector<16x64xf32>
    %118 = arith.truncf %103 : vector<16x64xf32> to vector<16x64xbf16>
    %119 = arith.truncf %110 : vector<16x64xf32> to vector<16x64xbf16>
    %cst_74 = arith.constant dense<0.000000e+00> : vector<16x16xf32>
    %120 = tpu.matmul %118, %119, %cst_74 {dimension_numbers = #tpu.dot_dimension_numbers<[1], [1], [0], [0], [0, 0, 1, 0], [], []>} : vector<16x64xbf16>, vector<16x64xbf16>, vector<16x16xf32> -> vector<16x16xf32>
    %121 = arith.addf %120, %29 : vector<16x16xf32>
    %cst_75 = arith.constant dense<0xFF800000> : vector<16xf32>
    %122 = vector.multi_reduction <maximumf>, %121, %cst_75 [1] : vector<16x16xf32> to vector<16xf32>
    %123 = vector.shape_cast %122 : vector<16xf32> to vector<16x1xf32>
    %124 = vector.broadcast %123 : vector<16x1xf32> to vector<16x16xf32>
    %125 = arith.subf %121, %124 : vector<16x16xf32>
    %126 = math.exp %125 : vector<16x16xf32>
    %cst_76 = arith.constant dense<0.000000e+00> : vector<16xf32>
    %127 = vector.multi_reduction <add>, %126, %cst_76 [1] : vector<16x16xf32> to vector<16xf32>
    %128 = vector.shape_cast %127 : vector<16xf32> to vector<16x1xf32>
    %129 = tpu.reciprocal %128 {approx = true} : vector<16x1xf32> -> vector<16x1xf32>
    %130 = vector.broadcast %129 : vector<16x1xf32> to vector<16x16xf32>
    %131 = arith.mulf %126, %130 : vector<16x16xf32>
    %132 = arith.truncf %131 : vector<16x16xf32> to vector<16x16xbf16>
    %133 = arith.truncf %117 : vector<16x64xf32> to vector<16x64xbf16>
    %cst_77 = arith.constant dense<0.000000e+00> : vector<16x64xf32>
    %134 = tpu.matmul %132, %133, %cst_77 {dimension_numbers = #tpu.dot_dimension_numbers<[1], [0], [0], [1], [0, 0, 1, 1], [], []>} : vector<16x16xbf16>, vector<16x64xbf16>, vector<16x64xf32> -> vector<16x64xf32>
    %c1_78 = arith.constant 1 : index
    %c0_79 = arith.constant 0 : index
    %c0_80 = arith.constant 0 : index
    %135 = vector.load %arg14[%c1_78, %c0_79, %c0_80] : memref<2x64x128xbf16, #tpu.memory_space<vmem>>, vector<1x64x128xbf16>
    %136 = vector.shape_cast %135 : vector<1x64x128xbf16> to vector<64x128xbf16>
    %137 = arith.truncf %134 : vector<16x64xf32> to vector<16x64xbf16>
    %cst_81 = arith.constant dense<0.000000e+00> : vector<16x128xf32>
    %138 = tpu.matmul %137, %136, %cst_81 {dimension_numbers = #tpu.dot_dimension_numbers<[1], [0], [0], [1], [0, 0, 1, 1], [], []>} : vector<16x64xbf16>, vector<64x128xbf16>, vector<16x128xf32> -> vector<16x128xf32>
    %139 = arith.addf %96, %138 : vector<16x128xf32>
    %140 = arith.addf %28, %139 : vector<16x128xf32>
    %c0_82 = arith.constant 0 : index
    %c0_83 = arith.constant 0 : index
    %141 = vector.load %arg15[%c0_82, %c0_83] : memref<1x128xf32, #tpu.memory_space<vmem>>, vector<1x128xf32>
    %142 = vector.broadcast %141 : vector<1x128xf32> to vector<16x128xf32>
    %143 = arith.addf %140, %142 : vector<16x128xf32>
    %cst_84 = arith.constant dense<0.000000e+00> : vector<16xf32>
    %144 = vector.multi_reduction <add>, %143, %cst_84 [1] : vector<16x128xf32> to vector<16xf32>
    %145 = vector.shape_cast %144 : vector<16xf32> to vector<16x1xf32>
    %cst_85 = arith.constant 1.280000e+02 : f32
    %146 = vector.broadcast %cst_85 : f32 to vector<16x1xf32>
    %147 = arith.divf %145, %146 : vector<16x1xf32>
    %148 = arith.mulf %143, %143 : vector<16x128xf32>
    %cst_86 = arith.constant dense<0.000000e+00> : vector<16xf32>
    %149 = vector.multi_reduction <add>, %148, %cst_86 [1] : vector<16x128xf32> to vector<16xf32>
    %150 = vector.shape_cast %149 : vector<16xf32> to vector<16x1xf32>
    %cst_87 = arith.constant 1.280000e+02 : f32
    %151 = vector.broadcast %cst_87 : f32 to vector<16x1xf32>
    %152 = arith.divf %150, %151 : vector<16x1xf32>
    %153 = arith.mulf %147, %147 : vector<16x1xf32>
    %154 = arith.subf %152, %153 : vector<16x1xf32>
    %155 = vector.broadcast %147 : vector<16x1xf32> to vector<16x128xf32>
    %156 = arith.subf %143, %155 : vector<16x128xf32>
    %cst_88 = arith.constant 9.99999974E-6 : f32
    %157 = vector.broadcast %cst_88 : f32 to vector<16x1xf32>
    %158 = arith.addf %154, %157 : vector<16x1xf32>
    %159 = math.rsqrt %158 : vector<16x1xf32>
    %160 = vector.broadcast %159 : vector<16x1xf32> to vector<16x128xf32>
    %161 = arith.mulf %156, %160 : vector<16x128xf32>
    %c0_89 = arith.constant 0 : index
    %c0_90 = arith.constant 0 : index
    %162 = vector.load %arg16[%c0_89, %c0_90] : memref<1x128xf32, #tpu.memory_space<vmem>>, vector<1x128xf32>
    %163 = vector.broadcast %162 : vector<1x128xf32> to vector<16x128xf32>
    %164 = arith.mulf %161, %163 : vector<16x128xf32>
    %c0_91 = arith.constant 0 : index
    %c0_92 = arith.constant 0 : index
    %165 = vector.load %arg17[%c0_91, %c0_92] : memref<1x128xf32, #tpu.memory_space<vmem>>, vector<1x128xf32>
    %166 = vector.broadcast %165 : vector<1x128xf32> to vector<16x128xf32>
    %167 = arith.addf %164, %166 : vector<16x128xf32>
    %168 = arith.truncf %167 : vector<16x128xf32> to vector<16x128xbf16>
    %c0_93 = arith.constant 0 : index
    %c0_94 = arith.constant 0 : index
    %169 = vector.load %arg18[%c0_93, %c0_94] : memref<128x512xbf16, #tpu.memory_space<vmem>>, vector<128x512xbf16>
    %cst_95 = arith.constant dense<0.000000e+00> : vector<16x512xf32>
    %170 = tpu.matmul %168, %169, %cst_95 {dimension_numbers = #tpu.dot_dimension_numbers<[1], [0], [0], [1], [0, 0, 1, 1], [], []>} : vector<16x128xbf16>, vector<128x512xbf16>, vector<16x512xf32> -> vector<16x512xf32>
    %c0_96 = arith.constant 0 : index
    %c0_97 = arith.constant 0 : index
    %171 = vector.load %arg19[%c0_96, %c0_97] : memref<1x512xf32, #tpu.memory_space<vmem>>, vector<1x512xf32>
    %172 = vector.broadcast %171 : vector<1x512xf32> to vector<16x512xf32>
    %173 = arith.addf %170, %172 : vector<16x512xf32>
    %cst_98 = arith.constant 1.702000e+00 : f32
    %174 = vector.broadcast %cst_98 : f32 to vector<16x512xf32>
    %175 = arith.mulf %174, %173 : vector<16x512xf32>
    %176 = arith.negf %175 : vector<16x512xf32>
    %177 = math.exp %176 : vector<16x512xf32>
    %cst_99 = arith.constant 1.000000e+00 : f32
    %178 = vector.broadcast %cst_99 : f32 to vector<16x512xf32>
    %179 = arith.addf %178, %177 : vector<16x512xf32>
    %180 = arith.divf %178, %179 : vector<16x512xf32>
    %181 = arith.mulf %173, %180 : vector<16x512xf32>
    %182 = arith.truncf %181 : vector<16x512xf32> to vector<16x512xbf16>
    %c0_100 = arith.constant 0 : index
    %c0_101 = arith.constant 0 : index
    %183 = vector.load %arg20[%c0_100, %c0_101] : memref<512x128xbf16, #tpu.memory_space<vmem>>, vector<512x128xbf16>
    %cst_102 = arith.constant dense<0.000000e+00> : vector<16x128xf32>
    %184 = tpu.matmul %182, %183, %cst_102 {dimension_numbers = #tpu.dot_dimension_numbers<[1], [0], [0], [1], [0, 0, 1, 1], [], []>} : vector<16x512xbf16>, vector<512x128xbf16>, vector<16x128xf32> -> vector<16x128xf32>
    %185 = arith.addf %143, %184 : vector<16x128xf32>
    %c0_103 = arith.constant 0 : index
    %c0_104 = arith.constant 0 : index
    %186 = vector.load %arg21[%c0_103, %c0_104] : memref<1x128xf32, #tpu.memory_space<vmem>>, vector<1x128xf32>
    %187 = vector.broadcast %186 : vector<1x128xf32> to vector<16x128xf32>
    %188 = arith.addf %185, %187 : vector<16x128xf32>
    %cst_105 = arith.constant dense<0.000000e+00> : vector<16xf32>
    %189 = vector.multi_reduction <add>, %188, %cst_105 [1] : vector<16x128xf32> to vector<16xf32>
    %190 = vector.shape_cast %189 : vector<16xf32> to vector<16x1xf32>
    %cst_106 = arith.constant 1.280000e+02 : f32
    %191 = vector.broadcast %cst_106 : f32 to vector<16x1xf32>
    %192 = arith.divf %190, %191 : vector<16x1xf32>
    %193 = arith.mulf %188, %188 : vector<16x128xf32>
    %cst_107 = arith.constant dense<0.000000e+00> : vector<16xf32>
    %194 = vector.multi_reduction <add>, %193, %cst_107 [1] : vector<16x128xf32> to vector<16xf32>
    %195 = vector.shape_cast %194 : vector<16xf32> to vector<16x1xf32>
    %cst_108 = arith.constant 1.280000e+02 : f32
    %196 = vector.broadcast %cst_108 : f32 to vector<16x1xf32>
    %197 = arith.divf %195, %196 : vector<16x1xf32>
    %198 = arith.mulf %192, %192 : vector<16x1xf32>
    %199 = arith.subf %197, %198 : vector<16x1xf32>
    %200 = vector.broadcast %192 : vector<16x1xf32> to vector<16x128xf32>
    %201 = arith.subf %188, %200 : vector<16x128xf32>
    %cst_109 = arith.constant 9.99999974E-6 : f32
    %202 = vector.broadcast %cst_109 : f32 to vector<16x1xf32>
    %203 = arith.addf %199, %202 : vector<16x1xf32>
    %204 = math.rsqrt %203 : vector<16x1xf32>
    %205 = vector.broadcast %204 : vector<16x1xf32> to vector<16x128xf32>
    %206 = arith.mulf %201, %205 : vector<16x128xf32>
    %c0_110 = arith.constant 0 : index
    %c0_111 = arith.constant 0 : index
    %207 = vector.load %arg22[%c0_110, %c0_111] : memref<1x128xf32, #tpu.memory_space<vmem>>, vector<1x128xf32>
    %208 = vector.broadcast %207 : vector<1x128xf32> to vector<16x128xf32>
    %209 = arith.mulf %206, %208 : vector<16x128xf32>
    %c0_112 = arith.constant 0 : index
    %c0_113 = arith.constant 0 : index
    %210 = vector.load %arg23[%c0_112, %c0_113] : memref<1x128xf32, #tpu.memory_space<vmem>>, vector<1x128xf32>
    %211 = vector.broadcast %210 : vector<1x128xf32> to vector<16x128xf32>
    %212 = arith.addf %209, %211 : vector<16x128xf32>
    %213 = arith.truncf %212 : vector<16x128xf32> to vector<16x128xbf16>
    %c0_114 = arith.constant 0 : index
    %c0_115 = arith.constant 0 : index
    %c0_116 = arith.constant 0 : index
    %214 = vector.load %arg24[%c0_114, %c0_115, %c0_116] : memref<2x128x64xbf16, #tpu.memory_space<vmem>>, vector<1x128x64xbf16>
    %215 = vector.shape_cast %214 : vector<1x128x64xbf16> to vector<128x64xbf16>
    %cst_117 = arith.constant dense<0.000000e+00> : vector<16x64xf32>
    %216 = tpu.matmul %213, %215, %cst_117 {dimension_numbers = #tpu.dot_dimension_numbers<[1], [0], [0], [1], [0, 0, 1, 1], [], []>} : vector<16x128xbf16>, vector<128x64xbf16>, vector<16x64xf32> -> vector<16x64xf32>
    %c0_118 = arith.constant 0 : index
    %c0_119 = arith.constant 0 : index
    %c0_120 = arith.constant 0 : index
    %217 = vector.load %arg25[%c0_118, %c0_119, %c0_120] : memref<2x1x64xf32, #tpu.memory_space<vmem>>, vector<1x1x64xf32>
    %218 = vector.shape_cast %217 : vector<1x1x64xf32> to vector<1x64xf32>
    %219 = vector.broadcast %218 : vector<1x64xf32> to vector<16x64xf32>
    %220 = arith.addf %216, %219 : vector<16x64xf32>
    %c0_121 = arith.constant 0 : index
    %c0_122 = arith.constant 0 : index
    %c0_123 = arith.constant 0 : index
    %221 = vector.load %arg26[%c0_121, %c0_122, %c0_123] : memref<2x128x64xbf16, #tpu.memory_space<vmem>>, vector<1x128x64xbf16>
    %222 = vector.shape_cast %221 : vector<1x128x64xbf16> to vector<128x64xbf16>
    %cst_124 = arith.constant dense<0.000000e+00> : vector<16x64xf32>
    %223 = tpu.matmul %213, %222, %cst_124 {dimension_numbers = #tpu.dot_dimension_numbers<[1], [0], [0], [1], [0, 0, 1, 1], [], []>} : vector<16x128xbf16>, vector<128x64xbf16>, vector<16x64xf32> -> vector<16x64xf32>
    %c0_125 = arith.constant 0 : index
    %c0_126 = arith.constant 0 : index
    %c0_127 = arith.constant 0 : index
    %224 = vector.load %arg27[%c0_125, %c0_126, %c0_127] : memref<2x1x64xf32, #tpu.memory_space<vmem>>, vector<1x1x64xf32>
    %225 = vector.shape_cast %224 : vector<1x1x64xf32> to vector<1x64xf32>
    %226 = vector.broadcast %225 : vector<1x64xf32> to vector<16x64xf32>
    %227 = arith.addf %223, %226 : vector<16x64xf32>
    %c0_128 = arith.constant 0 : index
    %c0_129 = arith.constant 0 : index
    %c0_130 = arith.constant 0 : index
    %228 = vector.load %arg28[%c0_128, %c0_129, %c0_130] : memref<2x128x64xbf16, #tpu.memory_space<vmem>>, vector<1x128x64xbf16>
    %229 = vector.shape_cast %228 : vector<1x128x64xbf16> to vector<128x64xbf16>
    %cst_131 = arith.constant dense<0.000000e+00> : vector<16x64xf32>
    %230 = tpu.matmul %213, %229, %cst_131 {dimension_numbers = #tpu.dot_dimension_numbers<[1], [0], [0], [1], [0, 0, 1, 1], [], []>} : vector<16x128xbf16>, vector<128x64xbf16>, vector<16x64xf32> -> vector<16x64xf32>
    %c0_132 = arith.constant 0 : index
    %c0_133 = arith.constant 0 : index
    %c0_134 = arith.constant 0 : index
    %231 = vector.load %arg29[%c0_132, %c0_133, %c0_134] : memref<2x1x64xf32, #tpu.memory_space<vmem>>, vector<1x1x64xf32>
    %232 = vector.shape_cast %231 : vector<1x1x64xf32> to vector<1x64xf32>
    %233 = vector.broadcast %232 : vector<1x64xf32> to vector<16x64xf32>
    %234 = arith.addf %230, %233 : vector<16x64xf32>
    %235 = arith.truncf %220 : vector<16x64xf32> to vector<16x64xbf16>
    %236 = arith.truncf %227 : vector<16x64xf32> to vector<16x64xbf16>
    %cst_135 = arith.constant dense<0.000000e+00> : vector<16x16xf32>
    %237 = tpu.matmul %235, %236, %cst_135 {dimension_numbers = #tpu.dot_dimension_numbers<[1], [1], [0], [0], [0, 0, 1, 0], [], []>} : vector<16x64xbf16>, vector<16x64xbf16>, vector<16x16xf32> -> vector<16x16xf32>
    %238 = arith.addf %237, %29 : vector<16x16xf32>
    %cst_136 = arith.constant dense<0xFF800000> : vector<16xf32>
    %239 = vector.multi_reduction <maximumf>, %238, %cst_136 [1] : vector<16x16xf32> to vector<16xf32>
    %240 = vector.shape_cast %239 : vector<16xf32> to vector<16x1xf32>
    %241 = vector.broadcast %240 : vector<16x1xf32> to vector<16x16xf32>
    %242 = arith.subf %238, %241 : vector<16x16xf32>
    %243 = math.exp %242 : vector<16x16xf32>
    %cst_137 = arith.constant dense<0.000000e+00> : vector<16xf32>
    %244 = vector.multi_reduction <add>, %243, %cst_137 [1] : vector<16x16xf32> to vector<16xf32>
    %245 = vector.shape_cast %244 : vector<16xf32> to vector<16x1xf32>
    %246 = tpu.reciprocal %245 {approx = true} : vector<16x1xf32> -> vector<16x1xf32>
    %247 = vector.broadcast %246 : vector<16x1xf32> to vector<16x16xf32>
    %248 = arith.mulf %243, %247 : vector<16x16xf32>
    %249 = arith.truncf %248 : vector<16x16xf32> to vector<16x16xbf16>
    %250 = arith.truncf %234 : vector<16x64xf32> to vector<16x64xbf16>
    %cst_138 = arith.constant dense<0.000000e+00> : vector<16x64xf32>
    %251 = tpu.matmul %249, %250, %cst_138 {dimension_numbers = #tpu.dot_dimension_numbers<[1], [0], [0], [1], [0, 0, 1, 1], [], []>} : vector<16x16xbf16>, vector<16x64xbf16>, vector<16x64xf32> -> vector<16x64xf32>
    %c0_139 = arith.constant 0 : index
    %c0_140 = arith.constant 0 : index
    %c0_141 = arith.constant 0 : index
    %252 = vector.load %arg30[%c0_139, %c0_140, %c0_141] : memref<2x64x128xbf16, #tpu.memory_space<vmem>>, vector<1x64x128xbf16>
    %253 = vector.shape_cast %252 : vector<1x64x128xbf16> to vector<64x128xbf16>
    %254 = arith.truncf %251 : vector<16x64xf32> to vector<16x64xbf16>
    %cst_142 = arith.constant dense<0.000000e+00> : vector<16x128xf32>
    %255 = tpu.matmul %254, %253, %cst_142 {dimension_numbers = #tpu.dot_dimension_numbers<[1], [0], [0], [1], [0, 0, 1, 1], [], []>} : vector<16x64xbf16>, vector<64x128xbf16>, vector<16x128xf32> -> vector<16x128xf32>
    %c1_143 = arith.constant 1 : index
    %c0_144 = arith.constant 0 : index
    %c0_145 = arith.constant 0 : index
    %256 = vector.load %arg24[%c1_143, %c0_144, %c0_145] : memref<2x128x64xbf16, #tpu.memory_space<vmem>>, vector<1x128x64xbf16>
    %257 = vector.shape_cast %256 : vector<1x128x64xbf16> to vector<128x64xbf16>
    %cst_146 = arith.constant dense<0.000000e+00> : vector<16x64xf32>
    %258 = tpu.matmul %213, %257, %cst_146 {dimension_numbers = #tpu.dot_dimension_numbers<[1], [0], [0], [1], [0, 0, 1, 1], [], []>} : vector<16x128xbf16>, vector<128x64xbf16>, vector<16x64xf32> -> vector<16x64xf32>
    %c1_147 = arith.constant 1 : index
    %c0_148 = arith.constant 0 : index
    %c0_149 = arith.constant 0 : index
    %259 = vector.load %arg25[%c1_147, %c0_148, %c0_149] : memref<2x1x64xf32, #tpu.memory_space<vmem>>, vector<1x1x64xf32>
    %260 = vector.shape_cast %259 : vector<1x1x64xf32> to vector<1x64xf32>
    %261 = vector.broadcast %260 : vector<1x64xf32> to vector<16x64xf32>
    %262 = arith.addf %258, %261 : vector<16x64xf32>
    %c1_150 = arith.constant 1 : index
    %c0_151 = arith.constant 0 : index
    %c0_152 = arith.constant 0 : index
    %263 = vector.load %arg26[%c1_150, %c0_151, %c0_152] : memref<2x128x64xbf16, #tpu.memory_space<vmem>>, vector<1x128x64xbf16>
    %264 = vector.shape_cast %263 : vector<1x128x64xbf16> to vector<128x64xbf16>
    %cst_153 = arith.constant dense<0.000000e+00> : vector<16x64xf32>
    %265 = tpu.matmul %213, %264, %cst_153 {dimension_numbers = #tpu.dot_dimension_numbers<[1], [0], [0], [1], [0, 0, 1, 1], [], []>} : vector<16x128xbf16>, vector<128x64xbf16>, vector<16x64xf32> -> vector<16x64xf32>
    %c1_154 = arith.constant 1 : index
    %c0_155 = arith.constant 0 : index
    %c0_156 = arith.constant 0 : index
    %266 = vector.load %arg27[%c1_154, %c0_155, %c0_156] : memref<2x1x64xf32, #tpu.memory_space<vmem>>, vector<1x1x64xf32>
    %267 = vector.shape_cast %266 : vector<1x1x64xf32> to vector<1x64xf32>
    %268 = vector.broadcast %267 : vector<1x64xf32> to vector<16x64xf32>
    %269 = arith.addf %265, %268 : vector<16x64xf32>
    %c1_157 = arith.constant 1 : index
    %c0_158 = arith.constant 0 : index
    %c0_159 = arith.constant 0 : index
    %270 = vector.load %arg28[%c1_157, %c0_158, %c0_159] : memref<2x128x64xbf16, #tpu.memory_space<vmem>>, vector<1x128x64xbf16>
    %271 = vector.shape_cast %270 : vector<1x128x64xbf16> to vector<128x64xbf16>
    %cst_160 = arith.constant dense<0.000000e+00> : vector<16x64xf32>
    %272 = tpu.matmul %213, %271, %cst_160 {dimension_numbers = #tpu.dot_dimension_numbers<[1], [0], [0], [1], [0, 0, 1, 1], [], []>} : vector<16x128xbf16>, vector<128x64xbf16>, vector<16x64xf32> -> vector<16x64xf32>
    %c1_161 = arith.constant 1 : index
    %c0_162 = arith.constant 0 : index
    %c0_163 = arith.constant 0 : index
    %273 = vector.load %arg29[%c1_161, %c0_162, %c0_163] : memref<2x1x64xf32, #tpu.memory_space<vmem>>, vector<1x1x64xf32>
    %274 = vector.shape_cast %273 : vector<1x1x64xf32> to vector<1x64xf32>
    %275 = vector.broadcast %274 : vector<1x64xf32> to vector<16x64xf32>
    %276 = arith.addf %272, %275 : vector<16x64xf32>
    %277 = arith.truncf %262 : vector<16x64xf32> to vector<16x64xbf16>
    %278 = arith.truncf %269 : vector<16x64xf32> to vector<16x64xbf16>
    %cst_164 = arith.constant dense<0.000000e+00> : vector<16x16xf32>
    %279 = tpu.matmul %277, %278, %cst_164 {dimension_numbers = #tpu.dot_dimension_numbers<[1], [1], [0], [0], [0, 0, 1, 0], [], []>} : vector<16x64xbf16>, vector<16x64xbf16>, vector<16x16xf32> -> vector<16x16xf32>
    %280 = arith.addf %279, %29 : vector<16x16xf32>
    %cst_165 = arith.constant dense<0xFF800000> : vector<16xf32>
    %281 = vector.multi_reduction <maximumf>, %280, %cst_165 [1] : vector<16x16xf32> to vector<16xf32>
    %282 = vector.shape_cast %281 : vector<16xf32> to vector<16x1xf32>
    %283 = vector.broadcast %282 : vector<16x1xf32> to vector<16x16xf32>
    %284 = arith.subf %280, %283 : vector<16x16xf32>
    %285 = math.exp %284 : vector<16x16xf32>
    %cst_166 = arith.constant dense<0.000000e+00> : vector<16xf32>
    %286 = vector.multi_reduction <add>, %285, %cst_166 [1] : vector<16x16xf32> to vector<16xf32>
    %287 = vector.shape_cast %286 : vector<16xf32> to vector<16x1xf32>
    %288 = tpu.reciprocal %287 {approx = true} : vector<16x1xf32> -> vector<16x1xf32>
    %289 = vector.broadcast %288 : vector<16x1xf32> to vector<16x16xf32>
    %290 = arith.mulf %285, %289 : vector<16x16xf32>
    %291 = arith.truncf %290 : vector<16x16xf32> to vector<16x16xbf16>
    %292 = arith.truncf %276 : vector<16x64xf32> to vector<16x64xbf16>
    %cst_167 = arith.constant dense<0.000000e+00> : vector<16x64xf32>
    %293 = tpu.matmul %291, %292, %cst_167 {dimension_numbers = #tpu.dot_dimension_numbers<[1], [0], [0], [1], [0, 0, 1, 1], [], []>} : vector<16x16xbf16>, vector<16x64xbf16>, vector<16x64xf32> -> vector<16x64xf32>
    %c1_168 = arith.constant 1 : index
    %c0_169 = arith.constant 0 : index
    %c0_170 = arith.constant 0 : index
    %294 = vector.load %arg30[%c1_168, %c0_169, %c0_170] : memref<2x64x128xbf16, #tpu.memory_space<vmem>>, vector<1x64x128xbf16>
    %295 = vector.shape_cast %294 : vector<1x64x128xbf16> to vector<64x128xbf16>
    %296 = arith.truncf %293 : vector<16x64xf32> to vector<16x64xbf16>
    %cst_171 = arith.constant dense<0.000000e+00> : vector<16x128xf32>
    %297 = tpu.matmul %296, %295, %cst_171 {dimension_numbers = #tpu.dot_dimension_numbers<[1], [0], [0], [1], [0, 0, 1, 1], [], []>} : vector<16x64xbf16>, vector<64x128xbf16>, vector<16x128xf32> -> vector<16x128xf32>
    %298 = arith.addf %255, %297 : vector<16x128xf32>
    %299 = arith.addf %188, %298 : vector<16x128xf32>
    %c0_172 = arith.constant 0 : index
    %c0_173 = arith.constant 0 : index
    %300 = vector.load %arg31[%c0_172, %c0_173] : memref<1x128xf32, #tpu.memory_space<vmem>>, vector<1x128xf32>
    %301 = vector.broadcast %300 : vector<1x128xf32> to vector<16x128xf32>
    %302 = arith.addf %299, %301 : vector<16x128xf32>
    %cst_174 = arith.constant dense<0.000000e+00> : vector<16xf32>
    %303 = vector.multi_reduction <add>, %302, %cst_174 [1] : vector<16x128xf32> to vector<16xf32>
    %304 = vector.shape_cast %303 : vector<16xf32> to vector<16x1xf32>
    %cst_175 = arith.constant 1.280000e+02 : f32
    %305 = vector.broadcast %cst_175 : f32 to vector<16x1xf32>
    %306 = arith.divf %304, %305 : vector<16x1xf32>
    %307 = arith.mulf %302, %302 : vector<16x128xf32>
    %cst_176 = arith.constant dense<0.000000e+00> : vector<16xf32>
    %308 = vector.multi_reduction <add>, %307, %cst_176 [1] : vector<16x128xf32> to vector<16xf32>
    %309 = vector.shape_cast %308 : vector<16xf32> to vector<16x1xf32>
    %cst_177 = arith.constant 1.280000e+02 : f32
    %310 = vector.broadcast %cst_177 : f32 to vector<16x1xf32>
    %311 = arith.divf %309, %310 : vector<16x1xf32>
    %312 = arith.mulf %306, %306 : vector<16x1xf32>
    %313 = arith.subf %311, %312 : vector<16x1xf32>
    %314 = vector.broadcast %306 : vector<16x1xf32> to vector<16x128xf32>
    %315 = arith.subf %302, %314 : vector<16x128xf32>
    %cst_178 = arith.constant 9.99999974E-6 : f32
    %316 = vector.broadcast %cst_178 : f32 to vector<16x1xf32>
    %317 = arith.addf %313, %316 : vector<16x1xf32>
    %318 = math.rsqrt %317 : vector<16x1xf32>
    %319 = vector.broadcast %318 : vector<16x1xf32> to vector<16x128xf32>
    %320 = arith.mulf %315, %319 : vector<16x128xf32>
    %c0_179 = arith.constant 0 : index
    %c0_180 = arith.constant 0 : index
    %321 = vector.load %arg32[%c0_179, %c0_180] : memref<1x128xf32, #tpu.memory_space<vmem>>, vector<1x128xf32>
    %322 = vector.broadcast %321 : vector<1x128xf32> to vector<16x128xf32>
    %323 = arith.mulf %320, %322 : vector<16x128xf32>
    %c0_181 = arith.constant 0 : index
    %c0_182 = arith.constant 0 : index
    %324 = vector.load %arg33[%c0_181, %c0_182] : memref<1x128xf32, #tpu.memory_space<vmem>>, vector<1x128xf32>
    %325 = vector.broadcast %324 : vector<1x128xf32> to vector<16x128xf32>
    %326 = arith.addf %323, %325 : vector<16x128xf32>
    %327 = arith.truncf %326 : vector<16x128xf32> to vector<16x128xbf16>
    %c0_183 = arith.constant 0 : index
    %c0_184 = arith.constant 0 : index
    %328 = vector.load %arg34[%c0_183, %c0_184] : memref<128x512xbf16, #tpu.memory_space<vmem>>, vector<128x512xbf16>
    %cst_185 = arith.constant dense<0.000000e+00> : vector<16x512xf32>
    %329 = tpu.matmul %327, %328, %cst_185 {dimension_numbers = #tpu.dot_dimension_numbers<[1], [0], [0], [1], [0, 0, 1, 1], [], []>} : vector<16x128xbf16>, vector<128x512xbf16>, vector<16x512xf32> -> vector<16x512xf32>
    %c0_186 = arith.constant 0 : index
    %c0_187 = arith.constant 0 : index
    %330 = vector.load %arg35[%c0_186, %c0_187] : memref<1x512xf32, #tpu.memory_space<vmem>>, vector<1x512xf32>
    %331 = vector.broadcast %330 : vector<1x512xf32> to vector<16x512xf32>
    %332 = arith.addf %329, %331 : vector<16x512xf32>
    %cst_188 = arith.constant 1.702000e+00 : f32
    %333 = vector.broadcast %cst_188 : f32 to vector<16x512xf32>
    %334 = arith.mulf %333, %332 : vector<16x512xf32>
    %335 = arith.negf %334 : vector<16x512xf32>
    %336 = math.exp %335 : vector<16x512xf32>
    %cst_189 = arith.constant 1.000000e+00 : f32
    %337 = vector.broadcast %cst_189 : f32 to vector<16x512xf32>
    %338 = arith.addf %337, %336 : vector<16x512xf32>
    %339 = arith.divf %337, %338 : vector<16x512xf32>
    %340 = arith.mulf %332, %339 : vector<16x512xf32>
    %341 = arith.truncf %340 : vector<16x512xf32> to vector<16x512xbf16>
    %c0_190 = arith.constant 0 : index
    %c0_191 = arith.constant 0 : index
    %342 = vector.load %arg36[%c0_190, %c0_191] : memref<512x128xbf16, #tpu.memory_space<vmem>>, vector<512x128xbf16>
    %cst_192 = arith.constant dense<0.000000e+00> : vector<16x128xf32>
    %343 = tpu.matmul %341, %342, %cst_192 {dimension_numbers = #tpu.dot_dimension_numbers<[1], [0], [0], [1], [0, 0, 1, 1], [], []>} : vector<16x512xbf16>, vector<512x128xbf16>, vector<16x128xf32> -> vector<16x128xf32>
    %344 = arith.addf %302, %343 : vector<16x128xf32>
    %c0_193 = arith.constant 0 : index
    %c0_194 = arith.constant 0 : index
    %345 = vector.load %arg37[%c0_193, %c0_194] : memref<1x128xf32, #tpu.memory_space<vmem>>, vector<1x128xf32>
    %346 = vector.broadcast %345 : vector<1x128xf32> to vector<16x128xf32>
    %347 = arith.addf %344, %346 : vector<16x128xf32>
    %cst_195 = arith.constant dense<0.000000e+00> : vector<16xf32>
    %348 = vector.multi_reduction <add>, %347, %cst_195 [1] : vector<16x128xf32> to vector<16xf32>
    %349 = vector.shape_cast %348 : vector<16xf32> to vector<16x1xf32>
    %cst_196 = arith.constant 1.280000e+02 : f32
    %350 = vector.broadcast %cst_196 : f32 to vector<16x1xf32>
    %351 = arith.divf %349, %350 : vector<16x1xf32>
    %352 = arith.mulf %347, %347 : vector<16x128xf32>
    %cst_197 = arith.constant dense<0.000000e+00> : vector<16xf32>
    %353 = vector.multi_reduction <add>, %352, %cst_197 [1] : vector<16x128xf32> to vector<16xf32>
    %354 = vector.shape_cast %353 : vector<16xf32> to vector<16x1xf32>
    %cst_198 = arith.constant 1.280000e+02 : f32
    %355 = vector.broadcast %cst_198 : f32 to vector<16x1xf32>
    %356 = arith.divf %354, %355 : vector<16x1xf32>
    %357 = arith.mulf %351, %351 : vector<16x1xf32>
    %358 = arith.subf %356, %357 : vector<16x1xf32>
    %359 = vector.broadcast %351 : vector<16x1xf32> to vector<16x128xf32>
    %360 = arith.subf %347, %359 : vector<16x128xf32>
    %cst_199 = arith.constant 9.99999974E-6 : f32
    %361 = vector.broadcast %cst_199 : f32 to vector<16x1xf32>
    %362 = arith.addf %358, %361 : vector<16x1xf32>
    %363 = math.rsqrt %362 : vector<16x1xf32>
    %364 = vector.broadcast %363 : vector<16x1xf32> to vector<16x128xf32>
    %365 = arith.mulf %360, %364 : vector<16x128xf32>
    %c0_200 = arith.constant 0 : index
    %c0_201 = arith.constant 0 : index
    %366 = vector.load %arg38[%c0_200, %c0_201] : memref<1x128xf32, #tpu.memory_space<vmem>>, vector<1x128xf32>
    %367 = vector.broadcast %366 : vector<1x128xf32> to vector<16x128xf32>
    %368 = arith.mulf %365, %367 : vector<16x128xf32>
    %c0_202 = arith.constant 0 : index
    %c0_203 = arith.constant 0 : index
    %369 = vector.load %arg39[%c0_202, %c0_203] : memref<1x128xf32, #tpu.memory_space<vmem>>, vector<1x128xf32>
    %370 = vector.broadcast %369 : vector<1x128xf32> to vector<16x128xf32>
    %371 = arith.addf %368, %370 : vector<16x128xf32>
    %372 = arith.truncf %371 : vector<16x128xf32> to vector<16x128xbf16>
    %c0_204 = arith.constant 0 : index
    %c0_205 = arith.constant 0 : index
    %373 = vector.load %arg40[%c0_204, %c0_205] : memref<128x128xbf16, #tpu.memory_space<vmem>>, vector<128x128xbf16>
    %cst_206 = arith.constant dense<0.000000e+00> : vector<16x128xf32>
    %374 = tpu.matmul %372, %373, %cst_206 {dimension_numbers = #tpu.dot_dimension_numbers<[1], [0], [0], [1], [0, 0, 1, 1], [], []>} : vector<16x128xbf16>, vector<128x128xbf16>, vector<16x128xf32> -> vector<16x128xf32>
    %c0_207 = arith.constant 0 : index
    %c0_208 = arith.constant 0 : index
    %375 = vector.load %arg41[%c0_207, %c0_208] : memref<16x128xf32, #tpu.memory_space<vmem>>, vector<16x128xf32>
    tpu.vector_store %arg41[%c0_207, %c0_208], %374 {strides = array<i32>} : memref<16x128xf32, #tpu.memory_space<vmem>>, vector<16x128xf32>,
    return
  }
}

</mosaic_0001>

<llo_original>
// kernel: vit_forward.1
$region0: #{vit_forward.1}
  #allocation0 [shape = 'u32[]', space=smem, size = 0x4, offset = 0x4, fixed_abs, tag = 'smem constant byte address 0x4 - core index']
  #allocation1 [shape = 'u32[72,128]{1,0:T(1,128)}', space=vmem, size = 0x9000, scoped, tag = 'internal scratch']
  %s0 = inlined_call_operand.smem [shape: u32[42], index: -1, kind: input, shape index: {}]
  %s1 = sld [smem:[%s0]]
  %s2 = scalar_lea.smem %s0, 1
  %s3 = sld [smem:[%s2]]
  %s4 = scalar_lea.smem %s0, 2
  %s5 = sld [smem:[%s4]]
  %s6 = scalar_lea.smem %s0, 3
  %s7 = sld [smem:[%s6]]
  %s8 = scalar_lea.smem %s0, 4
  %s9 = sld [smem:[%s8]]
  %s10 = scalar_lea.smem %s0, 5
  %s11 = sld [smem:[%s10]]
  %s12 = scalar_lea.smem %s0, 6
  %s13 = sld [smem:[%s12]]
  %s14 = scalar_lea.smem %s0, 7
  %s15 = sld [smem:[%s14]]
  %s16 = scalar_lea.smem %s0, 8
  %s17 = sld [smem:[%s16]]
  %s18 = scalar_lea.smem %s0, 9
  %s19 = sld [smem:[%s18]]
  %s20 = scalar_lea.smem %s0, 10
  %s21 = sld [smem:[%s20]]
  %s22 = scalar_lea.smem %s0, 11
  %s23 = sld [smem:[%s22]]
  %s24 = scalar_lea.smem %s0, 12
  %s25 = sld [smem:[%s24]]
  %s26 = scalar_lea.smem %s0, 13
  %s27 = sld [smem:[%s26]]
  %s28 = scalar_lea.smem %s0, 14
  %s29 = sld [smem:[%s28]]
  %s30 = scalar_lea.smem %s0, 15
  %s31 = sld [smem:[%s30]]
  %s32 = scalar_lea.smem %s0, 16
  %s33 = sld [smem:[%s32]]
  %s34 = scalar_lea.smem %s0, 17
  %s35 = sld [smem:[%s34]]
  %s36 = scalar_lea.smem %s0, 18
  %s37 = sld [smem:[%s36]]
  %s38 = scalar_lea.smem %s0, 19
  %s39 = sld [smem:[%s38]]
  %s40 = scalar_lea.smem %s0, 20
  %s41 = sld [smem:[%s40]]
  %s42 = scalar_lea.smem %s0, 21
  %s43 = sld [smem:[%s42]]
  %s44 = scalar_lea.smem %s0, 22
  %s45 = sld [smem:[%s44]]
  %s46 = scalar_lea.smem %s0, 23
  %s47 = sld [smem:[%s46]]
  %s48 = scalar_lea.smem %s0, 24
  %s49 = sld [smem:[%s48]]
  %s50 = scalar_lea.smem %s0, 25
  %s51 = sld [smem:[%s50]]
  %s52 = scalar_lea.smem %s0, 26
  %s53 = sld [smem:[%s52]]
  %s54 = scalar_lea.smem %s0, 27
  %s55 = sld [smem:[%s54]]
  %s56 = scalar_lea.smem %s0, 28
  %s57 = sld [smem:[%s56]]
  %s58 = scalar_lea.smem %s0, 29
  %s59 = sld [smem:[%s58]]
  %s60 = scalar_lea.smem %s0, 30
  %s61 = sld [smem:[%s60]]
  %s62 = scalar_lea.smem %s0, 31
  %s63 = sld [smem:[%s62]]
  %s64 = scalar_lea.smem %s0, 32
  %s65 = sld [smem:[%s64]]
  %s66 = scalar_lea.smem %s0, 33
  %s67 = sld [smem:[%s66]]
  %s68 = scalar_lea.smem %s0, 34
  %s69 = sld [smem:[%s68]]
  %s70 = scalar_lea.smem %s0, 35
  %s71 = sld [smem:[%s70]]
  %s72 = scalar_lea.smem %s0, 36
  %s73 = sld [smem:[%s72]]
  %s74 = scalar_lea.smem %s0, 37
  %s75 = sld [smem:[%s74]]
  %s76 = scalar_lea.smem %s0, 38
  %s77 = sld [smem:[%s76]]
  %s78 = scalar_lea.smem %s0, 39
  %s79 = sld [smem:[%s78]]
  %s80 = scalar_lea.smem %s0, 40
  %s81 = sld [smem:[%s80]]
  %s82 = scalar_lea.smem %s0, 41
  %s83 = sld [smem:[%s82]]
  %s84 = sld [smem:[#allocation0]]
  $region222: #{vit_forward.1} parent=0
    _
  %s86 = ssub.s32 1, %s84
  %s87 = scalar_select 0, %s86, %s84
  $region1: #{vit_forward.1} parent=0
    #allocation2 [shape = 'u8[512]{0}', space=vmem, size = 0x400, scoped, tag = 'input window, operand 3, single buffered']
    #allocation3 [shape = 's32[1]{0}', space=sflag, size = 0x4, scoped, tag = 'scoped memory for vit_forward.1']
    #allocation4 [shape = 'u8[512]{0}', space=vmem, size = 0x400, scoped, tag = 'input window, operand 4, single buffered']
    #allocation5 [shape = 's32[1]{0}', space=sflag, size = 0x4, scoped, tag = 'scoped memory for vit_forward.1']
    #allocation6 [shape = 'u8[512]{0}', space=vmem, size = 0x400, scoped, tag = 'input window, operand 6, single buffered']
    #allocation7 [shape = 'u8[512]{0}', space=vmem, size = 0x400, scoped, tag = 'input window, operand 7, single buffered']
    #allocation8 [shape = 's32[1]{0}', space=sflag, size = 0x4, scoped, tag = 'scoped memory for vit_forward.1']
    #allocation9 [shape = 'u8[1024]{0}', space=vmem, size = 0x400, scoped, tag = 'input window, operand 9, single buffered']
    #allocation10 [shape = 'u8[1024]{0}', space=vmem, size = 0x400, scoped, tag = 'input window, operand 11, single buffered']
    #allocation11 [shape = 's32[1]{0}', space=sflag, size = 0x4, scoped, tag = 'scoped memory for vit_forward.1']
    #allocation12 [shape = 'u8[1024]{0}', space=vmem, size = 0x400, scoped, tag = 'input window, operand 13, single buffered']
    #allocation13 [shape = 'u8[512]{0}', space=vmem, size = 0x400, scoped, tag = 'input window, operand 15, single buffered']
    #allocation14 [shape = 's32[1]{0}', space=sflag, size = 0x4, scoped, tag = 'scoped memory for vit_forward.1']
    #allocation15 [shape = 'u8[512]{0}', space=vmem, size = 0x400, scoped, tag = 'input window, operand 16, single buffered']
    #allocation16 [shape = 'u8[512]{0}', space=vmem, size = 0x400, scoped, tag = 'input window, operand 17, single buffered']
    #allocation17 [shape = 's32[1]{0}', space=sflag, size = 0x4, scoped, tag = 'scoped memory for vit_forward.1']
    #allocation18 [shape = 'u8[512]{0}', space=vmem, size = 0x400, scoped, tag = 'input window, operand 33, single buffered']
    #allocation19 [shape = 'u8[512]{0}', space=vmem, size = 0x400, scoped, tag = 'input window, operand 37, single buffered']
    #allocation20 [shape = 's32[1]{0}', space=sflag, size = 0x4, scoped, tag = 'scoped memory for vit_forward.1']
    %88 = vsyncpa [#allocation3], 0
    %89 = vsyncpa [#allocation5], 0
    %90 = vsyncpa [#allocation8], 0
    %91 = vsyncpa [#allocation11], 0
    %92 = vsyncpa [#allocation14], 0
    %93 = vsyncpa [#allocation17], 0
    %94 = vsyncpa [#allocation20], 0
    // Predicated region
    $region2: #{vit_forward.1} parent=1 // pred_check
      _
    $region3: #{vit_forward.1} parent=1 // pred_check_branch
      %96 = sbr.rel (0) target = $region5
    $region4: #{vit_forward.1} parent=1 // pred_region
      _
    $region5: #{vit_forward.1} parent=1 // pred_fallthru
      _
    // Predicated region
    $region6: #{vit_forward.1} parent=1 // pred_check
      _
    $region7: #{vit_forward.1} parent=1 // pred_check_branch
      %98 = sbr.rel (0) target = $region9
    $region8: #{vit_forward.1} parent=1 // pred_region
      _
    $region9: #{vit_forward.1} parent=1 // pred_fallthru
      _
    // Predicated region
    $region10: #{vit_forward.1} parent=1 // pred_check
      _
    $region11: #{vit_forward.1} parent=1 // pred_check_branch
      %100 = sbr.rel (0) target = $region13
    $region12: #{vit_forward.1} parent=1 // pred_region
      _
    $region13: #{vit_forward.1} parent=1 // pred_fallthru
      _
    // Predicated region
    $region14: #{vit_forward.1} parent=1 // pred_check
      _
    $region15: #{vit_forward.1} parent=1 // pred_check_branch
      %102 = sbr.rel (0) target = $region17
    $region16: #{vit_forward.1} parent=1 // pred_region
      %104 = vsyncadd [#allocation3], 0
      %s106 = sshll.u32 %s7, 4
      %s107 = int_to_ptr.hbm [resolvable:$true] %s106
      %s108 = sshll.u32 [#allocation2], 4
      %s109 = int_to_ptr.vmem [resolvable:$true] %s108
      %111 = dma.hbm_to_vmem [thread:$0]  %s107, 16, %s109, [#allocation3]
    $region17: #{vit_forward.1} parent=1 // pred_fallthru
      _
    // Predicated region
    $region18: #{vit_forward.1} parent=1 // pred_check
      _
    $region19: #{vit_forward.1} parent=1 // pred_check_branch
      %113 = sbr.rel (0) target = $region21
    $region20: #{vit_forward.1} parent=1 // pred_region
      %115 = vsyncadd [#allocation5], 0
      %s117 = sshll.u32 %s9, 4
      %s118 = int_to_ptr.hbm [resolvable:$true] %s117
      %s119 = sshll.u32 [#allocation4], 4
      %s120 = int_to_ptr.vmem [resolvable:$true] %s119
      %122 = dma.hbm_to_vmem [thread:$0]  %s118, 16, %s120, [#allocation5]
    $region21: #{vit_forward.1} parent=1 // pred_fallthru
      _
    // Predicated region
    $region22: #{vit_forward.1} parent=1 // pred_check
      _
    $region23: #{vit_forward.1} parent=1 // pred_check_branch
      %124 = sbr.rel (0) target = $region25
    $region24: #{vit_forward.1} parent=1 // pred_region
      _
    $region25: #{vit_forward.1} parent=1 // pred_fallthru
      _
    // Predicated region
    $region26: #{vit_forward.1} parent=1 // pred_check
      _
    $region27: #{vit_forward.1} parent=1 // pred_check_branch
      %126 = sbr.rel (0) target = $region29
    $region28: #{vit_forward.1} parent=1 // pred_region
      %128 = vsyncadd [#allocation5], 0
      %s130 = sshll.u32 %s13, 4
      %s131 = int_to_ptr.hbm [resolvable:$true] %s130
      %s132 = sshll.u32 [#allocation6], 4
      %s133 = int_to_ptr.vmem [resolvable:$true] %s132
      %135 = dma.hbm_to_vmem [thread:$0]  %s131, 16, %s133, [#allocation5]
    $region29: #{vit_forward.1} parent=1 // pred_fallthru
      _
    // Predicated region
    $region30: #{vit_forward.1} parent=1 // pred_check
      _
    $region31: #{vit_forward.1} parent=1 // pred_check_branch
      %137 = sbr.rel (0) target = $region33
    $region32: #{vit_forward.1} parent=1 // pred_region
      %139 = vsyncadd [#allocation8], 0
      %s141 = sshll.u32 %s15, 4
      %s142 = int_to_ptr.hbm [resolvable:$true] %s141
      %s143 = sshll.u32 [#allocation7], 4
      %s144 = int_to_ptr.vmem [resolvable:$true] %s143
      %146 = dma.hbm_to_vmem [thread:$0]  %s142, 16, %s144, [#allocation8]
    $region33: #{vit_forward.1} parent=1 // pred_fallthru
      _
    // Predicated region
    $region34: #{vit_forward.1} parent=1 // pred_check
      _
    $region35: #{vit_forward.1} parent=1 // pred_check_branch
      %148 = sbr.rel (0) target = $region37
    $region36: #{vit_forward.1} parent=1 // pred_region
      _
    $region37: #{vit_forward.1} parent=1 // pred_fallthru
      _
    // Predicated region
    $region38: #{vit_forward.1} parent=1 // pred_check
      _
    $region39: #{vit_forward.1} parent=1 // pred_check_branch
      %150 = sbr.rel (0) target = $region41
    $region40: #{vit_forward.1} parent=1 // pred_region
      %152 = vsyncadd [#allocation8], 0
      %s153 = sshll.u32 %s19, 4
      %s154 = int_to_ptr.hbm [resolvable:$true] %s153
      %s155 = sshll.u32 [#allocation9], 4
      %s156 = int_to_ptr.vmem [resolvable:$true] %s155
      %161 = dma.hbm_to_vmem [thread:$0]  %s154, 32, %s156, [#allocation8], 16, 16, 1
    $region41: #{vit_forward.1} parent=1 // pred_fallthru
      _
    // Predicated region
    $region42: #{vit_forward.1} parent=1 // pred_check
      _
    $region43: #{vit_forward.1} parent=1 // pred_check_branch
      %163 = sbr.rel (0) target = $region45
    $region44: #{vit_forward.1} parent=1 // pred_region
      _
    $region45: #{vit_forward.1} parent=1 // pred_fallthru
      _
    // Predicated region
    $region46: #{vit_forward.1} parent=1 // pred_check
      _
    $region47: #{vit_forward.1} parent=1 // pred_check_branch
      %165 = sbr.rel (0) target = $region49
    $region48: #{vit_forward.1} parent=1 // pred_region
      %167 = vsyncadd [#allocation11], 0
      %s168 = sshll.u32 %s23, 4
      %s169 = int_to_ptr.hbm [resolvable:$true] %s168
      %s170 = sshll.u32 [#allocation10], 4
      %s171 = int_to_ptr.vmem [resolvable:$true] %s170
      %176 = dma.hbm_to_vmem [thread:$0]  %s169, 32, %s171, [#allocation11], 16, 16, 1
    $region49: #{vit_forward.1} parent=1 // pred_fallthru
      _
    // Predicated region
    $region50: #{vit_forward.1} parent=1 // pred_check
      _
    $region51: #{vit_forward.1} parent=1 // pred_check_branch
      %178 = sbr.rel (0) target = $region53
    $region52: #{vit_forward.1} parent=1 // pred_region
      _
    $region53: #{vit_forward.1} parent=1 // pred_fallthru
      _
    // Predicated region
    $region54: #{vit_forward.1} parent=1 // pred_check
      _
    $region55: #{vit_forward.1} parent=1 // pred_check_branch
      %180 = sbr.rel (0) target = $region57
    $region56: #{vit_forward.1} parent=1 // pred_region
      %182 = vsyncadd [#allocation11], 0
      %s183 = sshll.u32 %s27, 4
      %s184 = int_to_ptr.hbm [resolvable:$true] %s183
      %s185 = sshll.u32 [#allocation12], 4
      %s186 = int_to_ptr.vmem [resolvable:$true] %s185
      %191 = dma.hbm_to_vmem [thread:$0]  %s184, 32, %s186, [#allocation11], 16, 16, 1
    $region57: #{vit_forward.1} parent=1 // pred_fallthru
      _
    // Predicated region
    $region58: #{vit_forward.1} parent=1 // pred_check
      _
    $region59: #{vit_forward.1} parent=1 // pred_check_branch
      %193 = sbr.rel (0) target = $region61
    $region60: #{vit_forward.1} parent=1 // pred_region
      _
    $region61: #{vit_forward.1} parent=1 // pred_fallthru
      _
    // Predicated region
    $region62: #{vit_forward.1} parent=1 // pred_check
      _
    $region63: #{vit_forward.1} parent=1 // pred_check_branch
      %195 = sbr.rel (0) target = $region65
    $region64: #{vit_forward.1} parent=1 // pred_region
      %197 = vsyncadd [#allocation14], 0
      %s199 = sshll.u32 %s31, 4
      %s200 = int_to_ptr.hbm [resolvable:$true] %s199
      %s201 = sshll.u32 [#allocation13], 4
      %s202 = int_to_ptr.vmem [resolvable:$true] %s201
      %204 = dma.hbm_to_vmem [thread:$0]  %s200, 16, %s202, [#allocation14]
    $region65: #{vit_forward.1} parent=1 // pred_fallthru
      _
    // Predicated region
    $region66: #{vit_forward.1} parent=1 // pred_check
      _
    $region67: #{vit_forward.1} parent=1 // pred_check_branch
      %206 = sbr.rel (0) target = $region69
    $region68: #{vit_forward.1} parent=1 // pred_region
      %208 = vsyncadd [#allocation14], 0
      %s210 = sshll.u32 %s33, 4
      %s211 = int_to_ptr.hbm [resolvable:$true] %s210
      %s212 = sshll.u32 [#allocation15], 4
      %s213 = int_to_ptr.vmem [resolvable:$true] %s212
      %215 = dma.hbm_to_vmem [thread:$0]  %s211, 16, %s213, [#allocation14]
    $region69: #{vit_forward.1} parent=1 // pred_fallthru
      _
    // Predicated region
    $region70: #{vit_forward.1} parent=1 // pred_check
      _
    $region71: #{vit_forward.1} parent=1 // pred_check_branch
      %217 = sbr.rel (0) target = $region73
    $region72: #{vit_forward.1} parent=1 // pred_region
      %219 = vsyncadd [#allocation17], 0
      %s221 = sshll.u32 %s35, 4
      %s222 = int_to_ptr.hbm [resolvable:$true] %s221
      %s223 = sshll.u32 [#allocation16], 4
      %s224 = int_to_ptr.vmem [resolvable:$true] %s223
      %226 = dma.hbm_to_vmem [thread:$0]  %s222, 16, %s224, [#allocation17]
    $region73: #{vit_forward.1} parent=1 // pred_fallthru
      _
    // Predicated region
    $region74: #{vit_forward.1} parent=1 // pred_check
      _
    $region75: #{vit_forward.1} parent=1 // pred_check_branch
      %228 = sbr.rel (0) target = $region77
    $region76: #{vit_forward.1} parent=1 // pred_region
      _
    $region77: #{vit_forward.1} parent=1 // pred_fallthru
      _
    // Predicated region
    $region78: #{vit_forward.1} parent=1 // pred_check
      _
    $region79: #{vit_forward.1} parent=1 // pred_check_branch
      %230 = sbr.rel (0) target = $region81
    $region80: #{vit_forward.1} parent=1 // pred_region
      _
    $region81: #{vit_forward.1} parent=1 // pred_fallthru
      _
    // Predicated region
    $region82: #{vit_forward.1} parent=1 // pred_check
      _
    $region83: #{vit_forward.1} parent=1 // pred_check_branch
      %232 = sbr.rel (0) target = $region85
    $region84: #{vit_forward.1} parent=1 // pred_region
      _
    $region85: #{vit_forward.1} parent=1 // pred_fallthru
      _
    // Predicated region
    $region86: #{vit_forward.1} parent=1 // pred_check
      _
    $region87: #{vit_forward.1} parent=1 // pred_check_branch
      %234 = sbr.rel (0) target = $region89
    $region88: #{vit_forward.1} parent=1 // pred_region
      _
    $region89: #{vit_forward.1} parent=1 // pred_fallthru
      _
    // Predicated region
    $region90: #{vit_forward.1} parent=1 // pred_check
      _
    $region91: #{vit_forward.1} parent=1 // pred_check_branch
      %236 = sbr.rel (0) target = $region93
    $region92: #{vit_forward.1} parent=1 // pred_region
      _
    $region93: #{vit_forward.1} parent=1 // pred_fallthru
      _
    // Predicated region
    $region94: #{vit_forward.1} parent=1 // pred_check
      _
    $region95: #{vit_forward.1} parent=1 // pred_check_branch
      %238 = sbr.rel (0) target = $region97
    $region96: #{vit_forward.1} parent=1 // pred_region
      _
    $region97: #{vit_forward.1} parent=1 // pred_fallthru
      _
    // Predicated region
    $region98: #{vit_forward.1} parent=1 // pred_check
      _
    $region99: #{vit_forward.1} parent=1 // pred_check_branch
      %240 = sbr.rel (0) target = $region101
    $region100: #{vit_forward.1} parent=1 // pred_region
      _
    $region101: #{vit_forward.1} parent=1 // pred_fallthru
      _
    // Predicated region
    $region102: #{vit_forward.1} parent=1 // pred_check
      _
    $region103: #{vit_forward.1} parent=1 // pred_check_branch
      %242 = sbr.rel (0) target = $region105
    $region104: #{vit_forward.1} parent=1 // pred_region
      _
    $region105: #{vit_forward.1} parent=1 // pred_fallthru
      _
    // Predicated region
    $region106: #{vit_forward.1} parent=1 // pred_check
      _
    $region107: #{vit_forward.1} parent=1 // pred_check_branch
      %244 = sbr.rel (0) target = $region109
    $region108: #{vit_forward.1} parent=1 // pred_region
      _
    $region109: #{vit_forward.1} parent=1 // pred_fallthru
      _
    // Predicated region
    $region110: #{vit_forward.1} parent=1 // pred_check
      _
    $region111: #{vit_forward.1} parent=1 // pred_check_branch
      %246 = sbr.rel (0) target = $region113
    $region112: #{vit_forward.1} parent=1 // pred_region
      _
    $region113: #{vit_forward.1} parent=1 // pred_fallthru
      _
    // Predicated region
    $region114: #{vit_forward.1} parent=1 // pred_check
      _
    $region115: #{vit_forward.1} parent=1 // pred_check_branch
      %248 = sbr.rel (0) target = $region117
    $region116: #{vit_forward.1} parent=1 // pred_region
      _
    $region117: #{vit_forward.1} parent=1 // pred_fallthru
      _
    // Predicated region
    $region118: #{vit_forward.1} parent=1 // pred_check
      _
    $region119: #{vit_forward.1} parent=1 // pred_check_branch
      %250 = sbr.rel (0) target = $region121
    $region120: #{vit_forward.1} parent=1 // pred_region
      _
    $region121: #{vit_forward.1} parent=1 // pred_fallthru
      _
    // Predicated region
    $region122: #{vit_forward.1} parent=1 // pred_check
      _
    $region123: #{vit_forward.1} parent=1 // pred_check_branch
      %252 = sbr.rel (0) target = $region125
    $region124: #{vit_forward.1} parent=1 // pred_region
      _
    $region125: #{vit_forward.1} parent=1 // pred_fallthru
      _
    // Predicated region
    $region126: #{vit_forward.1} parent=1 // pred_check
      _
    $region127: #{vit_forward.1} parent=1 // pred_check_branch
      %254 = sbr.rel (0) target = $region129
    $region128: #{vit_forward.1} parent=1 // pred_region
      _
    $region129: #{vit_forward.1} parent=1 // pred_fallthru
      _
    // Predicated region
    $region130: #{vit_forward.1} parent=1 // pred_check
      _
    $region131: #{vit_forward.1} parent=1 // pred_check_branch
      %256 = sbr.rel (0) target = $region133
    $region132: #{vit_forward.1} parent=1 // pred_region
      _
    $region133: #{vit_forward.1} parent=1 // pred_fallthru
      _
    // Predicated region
    $region134: #{vit_forward.1} parent=1 // pred_check
      _
    $region135: #{vit_forward.1} parent=1 // pred_check_branch
      %258 = sbr.rel (0) target = $region137
    $region136: #{vit_forward.1} parent=1 // pred_region
      %260 = vsyncadd [#allocation17], 0
      %s262 = sshll.u32 %s67, 4
      %s263 = int_to_ptr.hbm [resolvable:$true] %s262
      %s264 = sshll.u32 [#allocation18], 4
      %s265 = int_to_ptr.vmem [resolvable:$true] %s264
      %267 = dma.hbm_to_vmem [thread:$0]  %s263, 16, %s265, [#allocation17]
    $region137: #{vit_forward.1} parent=1 // pred_fallthru
      _
    // Predicated region
    $region138: #{vit_forward.1} parent=1 // pred_check
      _
    $region139: #{vit_forward.1} parent=1 // pred_check_branch
      %269 = sbr.rel (0) target = $region141
    $region140: #{vit_forward.1} parent=1 // pred_region
      _
    $region141: #{vit_forward.1} parent=1 // pred_fallthru
      _
    // Predicated region
    $region142: #{vit_forward.1} parent=1 // pred_check
      _
    $region143: #{vit_forward.1} parent=1 // pred_check_branch
      %271 = sbr.rel (0) target = $region145
    $region144: #{vit_forward.1} parent=1 // pred_region
      _
    $region145: #{vit_forward.1} parent=1 // pred_fallthru
      _
    // Predicated region
    $region146: #{vit_forward.1} parent=1 // pred_check
      _
    $region147: #{vit_forward.1} parent=1 // pred_check_branch
      %273 = sbr.rel (0) target = $region149
    $region148: #{vit_forward.1} parent=1 // pred_region
      _
    $region149: #{vit_forward.1} parent=1 // pred_fallthru
      _
    // Predicated region
    $region150: #{vit_forward.1} parent=1 // pred_check
      _
    $region151: #{vit_forward.1} parent=1 // pred_check_branch
      %275 = sbr.rel (0) target = $region153
    $region152: #{vit_forward.1} parent=1 // pred_region
      %277 = vsyncadd [#allocation20], 0
      %s279 = sshll.u32 %s75, 4
      %s280 = int_to_ptr.hbm [resolvable:$true] %s279
      %s281 = sshll.u32 [#allocation19], 4
      %s282 = int_to_ptr.vmem [resolvable:$true] %s281
      %284 = dma.hbm_to_vmem [thread:$0]  %s280, 16, %s282, [#allocation20]
    $region153: #{vit_forward.1} parent=1 // pred_fallthru
      _
    // Predicated region
    $region154: #{vit_forward.1} parent=1 // pred_check
      _
    $region155: #{vit_forward.1} parent=1 // pred_check_branch
      %286 = sbr.rel (0) target = $region157
    $region156: #{vit_forward.1} parent=1 // pred_region
      _
    $region157: #{vit_forward.1} parent=1 // pred_fallthru
      _
    // Predicated region
    $region158: #{vit_forward.1} parent=1 // pred_check
      _
    $region159: #{vit_forward.1} parent=1 // pred_check_branch
      %288 = sbr.rel (0) target = $region161
    $region160: #{vit_forward.1} parent=1 // pred_region
      _
    $region161: #{vit_forward.1} parent=1 // pred_fallthru
      _
    // Predicated region
    $region162: #{vit_forward.1} parent=1 // pred_check
      _
    $region163: #{vit_forward.1} parent=1 // pred_check_branch
      %290 = sbr.rel (0) target = $region165
    $region164: #{vit_forward.1} parent=1 // pred_region
      _
    $region165: #{vit_forward.1} parent=1 // pred_fallthru
      _
    // Predicated region
    $region166: #{vit_forward.1} parent=1 // pred_check
      _
    $region167: #{vit_forward.1} parent=1 // pred_check_branch
      %292 = sbr.rel (0) target = $region169
    $region168: #{vit_forward.1} parent=1 // pred_region
      %294 = dma.done [#allocation3], 16
    $region169: #{vit_forward.1} parent=1 // pred_fallthru
      _
    // Predicated region
    $region170: #{vit_forward.1} parent=1 // pred_check
      _
    $region171: #{vit_forward.1} parent=1 // pred_check_branch
      %296 = sbr.rel (0) target = $region173
    $region172: #{vit_forward.1} parent=1 // pred_region
      %298 = dma.done [#allocation5], 16
    $region173: #{vit_forward.1} parent=1 // pred_fallthru
      _
    // Predicated region
    $region174: #{vit_forward.1} parent=1 // pred_check
      _
    $region175: #{vit_forward.1} parent=1 // pred_check_branch
      %300 = sbr.rel (0) target = $region177
    $region176: #{vit_forward.1} parent=1 // pred_region
      %302 = dma.done [#allocation5], 16
    $region177: #{vit_forward.1} parent=1 // pred_fallthru
      _
    // Predicated region
    $region178: #{vit_forward.1} parent=1 // pred_check
      _
    $region179: #{vit_forward.1} parent=1 // pred_check_branch
      %304 = sbr.rel (0) target = $region181
    $region180: #{vit_forward.1} parent=1 // pred_region
      %306 = dma.done [#allocation8], 16
    $region181: #{vit_forward.1} parent=1 // pred_fallthru
      _
    // Predicated region
    $region182: #{vit_forward.1} parent=1 // pred_check
      _
    $region183: #{vit_forward.1} parent=1 // pred_check_branch
      %308 = sbr.rel (0) target = $region185
    $region184: #{vit_forward.1} parent=1 // pred_region
      %310 = dma.done [#allocation8], 32
    $region185: #{vit_forward.1} parent=1 // pred_fallthru
      _
    // Predicated region
    $region186: #{vit_forward.1} parent=1 // pred_check
      _
    $region187: #{vit_forward.1} parent=1 // pred_check_branch
      %312 = sbr.rel (0) target = $region189
    $region188: #{vit_forward.1} parent=1 // pred_region
      %314 = dma.done [#allocation11], 32
    $region189: #{vit_forward.1} parent=1 // pred_fallthru
      _
    // Predicated region
    $region190: #{vit_forward.1} parent=1 // pred_check
      _
    $region191: #{vit_forward.1} parent=1 // pred_check_branch
      %316 = sbr.rel (0) target = $region193
    $region192: #{vit_forward.1} parent=1 // pred_region
      %318 = dma.done [#allocation11], 32
    $region193: #{vit_forward.1} parent=1 // pred_fallthru
      _
    // Predicated region
    $region194: #{vit_forward.1} parent=1 // pred_check
      _
    $region195: #{vit_forward.1} parent=1 // pred_check_branch
      %320 = sbr.rel (0) target = $region197
    $region196: #{vit_forward.1} parent=1 // pred_region
      %322 = dma.done [#allocation14], 16
    $region197: #{vit_forward.1} parent=1 // pred_fallthru
      _
    // Predicated region
    $region198: #{vit_forward.1} parent=1 // pred_check
      _
    $region199: #{vit_forward.1} parent=1 // pred_check_branch
      %324 = sbr.rel (0) target = $region201
    $region200: #{vit_forward.1} parent=1 // pred_region
      %326 = dma.done [#allocation14], 16
    $region201: #{vit_forward.1} parent=1 // pred_fallthru
      _
    // Predicated region
    $region202: #{vit_forward.1} parent=1 // pred_check
      _
    $region203: #{vit_forward.1} parent=1 // pred_check_branch
      %328 = sbr.rel (0) target = $region205
    $region204: #{vit_forward.1} parent=1 // pred_region
      %330 = dma.done [#allocation17], 16
    $region205: #{vit_forward.1} parent=1 // pred_fallthru
      _
    // Predicated region
    $region206: #{vit_forward.1} parent=1 // pred_check
      _
    $region207: #{vit_forward.1} parent=1 // pred_check_branch
      %332 = sbr.rel (0) target = $region209
    $region208: #{vit_forward.1} parent=1 // pred_region
      %334 = dma.done [#allocation17], 16
    $region209: #{vit_forward.1} parent=1 // pred_fallthru
      _
    // Predicated region
    $region210: #{vit_forward.1} parent=1 // pred_check
      _
    $region211: #{vit_forward.1} parent=1 // pred_check_branch
      %336 = sbr.rel (0) target = $region213
    $region212: #{vit_forward.1} parent=1 // pred_region
      %338 = dma.done [#allocation20], 16
    $region213: #{vit_forward.1} parent=1 // pred_fallthru
      _
    %v340 = vld [vmem:[%s1] sm:$0xff]
    %v341 = vld [vmem:[%s1 + $0x8] sm:$0xff]
    %v342 = vld [vmem:[%s3] sm:$0xf]
    %v343 = vld [vmem:[%s3 + $0x4] sm:$0xf]
    %v344 = vld [vmem:[%s3 + $0x8] sm:$0xf]
    %v345 = vld [vmem:[%s3 + $0xc] sm:$0xf]
    %v346 = vld [vmem:[%s3 + $0x10] sm:$0xf]
    %v347 = vld [vmem:[%s3 + $0x14] sm:$0xf]
    %v348 = vld [vmem:[%s3 + $0x18] sm:$0xf]
    %v349 = vld [vmem:[%s3 + $0x1c] sm:$0xf]
    %v350 = vld [vmem:[%s3 + $0x20] sm:$0xf]
    %v351 = vld [vmem:[%s3 + $0x24] sm:$0xf]
    %v352 = vld [vmem:[%s3 + $0x28] sm:$0xf]
    %v353 = vld [vmem:[%s3 + $0x2c] sm:$0xf]
    %v354 = vld [vmem:[%s3 + $0x30] sm:$0xf]
    %v355 = vld [vmem:[%s3 + $0x34] sm:$0xf]
    %v356 = vld [vmem:[%s3 + $0x38] sm:$0xf]
    %v357 = vld [vmem:[%s3 + $0x3c] sm:$0xf]
    %v358 = vld [vmem:[%s3 + $0x40] sm:$0xf]
    %v359 = vld [vmem:[%s3 + $0x44] sm:$0xf]
    %v360 = vld [vmem:[%s3 + $0x48] sm:$0xf]
    %v361 = vld [vmem:[%s3 + $0x4c] sm:$0xf]
    %v362 = vld [vmem:[%s3 + $0x50] sm:$0xf]
    %v363 = vld [vmem:[%s3 + $0x54] sm:$0xf]
    %v364 = vld [vmem:[%s3 + $0x58] sm:$0xf]
    %v365 = vld [vmem:[%s3 + $0x5c] sm:$0xf]
    %v366 = vld [vmem:[%s3 + $0x60] sm:$0xf]
    %v367 = vld [vmem:[%s3 + $0x64] sm:$0xf]
    %v368 = vld [vmem:[%s3 + $0x68] sm:$0xf]
    %v369 = vld [vmem:[%s3 + $0x6c] sm:$0xf]
    %v370 = vld [vmem:[%s3 + $0x70] sm:$0xf]
    %v371 = vld [vmem:[%s3 + $0x74] sm:$0xf]
    %v372 = vld [vmem:[%s3 + $0x78] sm:$0xf]
    %v373 = vld [vmem:[%s3 + $0x7c] sm:$0xf]
    %v374 = vld [vmem:[%s5] sm:$0xff]
    %v375 = vld [vmem:[%s5 + $0x8] sm:$0xff]
    %v378 = vunpack.c.l.b16 %v340
    %v379 = vunpack.c.h.b16 %v340
    %v380 = vunpack.c.l.b16 %v341
    %v381 = vunpack.c.h.b16 %v341
    %v382 = vpack.c.b16 %v380, %v378
    %v383 = vpack.c.b16 %v381, %v379
    %v418 = vunpack.c.l.b16 %v342
    %v419 = vunpack.c.l.b16 %v343
    %v420 = vunpack.c.l.b16 %v344
    %v421 = vunpack.c.l.b16 %v345
    %v422 = vunpack.c.l.b16 %v346
    %v423 = vunpack.c.l.b16 %v347
    %v424 = vunpack.c.l.b16 %v348
    %v425 = vunpack.c.l.b16 %v349
    %v426 = vunpack.c.l.b16 %v350
    %v427 = vunpack.c.l.b16 %v351
    %v428 = vunpack.c.l.b16 %v352
    %v429 = vunpack.c.l.b16 %v353
    %v430 = vunpack.c.l.b16 %v354
    %v431 = vunpack.c.l.b16 %v355
    %v432 = vunpack.c.l.b16 %v356
    %v433 = vunpack.c.l.b16 %v357
    %v434 = vunpack.c.l.b16 %v358
    %v435 = vunpack.c.l.b16 %v359
    %v436 = vunpack.c.l.b16 %v360
    %v437 = vunpack.c.l.b16 %v361
    %v438 = vunpack.c.l.b16 %v362
    %v439 = vunpack.c.l.b16 %v363
    %v440 = vunpack.c.l.b16 %v364
    %v441 = vunpack.c.l.b16 %v365
    %v442 = vunpack.c.l.b16 %v366
    %v443 = vunpack.c.l.b16 %v367
    %v444 = vunpack.c.l.b16 %v368
    %v445 = vunpack.c.l.b16 %v369
    %v446 = vunpack.c.l.b16 %v370
    %v447 = vunpack.c.l.b16 %v371
    %v448 = vunpack.c.l.b16 %v372
    %v449 = vunpack.c.l.b16 %v373
    %v450 = vpack.c.b16 %v419, %v418
    %v451 = vpack.c.b16 %v421, %v420
    %v452 = vpack.c.b16 %v423, %v422
    %v453 = vpack.c.b16 %v425, %v424
    %v454 = vpack.c.b16 %v427, %v426
    %v455 = vpack.c.b16 %v429, %v428
    %v456 = vpack.c.b16 %v431, %v430
    %v457 = vpack.c.b16 %v433, %v432
    %v458 = vpack.c.b16 %v435, %v434
    %v459 = vpack.c.b16 %v437, %v436
    %v460 = vpack.c.b16 %v439, %v438
    %v461 = vpack.c.b16 %v441, %v440
    %v462 = vpack.c.b16 %v443, %v442
    %v463 = vpack.c.b16 %v445, %v444
    %v464 = vpack.c.b16 %v447, %v446
    %v465 = vpack.c.b16 %v449, %v448
    %482 = vmatpush.bf16.msra.mxu0 %v457
    %483 = vmatpush.bf16.msra.mxu0 %v456
    %484 = vmatpush.bf16.msra.mxu0 %v455
    %485 = vmatpush.bf16.msra.mxu0 %v454
    %486 = vmatpush.bf16.msra.mxu0 %v453
    %487 = vmatpush.bf16.msra.mxu0 %v452
    %488 = vmatpush.bf16.msra.mxu0 %v451
    %489 = vmatpush.bf16.msra.mxu0 %v450
    %490 = vmatmul.bf16.gmra.mxu0 %v382
    %v491 = vpop.f32.mrf.mxu0
    %v492 = vadd.f32 %v374, %v491
    %v493 = vpop.f32.mrf.mxu0
    %v494 = vadd.f32 %v375, %v493
    %495 = vdwg.mxu0
    %496 = vmatpush.bf16.msra.mxu0 %v465
    %497 = vmatpush.bf16.msra.mxu0 %v464
    %498 = vmatpush.bf16.msra.mxu0 %v463
    %499 = vmatpush.bf16.msra.mxu0 %v462
    %500 = vmatpush.bf16.msra.mxu0 %v461
    %501 = vmatpush.bf16.msra.mxu0 %v460
    %502 = vmatpush.bf16.msra.mxu0 %v459
    %503 = vmatpush.bf16.msra.mxu0 %v458
    %504 = vmatmul.bf16.gmra.mxu0 %v383
    %v505 = vpop.f32.mrf.mxu0
    %v506 = vadd.f32 %v492, %v505
    %v507 = vpop.f32.mrf.mxu0
    %v508 = vadd.f32 %v494, %v507
    %509 = vdwg.mxu0
    %510 = vadd.xlane.f32.xlu0 %v506
    %v511 = vpop.xlane.xlu0 %510
    %512 = vadd.xlane.f32.xlu0 %v508
    %v513 = vpop.xlane.xlu0 %512
    %v514 = vrcp.pop 128.0
    %v515 = vmul.f32 128.0, %v514
    %v516 = vsub.f32 1.0, %v515
    %v517 = vmul.f32 %v514, %v516
    %v518 = vadd.f32 %v514, %v517
    %vm519 = vweird.f32 %v514
    %v520 = vsel %vm519, %v514, %v518
    %v521 = vmul.f32 %v511, %v520
    %v522 = vmul.f32 %v513, %v520
    %v523 = vmul.f32 %v506, %v506
    %v524 = vmul.f32 %v508, %v508
    %525 = vadd.xlane.f32.xlu0 %v523
    %v526 = vpop.xlane.xlu0 %525
    %527 = vadd.xlane.f32.xlu0 %v524
    %v528 = vpop.xlane.xlu0 %527
    %v529 = vmul.f32 %v526, %v520
    %v530 = vmul.f32 %v528, %v520
    %v531 = vmul.f32 %v521, %v521
    %v532 = vmul.f32 %v522, %v522
    %v533 = vsub.f32 %v529, %v531
    %v534 = vsub.f32 %v530, %v532
    %v535 = vsub.f32 %v506, %v521
    %v536 = vsub.f32 %v508, %v522
    %v537 = vadd.f32 %v533, 1e-05
    %v538 = vadd.f32 %v534, 1e-05
    %v539 = vrsqrt.pop %v537
    %v540 = vmul.f32 %v539, %v537
    %v541 = vmul.f32 %v540, %v539
    %v542 = vmul.f32 0.5, %v541
    %v543 = vsub.f32 1.5, %v542
    %v544 = vmul.f32 %v539, %v543
    %vm545 = vweird.f32 %v537
    %vm546 = vweird.f32 %v539
    %vm547 = vmor %vm545, %vm546
    %v548 = vsel %vm547, %v539, %v544
    %v549 = vrsqrt.pop %v538
    %v550 = vmul.f32 %v549, %v538
    %v551 = vmul.f32 %v550, %v549
    %v552 = vmul.f32 0.5, %v551
    %v553 = vsub.f32 1.5, %v552
    %v554 = vmul.f32 %v549, %v553
    %vm555 = vweird.f32 %v538
    %vm556 = vweird.f32 %v549
    %vm557 = vmor %vm555, %vm556
    %v558 = vsel %vm557, %v549, %v554
    %v559 = vmul.f32 %v535, %v548
    %v560 = vmul.f32 %v536, %v558
    %v561 = vld [vmem:[#allocation2] sm:$0x1]
    %v563 = vperm.slane %v561, 0
    %v565 = vmul.f32 %v559, %v563
    %v566 = vmul.f32 %v560, %v563
    %v567 = vld [vmem:[#allocation4] sm:$0x1]
    %v569 = vperm.slane %v567, 0
    %v571 = vadd.f32 %v565, %v569
    %v572 = vadd.f32 %v566, %v569
    %v573 = vld [vmem:[%s11] sm:$0xff]
    %v574 = vld [vmem:[%s11 + $0x8] sm:$0xff]
    %575 = vadd.xlane.f32.xlu0 %v571
    %v576 = vpop.xlane.xlu0 %575
    %577 = vadd.xlane.f32.xlu0 %v572
    %v578 = vpop.xlane.xlu0 %577
    %v579 = vmul.f32 %v576, %v520
    %v580 = vmul.f32 %v578, %v520
    %v581 = vmul.f32 %v571, %v571
    %v582 = vmul.f32 %v572, %v572
    %583 = vadd.xlane.f32.xlu0 %v581
    %v584 = vpop.xlane.xlu0 %583
    %585 = vadd.xlane.f32.xlu0 %v582
    %v586 = vpop.xlane.xlu0 %585
    %v587 = vmul.f32 %v584, %v520
    %v588 = vmul.f32 %v586, %v520
    %v589 = vmul.f32 %v579, %v579
    %v590 = vmul.f32 %v580, %v580
    %v591 = vsub.f32 %v587, %v589
    %v592 = vsub.f32 %v588, %v590
    %v593 = vsub.f32 %v571, %v579
    %v594 = vsub.f32 %v572, %v580
    %v595 = vadd.f32 %v591, 1e-05
    %v596 = vadd.f32 %v592, 1e-05
    %v597 = vrsqrt.pop %v595
    %v598 = vmul.f32 %v597, %v595
    %v599 = vmul.f32 %v598, %v597
    %v600 = vmul.f32 0.5, %v599
    %v601 = vsub.f32 1.5, %v600
    %v602 = vmul.f32 %v597, %v601
    %vm603 = vweird.f32 %v595
    %vm604 = vweird.f32 %v597
    %vm605 = vmor %vm603, %vm604
    %v606 = vsel %vm605, %v597, %v602
    %v607 = vrsqrt.pop %v596
    %v608 = vmul.f32 %v607, %v596
    %v609 = vmul.f32 %v608, %v607
    %v610 = vmul.f32 0.5, %v609
    %v611 = vsub.f32 1.5, %v610
    %v612 = vmul.f32 %v607, %v611
    %vm613 = vweird.f32 %v596
    %vm614 = vweird.f32 %v607
    %vm615 = vmor %vm613, %vm614
    %v616 = vsel %vm615, %v607, %v612
    %v617 = vmul.f32 %v593, %v606
    %v618 = vmul.f32 %v594, %v616
    %v619 = vld [vmem:[#allocation6] sm:$0x1]
    %v621 = vperm.slane %v619, 0
    %v623 = vmul.f32 %v617, %v621
    %v624 = vmul.f32 %v618, %v621
    %v625 = vld [vmem:[#allocation7] sm:$0x1]
    %v627 = vperm.slane %v625, 0
    %v629 = vadd.f32 %v623, %v627
    %v630 = vadd.f32 %v624, %v627
    %v631 = vpack.c.bf16 %v630, %v629
    %v632 = vld [vmem:[%s17] sm:$0xf]
    %v633 = vld [vmem:[%s17 + $0x4] sm:$0xf]
    %v634 = vld [vmem:[%s17 + $0x8] sm:$0xf]
    %v635 = vld [vmem:[%s17 + $0xc] sm:$0xf]
    %v636 = vld [vmem:[%s17 + $0x10] sm:$0xf]
    %v637 = vld [vmem:[%s17 + $0x14] sm:$0xf]
    %v638 = vld [vmem:[%s17 + $0x18] sm:$0xf]
    %v639 = vld [vmem:[%s17 + $0x1c] sm:$0xf]
    %v640 = vld [vmem:[%s17 + $0x20] sm:$0xf]
    %v641 = vld [vmem:[%s17 + $0x24] sm:$0xf]
    %v642 = vld [vmem:[%s17 + $0x28] sm:$0xf]
    %v643 = vld [vmem:[%s17 + $0x2c] sm:$0xf]
    %v644 = vld [vmem:[%s17 + $0x30] sm:$0xf]
    %v645 = vld [vmem:[%s17 + $0x34] sm:$0xf]
    %v646 = vld [vmem:[%s17 + $0x38] sm:$0xf]
    %v647 = vld [vmem:[%s17 + $0x3c] sm:$0xf]
    %v648 = vld [vmem:[#allocation9] sm:$0x1]
    %v650 = vperm.slane %v648, 0
    %v668 = vunpack.c.l.b16 %v632
    %v669 = vunpack.c.l.b16 %v633
    %v670 = vunpack.c.l.b16 %v634
    %v671 = vunpack.c.l.b16 %v635
    %v672 = vunpack.c.l.b16 %v636
    %v673 = vunpack.c.l.b16 %v637
    %v674 = vunpack.c.l.b16 %v638
    %v675 = vunpack.c.l.b16 %v639
    %v676 = vunpack.c.l.b16 %v640
    %v677 = vunpack.c.l.b16 %v641
    %v678 = vunpack.c.l.b16 %v642
    %v679 = vunpack.c.l.b16 %v643
    %v680 = vunpack.c.l.b16 %v644
    %v681 = vunpack.c.l.b16 %v645
    %v682 = vunpack.c.l.b16 %v646
    %v683 = vunpack.c.l.b16 %v647
    %v684 = vpack.c.b16 %v669, %v668
    %v685 = vpack.c.b16 %v671, %v670
    %v686 = vpack.c.b16 %v673, %v672
    %v687 = vpack.c.b16 %v675, %v674
    %v688 = vpack.c.b16 %v677, %v676
    %v689 = vpack.c.b16 %v679, %v678
    %v690 = vpack.c.b16 %v681, %v680
    %v691 = vpack.c.b16 %v683, %v682
    %700 = vmatpush.bf16.msra.mxu0 %v691
    %701 = vmatpush.bf16.msra.mxu0 %v690
    %702 = vmatpush.bf16.msra.mxu0 %v689
    %703 = vmatpush.bf16.msra.mxu0 %v688
    %704 = vmatpush.bf16.msra.mxu0 %v687
    %705 = vmatpush.bf16.msra.mxu0 %v686
    %706 = vmatpush.bf16.msra.mxu0 %v685
    %707 = vmatpush.bf16.msra.mxu0 %v684
    %708 = vmatmul.bf16.gmra.mxu0 %v631
    %v709 = vpop.f32.mrf.mxu0
    %v710 = vadd.f32 %v650, %v709
    %v711 = vpop.f32.mrf.mxu0
    %v712 = vadd.f32 %v650, %v711
    %713 = vdwg.mxu0
    %v714 = vld [vmem:[%s21] sm:$0xf]
    %v715 = vld [vmem:[%s21 + $0x4] sm:$0xf]
    %v716 = vld [vmem:[%s21 + $0x8] sm:$0xf]
    %v717 = vld [vmem:[%s21 + $0xc] sm:$0xf]
    %v718 = vld [vmem:[%s21 + $0x10] sm:$0xf]
    %v719 = vld [vmem:[%s21 + $0x14] sm:$0xf]
    %v720 = vld [vmem:[%s21 + $0x18] sm:$0xf]
    %v721 = vld [vmem:[%s21 + $0x1c] sm:$0xf]
    %v722 = vld [vmem:[%s21 + $0x20] sm:$0xf]
    %v723 = vld [vmem:[%s21 + $0x24] sm:$0xf]
    %v724 = vld [vmem:[%s21 + $0x28] sm:$0xf]
    %v725 = vld [vmem:[%s21 + $0x2c] sm:$0xf]
    %v726 = vld [vmem:[%s21 + $0x30] sm:$0xf]
    %v727 = vld [vmem:[%s21 + $0x34] sm:$0xf]
    %v728 = vld [vmem:[%s21 + $0x38] sm:$0xf]
    %v729 = vld [vmem:[%s21 + $0x3c] sm:$0xf]
    %v730 = vld [vmem:[#allocation10] sm:$0x1]
    %v732 = vperm.slane %v730, 0
    %v750 = vunpack.c.l.b16 %v714
    %v751 = vunpack.c.l.b16 %v715
    %v752 = vunpack.c.l.b16 %v716
    %v753 = vunpack.c.l.b16 %v717
    %v754 = vunpack.c.l.b16 %v718
    %v755 = vunpack.c.l.b16 %v719
    %v756 = vunpack.c.l.b16 %v720
    %v757 = vunpack.c.l.b16 %v721
    %v758 = vunpack.c.l.b16 %v722
    %v759 = vunpack.c.l.b16 %v723
    %v760 = vunpack.c.l.b16 %v724
    %v761 = vunpack.c.l.b16 %v725
    %v762 = vunpack.c.l.b16 %v726
    %v763 = vunpack.c.l.b16 %v727
    %v764 = vunpack.c.l.b16 %v728
    %v765 = vunpack.c.l.b16 %v729
    %v766 = vpack.c.b16 %v751, %v750
    %v767 = vpack.c.b16 %v753, %v752
    %v768 = vpack.c.b16 %v755, %v754
    %v769 = vpack.c.b16 %v757, %v756
    %v770 = vpack.c.b16 %v759, %v758
    %v771 = vpack.c.b16 %v761, %v760
    %v772 = vpack.c.b16 %v763, %v762
    %v773 = vpack.c.b16 %v765, %v764
    %782 = vmatpush.bf16.msra.mxu0 %v773
    %783 = vmatpush.bf16.msra.mxu0 %v772
    %784 = vmatpush.bf16.msra.mxu0 %v771
    %785 = vmatpush.bf16.msra.mxu0 %v770
    %786 = vmatpush.bf16.msra.mxu0 %v769
    %787 = vmatpush.bf16.msra.mxu0 %v768
    %788 = vmatpush.bf16.msra.mxu0 %v767
    %789 = vmatpush.bf16.msra.mxu0 %v766
    %790 = vmatmul.bf16.gmra.mxu0 %v631
    %v791 = vpop.f32.mrf.mxu0
    %v792 = vadd.f32 %v732, %v791
    %v793 = vpop.f32.mrf.mxu0
    %v794 = vadd.f32 %v732, %v793
    %795 = vdwg.mxu0
    %v796 = vld [vmem:[%s25] sm:$0xf]
    %v797 = vld [vmem:[%s25 + $0x4] sm:$0xf]
    %v798 = vld [vmem:[%s25 + $0x8] sm:$0xf]
    %v799 = vld [vmem:[%s25 + $0xc] sm:$0xf]
    %v800 = vld [vmem:[%s25 + $0x10] sm:$0xf]
    %v801 = vld [vmem:[%s25 + $0x14] sm:$0xf]
    %v802 = vld [vmem:[%s25 + $0x18] sm:$0xf]
    %v803 = vld [vmem:[%s25 + $0x1c] sm:$0xf]
    %v804 = vld [vmem:[%s25 + $0x20] sm:$0xf]
    %v805 = vld [vmem:[%s25 + $0x24] sm:$0xf]
    %v806 = vld [vmem:[%s25 + $0x28] sm:$0xf]
    %v807 = vld [vmem:[%s25 + $0x2c] sm:$0xf]
    %v808 = vld [vmem:[%s25 + $0x30] sm:$0xf]
    %v809 = vld [vmem:[%s25 + $0x34] sm:$0xf]
    %v810 = vld [vmem:[%s25 + $0x38] sm:$0xf]
    %v811 = vld [vmem:[%s25 + $0x3c] sm:$0xf]
    %v812 = vld [vmem:[#allocation12] sm:$0x1]
    %v814 = vperm.slane %v812, 0
    %v832 = vunpack.c.l.b16 %v796
    %v833 = vunpack.c.l.b16 %v797
    %v834 = vunpack.c.l.b16 %v798
    %v835 = vunpack.c.l.b16 %v799
    %v836 = vunpack.c.l.b16 %v800
    %v837 = vunpack.c.l.b16 %v801
    %v838 = vunpack.c.l.b16 %v802
    %v839 = vunpack.c.l.b16 %v803
    %v840 = vunpack.c.l.b16 %v804
    %v841 = vunpack.c.l.b16 %v805
    %v842 = vunpack.c.l.b16 %v806
    %v843 = vunpack.c.l.b16 %v807
    %v844 = vunpack.c.l.b16 %v808
    %v845 = vunpack.c.l.b16 %v809
    %v846 = vunpack.c.l.b16 %v810
    %v847 = vunpack.c.l.b16 %v811
    %v848 = vpack.c.b16 %v833, %v832
    %v849 = vpack.c.b16 %v835, %v834
    %v850 = vpack.c.b16 %v837, %v836
    %v851 = vpack.c.b16 %v839, %v838
    %v852 = vpack.c.b16 %v841, %v840
    %v853 = vpack.c.b16 %v843, %v842
    %v854 = vpack.c.b16 %v845, %v844
    %v855 = vpack.c.b16 %v847, %v846
    %864 = vmatpush.bf16.msra.mxu0 %v855
    %865 = vmatpush.bf16.msra.mxu0 %v854
    %866 = vmatpush.bf16.msra.mxu0 %v853
    %867 = vmatpush.bf16.msra.mxu0 %v852
    %868 = vmatpush.bf16.msra.mxu0 %v851
    %869 = vmatpush.bf16.msra.mxu0 %v850
    %870 = vmatpush.bf16.msra.mxu0 %v849
    %871 = vmatpush.bf16.msra.mxu0 %v848
    %872 = vmatmul.bf16.gmra.mxu0 %v631
    %v873 = vpop.f32.mrf.mxu0
    %v874 = vadd.f32 %v814, %v873
    %v875 = vpop.f32.mrf.mxu0
    %v876 = vadd.f32 %v814, %v875
    %877 = vdwg.mxu0
    %v878 = vpack.c.bf16 %v712, %v710
    %v879 = vpack.c.bf16 %v794, %v792
    %vm880 = vcmask 523264
    %v882 = vsel %vm880, %v878, 0
    %v885 = vsel %vm880, %v879, 0
    %887 = vmatpush.bf16.xpose.msra.mxu0 0
    %888 = vmatpush.bf16.xpose.msra.mxu0 0
    %889 = vmatpush.bf16.xpose.msra.mxu0 0
    %890 = vmatpush.bf16.xpose.msra.mxu0 0
    %891 = vmatpush.bf16.xpose.msra.mxu0 0
    %892 = vmatpush.bf16.xpose.msra.mxu0 0
    %893 = vmatpush.bf16.xpose.msra.mxu0 0
    %894 = vmatpush.bf16.xpose.msra.mxu0 %v885
    %895 = vmatmul.bf16.gmra.mxu0 %v882
    %v896 = vpop.f32.mrf.mxu0
    %v897 = vadd.f32 %v573, %v896
    %v898 = vpop.f32.mrf.mxu0
    %v899 = vadd.f32 %v574, %v898
    %900 = vdwg.mxu0
    %vm901 = vcmask 130048
    %v902 = vsel %vm901, %v897, -inf
    %903 = vmax.xlane.f32.xlu0 %v902
    %v904 = vpop.xlane.xlu0 %903
    %v905 = vsel %vm901, %v899, -inf
    %906 = vmax.xlane.f32.xlu0 %v905
    %v907 = vpop.xlane.xlu0 %906
    %v908 = vsub.f32 %v897, %v904
    %v909 = vsub.f32 %v899, %v907
    %v910 = vmul.f32 %v908, 1.442695
    %v911 = vpow.pop %v910
    %v912 = vmul.f32 %v909, 1.442695
    %v913 = vpow.pop %v912
    %v914 = vsel %vm901, %v911, 0.0
    %915 = vadd.xlane.f32.xlu0 %v914
    %v916 = vpop.xlane.xlu0 %915
    %v917 = vsel %vm901, %v913, 0.0
    %918 = vadd.xlane.f32.xlu0 %v917
    %v919 = vpop.xlane.xlu0 %918
    %v920 = vrcp.pop %v916
    %v921 = vrcp.pop %v919
    %v922 = vmul.f32 %v911, %v920
    %v923 = vmul.f32 %v913, %v921
    %v924 = vpack.c.bf16 %v923, %v922
    %v925 = vpack.c.bf16 %v876, %v874
    %v927 = vsel %vm901, %v924, 0
    %929 = vmatpush.bf16.msra.mxu0 0
    %930 = vmatpush.bf16.msra.mxu0 0
    %931 = vmatpush.bf16.msra.mxu0 0
    %932 = vmatpush.bf16.msra.mxu0 0
    %933 = vmatpush.bf16.msra.mxu0 0
    %934 = vmatpush.bf16.msra.mxu0 0
    %935 = vmatpush.bf16.msra.mxu0 0
    %936 = vmatpush.bf16.msra.mxu0 %v925
    %937 = vmatmul.bf16.gmra.mxu0 %v927
    %v938 = vpop.f32.mrf.mxu0
    %v939 = vadd.f32 0.0, %v938
    %v940 = vpop.f32.mrf.mxu0
    %v941 = vadd.f32 0.0, %v940
    %942 = vdwg.mxu0
    %v943 = vld [vmem:[%s29] sm:$0xf]
    %v944 = vld [vmem:[%s29 + $0x4] sm:$0xf]
    %v945 = vld [vmem:[%s29 + $0x8] sm:$0xf]
    %v946 = vld [vmem:[%s29 + $0xc] sm:$0xf]
    %v947 = vld [vmem:[%s29 + $0x10] sm:$0xf]
    %v948 = vld [vmem:[%s29 + $0x14] sm:$0xf]
    %v949 = vld [vmem:[%s29 + $0x18] sm:$0xf]
    %v950 = vld [vmem:[%s29 + $0x1c] sm:$0xf]
    %v951 = vpack.c.bf16 %v941, %v939
    %s952 = scalar_lea.vmem %s17, 64
    %v953 = vld [vmem:[%s952] sm:$0xf]
    %v954 = vld [vmem:[%s952 + $0x4] sm:$0xf]
    %v955 = vld [vmem:[%s952 + $0x8] sm:$0xf]
    %v956 = vld [vmem:[%s952 + $0xc] sm:$0xf]
    %v957 = vld [vmem:[%s952 + $0x10] sm:$0xf]
    %v958 = vld [vmem:[%s952 + $0x14] sm:$0xf]
    %v959 = vld [vmem:[%s952 + $0x18] sm:$0xf]
    %v960 = vld [vmem:[%s952 + $0x1c] sm:$0xf]
    %v961 = vld [vmem:[%s952 + $0x20] sm:$0xf]
    %v962 = vld [vmem:[%s952 + $0x24] sm:$0xf]
    %v963 = vld [vmem:[%s952 + $0x28] sm:$0xf]
    %v964 = vld [vmem:[%s952 + $0x2c] sm:$0xf]
    %v965 = vld [vmem:[%s952 + $0x30] sm:$0xf]
    %v966 = vld [vmem:[%s952 + $0x34] sm:$0xf]
    %v967 = vld [vmem:[%s952 + $0x38] sm:$0xf]
    %v968 = vld [vmem:[%s952 + $0x3c] sm:$0xf]
    %s969 = scalar_lea.vmem [#allocation9], 1
    %v970 = vld [vmem:[%s969] sm:$0x1]
    %v972 = vperm.slane %v970, 0
    %v990 = vunpack.c.l.b16 %v953
    %v991 = vunpack.c.l.b16 %v954
    %v992 = vunpack.c.l.b16 %v955
    %v993 = vunpack.c.l.b16 %v956
    %v994 = vunpack.c.l.b16 %v957
    %v995 = vunpack.c.l.b16 %v958
    %v996 = vunpack.c.l.b16 %v959
    %v997 = vunpack.c.l.b16 %v960
    %v998 = vunpack.c.l.b16 %v961
    %v999 = vunpack.c.l.b16 %v962
    %v1000 = vunpack.c.l.b16 %v963
    %v1001 = vunpack.c.l.b16 %v964
    %v1002 = vunpack.c.l.b16 %v965
    %v1003 = vunpack.c.l.b16 %v966
    %v1004 = vunpack.c.l.b16 %v967
    %v1005 = vunpack.c.l.b16 %v968
    %v1006 = vpack.c.b16 %v991, %v990
    %v1007 = vpack.c.b16 %v993, %v992
    %v1008 = vpack.c.b16 %v995, %v994
    %v1009 = vpack.c.b16 %v997, %v996
    %v1010 = vpack.c.b16 %v999, %v998
    %v1011 = vpack.c.b16 %v1001, %v1000
    %v1012 = vpack.c.b16 %v1003, %v1002
    %v1013 = vpack.c.b16 %v1005, %v1004
    %1022 = vmatpush.bf16.msra.mxu0 %v1013
    %1023 = vmatpush.bf16.msra.mxu0 %v1012
    %1024 = vmatpush.bf16.msra.mxu0 %v1011
    %1025 = vmatpush.bf16.msra.mxu0 %v1010
    %1026 = vmatpush.bf16.msra.mxu0 %v1009
    %1027 = vmatpush.bf16.msra.mxu0 %v1008
    %1028 = vmatpush.bf16.msra.mxu0 %v1007
    %1029 = vmatpush.bf16.msra.mxu0 %v1006
    %1030 = vmatmul.bf16.gmra.mxu0 %v631
    %v1031 = vpop.f32.mrf.mxu0
    %v1032 = vadd.f32 %v972, %v1031
    %v1033 = vpop.f32.mrf.mxu0
    %v1034 = vadd.f32 %v972, %v1033
    %1035 = vdwg.mxu0
    %s1036 = scalar_lea.vmem %s21, 64
    %v1037 = vld [vmem:[%s1036] sm:$0xf]
    %v1038 = vld [vmem:[%s1036 + $0x4] sm:$0xf]
    %v1039 = vld [vmem:[%s1036 + $0x8] sm:$0xf]
    %v1040 = vld [vmem:[%s1036 + $0xc] sm:$0xf]
    %v1041 = vld [vmem:[%s1036 + $0x10] sm:$0xf]
    %v1042 = vld [vmem:[%s1036 + $0x14] sm:$0xf]
    %v1043 = vld [vmem:[%s1036 + $0x18] sm:$0xf]
    %v1044 = vld [vmem:[%s1036 + $0x1c] sm:$0xf]
    %v1045 = vld [vmem:[%s1036 + $0x20] sm:$0xf]
    %v1046 = vld [vmem:[%s1036 + $0x24] sm:$0xf]
    %v1047 = vld [vmem:[%s1036 + $0x28] sm:$0xf]
    %v1048 = vld [vmem:[%s1036 + $0x2c] sm:$0xf]
    %v1049 = vld [vmem:[%s1036 + $0x30] sm:$0xf]
    %v1050 = vld [vmem:[%s1036 + $0x34] sm:$0xf]
    %v1051 = vld [vmem:[%s1036 + $0x38] sm:$0xf]
    %v1052 = vld [vmem:[%s1036 + $0x3c] sm:$0xf]
    %s1053 = scalar_lea.vmem [#allocation10], 1
    %v1054 = vld [vmem:[%s1053] sm:$0x1]
    %v1056 = vperm.slane %v1054, 0
    %v1074 = vunpack.c.l.b16 %v1037
    %v1075 = vunpack.c.l.b16 %v1038
    %v1076 = vunpack.c.l.b16 %v1039
    %v1077 = vunpack.c.l.b16 %v1040
    %v1078 = vunpack.c.l.b16 %v1041
    %v1079 = vunpack.c.l.b16 %v1042
    %v1080 = vunpack.c.l.b16 %v1043
    %v1081 = vunpack.c.l.b16 %v1044
    %v1082 = vunpack.c.l.b16 %v1045
    %v1083 = vunpack.c.l.b16 %v1046
    %v1084 = vunpack.c.l.b16 %v1047
    %v1085 = vunpack.c.l.b16 %v1048
    %v1086 = vunpack.c.l.b16 %v1049
    %v1087 = vunpack.c.l.b16 %v1050
    %v1088 = vunpack.c.l.b16 %v1051
    %v1089 = vunpack.c.l.b16 %v1052
    %v1090 = vpack.c.b16 %v1075, %v1074
    %v1091 = vpack.c.b16 %v1077, %v1076
    %v1092 = vpack.c.b16 %v1079, %v1078
    %v1093 = vpack.c.b16 %v1081, %v1080
    %v1094 = vpack.c.b16 %v1083, %v1082
    %v1095 = vpack.c.b16 %v1085, %v1084
    %v1096 = vpack.c.b16 %v1087, %v1086
    %v1097 = vpack.c.b16 %v1089, %v1088
    %1106 = vmatpush.bf16.msra.mxu0 %v1097
    %1107 = vmatpush.bf16.msra.mxu0 %v1096
    %1108 = vmatpush.bf16.msra.mxu0 %v1095
    %1109 = vmatpush.bf16.msra.mxu0 %v1094
    %1110 = vmatpush.bf16.msra.mxu0 %v1093
    %1111 = vmatpush.bf16.msra.mxu0 %v1092
    %1112 = vmatpush.bf16.msra.mxu0 %v1091
    %1113 = vmatpush.bf16.msra.mxu0 %v1090
    %1114 = vmatmul.bf16.gmra.mxu0 %v631
    %v1115 = vpop.f32.mrf.mxu0
    %v1116 = vadd.f32 %v1056, %v1115
    %v1117 = vpop.f32.mrf.mxu0
    %v1118 = vadd.f32 %v1056, %v1117
    %1119 = vdwg.mxu0
    %s1120 = scalar_lea.vmem %s25, 64
    %v1121 = vld [vmem:[%s1120] sm:$0xf]
    %v1122 = vld [vmem:[%s1120 + $0x4] sm:$0xf]
    %v1123 = vld [vmem:[%s1120 + $0x8] sm:$0xf]
    %v1124 = vld [vmem:[%s1120 + $0xc] sm:$0xf]
    %v1125 = vld [vmem:[%s1120 + $0x10] sm:$0xf]
    %v1126 = vld [vmem:[%s1120 + $0x14] sm:$0xf]
    %v1127 = vld [vmem:[%s1120 + $0x18] sm:$0xf]
    %v1128 = vld [vmem:[%s1120 + $0x1c] sm:$0xf]
    %v1129 = vld [vmem:[%s1120 + $0x20] sm:$0xf]
    %v1130 = vld [vmem:[%s1120 + $0x24] sm:$0xf]
    %v1131 = vld [vmem:[%s1120 + $0x28] sm:$0xf]
    %v1132 = vld [vmem:[%s1120 + $0x2c] sm:$0xf]
    %v1133 = vld [vmem:[%s1120 + $0x30] sm:$0xf]
    %v1134 = vld [vmem:[%s1120 + $0x34] sm:$0xf]
    %v1135 = vld [vmem:[%s1120 + $0x38] sm:$0xf]
    %v1136 = vld [vmem:[%s1120 + $0x3c] sm:$0xf]
    %s1137 = scalar_lea.vmem [#allocation12], 1
    %v1138 = vld [vmem:[%s1137] sm:$0x1]
    %v1140 = vperm.slane %v1138, 0
    %v1158 = vunpack.c.l.b16 %v1121
    %v1159 = vunpack.c.l.b16 %v1122
    %v1160 = vunpack.c.l.b16 %v1123
    %v1161 = vunpack.c.l.b16 %v1124
    %v1162 = vunpack.c.l.b16 %v1125
    %v1163 = vunpack.c.l.b16 %v1126
    %v1164 = vunpack.c.l.b16 %v1127
    %v1165 = vunpack.c.l.b16 %v1128
    %v1166 = vunpack.c.l.b16 %v1129
    %v1167 = vunpack.c.l.b16 %v1130
    %v1168 = vunpack.c.l.b16 %v1131
    %v1169 = vunpack.c.l.b16 %v1132
    %v1170 = vunpack.c.l.b16 %v1133
    %v1171 = vunpack.c.l.b16 %v1134
    %v1172 = vunpack.c.l.b16 %v1135
    %v1173 = vunpack.c.l.b16 %v1136
    %v1174 = vpack.c.b16 %v1159, %v1158
    %v1175 = vpack.c.b16 %v1161, %v1160
    %v1176 = vpack.c.b16 %v1163, %v1162
    %v1177 = vpack.c.b16 %v1165, %v1164
    %v1178 = vpack.c.b16 %v1167, %v1166
    %v1179 = vpack.c.b16 %v1169, %v1168
    %v1180 = vpack.c.b16 %v1171, %v1170
    %v1181 = vpack.c.b16 %v1173, %v1172
    %1190 = vmatpush.bf16.msra.mxu0 %v1181
    %1191 = vmatpush.bf16.msra.mxu0 %v1180
    %1192 = vmatpush.bf16.msra.mxu0 %v1179
    %1193 = vmatpush.bf16.msra.mxu0 %v1178
    %1194 = vmatpush.bf16.msra.mxu0 %v1177
    %1195 = vmatpush.bf16.msra.mxu0 %v1176
    %1196 = vmatpush.bf16.msra.mxu0 %v1175
    %1197 = vmatpush.bf16.msra.mxu0 %v1174
    %1198 = vmatmul.bf16.gmra.mxu0 %v631
    %v1199 = vpop.f32.mrf.mxu0
    %v1200 = vadd.f32 %v1140, %v1199
    %v1201 = vpop.f32.mrf.mxu0
    %v1202 = vadd.f32 %v1140, %v1201
    %1203 = vdwg.mxu0
    %v1204 = vpack.c.bf16 %v1034, %v1032
    %v1205 = vpack.c.bf16 %v1118, %v1116
    %v1207 = vsel %vm880, %v1204, 0
    %v1210 = vsel %vm880, %v1205, 0
    %1212 = vmatpush.bf16.xpose.msra.mxu0 0
    %1213 = vmatpush.bf16.xpose.msra.mxu0 0
    %1214 = vmatpush.bf16.xpose.msra.mxu0 0
    %1215 = vmatpush.bf16.xpose.msra.mxu0 0
    %1216 = vmatpush.bf16.xpose.msra.mxu0 0
    %1217 = vmatpush.bf16.xpose.msra.mxu0 0
    %1218 = vmatpush.bf16.xpose.msra.mxu0 0
    %1219 = vmatpush.bf16.xpose.msra.mxu0 %v1210
    %1220 = vmatmul.bf16.gmra.mxu0 %v1207
    %v1221 = vpop.f32.mrf.mxu0
    %v1222 = vadd.f32 %v573, %v1221
    %v1223 = vpop.f32.mrf.mxu0
    %v1224 = vadd.f32 %v574, %v1223
    %1225 = vdwg.mxu0
    %v1226 = vsel %vm901, %v1222, -inf
    %1227 = vmax.xlane.f32.xlu0 %v1226
    %v1228 = vpop.xlane.xlu0 %1227
    %v1229 = vsel %vm901, %v1224, -inf
    %1230 = vmax.xlane.f32.xlu0 %v1229
    %v1231 = vpop.xlane.xlu0 %1230
    %v1232 = vsub.f32 %v1222, %v1228
    %v1233 = vsub.f32 %v1224, %v1231
    %v1234 = vmul.f32 %v1232, 1.442695
    %v1235 = vpow.pop %v1234
    %v1236 = vmul.f32 %v1233, 1.442695
    %v1237 = vpow.pop %v1236
    %v1238 = vsel %vm901, %v1235, 0.0
    %1239 = vadd.xlane.f32.xlu0 %v1238
    %v1240 = vpop.xlane.xlu0 %1239
    %v1241 = vsel %vm901, %v1237, 0.0
    %1242 = vadd.xlane.f32.xlu0 %v1241
    %v1243 = vpop.xlane.xlu0 %1242
    %v1244 = vrcp.pop %v1240
    %v1245 = vrcp.pop %v1243
    %v1246 = vmul.f32 %v1235, %v1244
    %v1247 = vmul.f32 %v1237, %v1245
    %v1248 = vpack.c.bf16 %v1247, %v1246
    %v1249 = vpack.c.bf16 %v1202, %v1200
    %v1251 = vsel %vm901, %v1248, 0
    %1253 = vmatpush.bf16.msra.mxu0 0
    %1254 = vmatpush.bf16.msra.mxu0 0
    %1255 = vmatpush.bf16.msra.mxu0 0
    %1256 = vmatpush.bf16.msra.mxu0 0
    %1257 = vmatpush.bf16.msra.mxu0 0
    %1258 = vmatpush.bf16.msra.mxu0 0
    %1259 = vmatpush.bf16.msra.mxu0 0
    %1260 = vmatpush.bf16.msra.mxu0 %v1249
    %1261 = vmatmul.bf16.gmra.mxu0 %v1251
    %v1262 = vpop.f32.mrf.mxu0
    %v1263 = vadd.f32 0.0, %v1262
    %v1264 = vpop.f32.mrf.mxu0
    %v1265 = vadd.f32 0.0, %v1264
    %1266 = vdwg.mxu0
    %s1267 = scalar_lea.vmem %s29, 32
    %v1268 = vld [vmem:[%s1267] sm:$0xf]
    %v1269 = vld [vmem:[%s1267 + $0x4] sm:$0xf]
    %v1270 = vld [vmem:[%s1267 + $0x8] sm:$0xf]
    %v1271 = vld [vmem:[%s1267 + $0xc] sm:$0xf]
    %v1272 = vld [vmem:[%s1267 + $0x10] sm:$0xf]
    %v1273 = vld [vmem:[%s1267 + $0x14] sm:$0xf]
    %v1274 = vld [vmem:[%s1267 + $0x18] sm:$0xf]
    %v1275 = vld [vmem:[%s1267 + $0x1c] sm:$0xf]
    %v1276 = vpack.c.bf16 %v1265, %v1263
    %v1285 = vunpack.c.l.b16 %v1268
    %v1286 = vunpack.c.l.b16 %v1269
    %v1287 = vunpack.c.l.b16 %v1270
    %v1288 = vunpack.c.l.b16 %v1271
    %v1289 = vunpack.c.l.b16 %v1272
    %v1290 = vunpack.c.l.b16 %v1273
    %v1291 = vunpack.c.l.b16 %v1274
    %v1292 = vunpack.c.l.b16 %v1275
    %v1293 = vpack.c.b16 %v1286, %v1285
    %v1294 = vpack.c.b16 %v1288, %v1287
    %v1295 = vpack.c.b16 %v1290, %v1289
    %v1296 = vpack.c.b16 %v1292, %v1291
    %v1302 = vsel %vm880, %v1276, 0
    %1304 = vmatpush.bf16.msra.mxu0 0
    %1305 = vmatpush.bf16.msra.mxu0 0
    %1306 = vmatpush.bf16.msra.mxu0 0
    %1307 = vmatpush.bf16.msra.mxu0 0
    %1308 = vmatpush.bf16.msra.mxu0 %v1296
    %1309 = vmatpush.bf16.msra.mxu0 %v1295
    %1310 = vmatpush.bf16.msra.mxu0 %v1294
    %1311 = vmatpush.bf16.msra.mxu0 %v1293
    %1312 = vmatmul.bf16.gmra.mxu0 %v1302
    %v1313 = vpop.f32.mrf.mxu0
    %v1314 = vadd.f32 0.0, %v1313
    %v1315 = vpop.f32.mrf.mxu0
    %v1316 = vadd.f32 0.0, %v1315
    %1317 = vdwg.mxu0
    %v1326 = vunpack.c.l.b16 %v943
    %v1327 = vunpack.c.l.b16 %v944
    %v1328 = vunpack.c.l.b16 %v945
    %v1329 = vunpack.c.l.b16 %v946
    %v1330 = vunpack.c.l.b16 %v947
    %v1331 = vunpack.c.l.b16 %v948
    %v1332 = vunpack.c.l.b16 %v949
    %v1333 = vunpack.c.l.b16 %v950
    %v1334 = vpack.c.b16 %v1327, %v1326
    %v1335 = vpack.c.b16 %v1329, %v1328
    %v1336 = vpack.c.b16 %v1331, %v1330
    %v1337 = vpack.c.b16 %v1333, %v1332
    %v1343 = vsel %vm880, %v951, 0
    %1345 = vmatpush.bf16.msra.mxu0 0
    %1346 = vmatpush.bf16.msra.mxu0 0
    %1347 = vmatpush.bf16.msra.mxu0 0
    %1348 = vmatpush.bf16.msra.mxu0 0
    %1349 = vmatpush.bf16.msra.mxu0 %v1337
    %1350 = vmatpush.bf16.msra.mxu0 %v1336
    %1351 = vmatpush.bf16.msra.mxu0 %v1335
    %1352 = vmatpush.bf16.msra.mxu0 %v1334
    %1353 = vmatmul.bf16.gmra.mxu0 %v1343
    %v1354 = vpop.f32.mrf.mxu0
    %v1355 = vadd.f32 %v1314, %v1354
    %v1356 = vpop.f32.mrf.mxu0
    %v1357 = vadd.f32 %v1316, %v1356
    %1358 = vdwg.mxu0
    %v1359 = vadd.f32 %v571, %v1355
    %v1360 = vadd.f32 %v572, %v1357
    %v1361 = vld [vmem:[#allocation13] sm:$0x1]
    %v1363 = vperm.slane %v1361, 0
    %v1365 = vadd.f32 %v1359, %v1363
    %v1366 = vadd.f32 %v1360, %v1363
    %1367 = vadd.xlane.f32.xlu0 %v1365
    %v1368 = vpop.xlane.xlu0 %1367
    %1369 = vadd.xlane.f32.xlu0 %v1366
    %v1370 = vpop.xlane.xlu0 %1369
    %v1371 = vmul.f32 %v1368, %v520
    %v1372 = vmul.f32 %v1370, %v520
    %v1373 = vmul.f32 %v1365, %v1365
    %v1374 = vmul.f32 %v1366, %v1366
    %1375 = vadd.xlane.f32.xlu0 %v1373
    %v1376 = vpop.xlane.xlu0 %1375
    %1377 = vadd.xlane.f32.xlu0 %v1374
    %v1378 = vpop.xlane.xlu0 %1377
    %v1379 = vmul.f32 %v1376, %v520
    %v1380 = vmul.f32 %v1378, %v520
    %v1381 = vmul.f32 %v1371, %v1371
    %v1382 = vmul.f32 %v1372, %v1372
    %v1383 = vsub.f32 %v1379, %v1381
    %v1384 = vsub.f32 %v1380, %v1382
    %v1385 = vsub.f32 %v1365, %v1371
    %v1386 = vsub.f32 %v1366, %v1372
    %v1387 = vadd.f32 %v1383, 1e-05
    %v1388 = vadd.f32 %v1384, 1e-05
    %v1389 = vrsqrt.pop %v1387
    %v1390 = vmul.f32 %v1389, %v1387
    %v1391 = vmul.f32 %v1390, %v1389
    %v1392 = vmul.f32 0.5, %v1391
    %v1393 = vsub.f32 1.5, %v1392
    %v1394 = vmul.f32 %v1389, %v1393
    %vm1395 = vweird.f32 %v1387
    %vm1396 = vweird.f32 %v1389
    %vm1397 = vmor %vm1395, %vm1396
    %v1398 = vsel %vm1397, %v1389, %v1394
    %v1399 = vrsqrt.pop %v1388
    %v1400 = vmul.f32 %v1399, %v1388
    %v1401 = vmul.f32 %v1400, %v1399
    %v1402 = vmul.f32 0.5, %v1401
    %v1403 = vsub.f32 1.5, %v1402
    %v1404 = vmul.f32 %v1399, %v1403
    %vm1405 = vweird.f32 %v1388
    %vm1406 = vweird.f32 %v1399
    %vm1407 = vmor %vm1405, %vm1406
    %v1408 = vsel %vm1407, %v1399, %v1404
    %v1409 = vmul.f32 %v1385, %v1398
    %v1410 = vmul.f32 %v1386, %v1408
    %v1411 = vld [vmem:[#allocation15] sm:$0x1]
    %v1413 = vperm.slane %v1411, 0
    %v1415 = vmul.f32 %v1409, %v1413
    %v1416 = vmul.f32 %v1410, %v1413
    %v1417 = vld [vmem:[#allocation16] sm:$0x1]
    %v1419 = vperm.slane %v1417, 0
    %v1421 = vadd.f32 %v1415, %v1419
    %v1422 = vadd.f32 %v1416, %v1419
    %v1423 = vpack.c.bf16 %v1422, %v1421
    %v1424 = vld [vmem:[%s37] sm:$0xff]
    %v1425 = vld [vmem:[%s37 + $0x8] sm:$0xff]
    %v1426 = vld [vmem:[%s37 + $0x10] sm:$0xff]
    %v1427 = vld [vmem:[%s37 + $0x18] sm:$0xff]
    %v1428 = vld [vmem:[%s37 + $0x20] sm:$0xff]
    %v1429 = vld [vmem:[%s37 + $0x28] sm:$0xff]
    %v1430 = vld [vmem:[%s37 + $0x30] sm:$0xff]
    %v1431 = vld [vmem:[%s37 + $0x38] sm:$0xff]
    %v1432 = vld [vmem:[%s37 + $0x40] sm:$0xff]
    %v1433 = vld [vmem:[%s37 + $0x48] sm:$0xff]
    %v1434 = vld [vmem:[%s37 + $0x50] sm:$0xff]
    %v1435 = vld [vmem:[%s37 + $0x58] sm:$0xff]
    %v1436 = vld [vmem:[%s37 + $0x60] sm:$0xff]
    %v1437 = vld [vmem:[%s37 + $0x68] sm:$0xff]
    %v1438 = vld [vmem:[%s37 + $0x70] sm:$0xff]
    %v1439 = vld [vmem:[%s37 + $0x78] sm:$0xff]
    %v1440 = vld [vmem:[%s37 + $0x80] sm:$0xff]
    %v1441 = vld [vmem:[%s37 + $0x88] sm:$0xff]
    %v1442 = vld [vmem:[%s37 + $0x90] sm:$0xff]
    %v1443 = vld [vmem:[%s37 + $0x98] sm:$0xff]
    %v1444 = vld [vmem:[%s37 + $0xa0] sm:$0xff]
    %v1445 = vld [vmem:[%s37 + $0xa8] sm:$0xff]
    %v1446 = vld [vmem:[%s37 + $0xb0] sm:$0xff]
    %v1447 = vld [vmem:[%s37 + $0xb8] sm:$0xff]
    %v1448 = vld [vmem:[%s37 + $0xc0] sm:$0xff]
    %v1449 = vld [vmem:[%s37 + $0xc8] sm:$0xff]
    %v1450 = vld [vmem:[%s37 + $0xd0] sm:$0xff]
    %v1451 = vld [vmem:[%s37 + $0xd8] sm:$0xff]
    %v1452 = vld [vmem:[%s37 + $0xe0] sm:$0xff]
    %v1453 = vld [vmem:[%s37 + $0xe8] sm:$0xff]
    %v1454 = vld [vmem:[%s37 + $0xf0] sm:$0xff]
    %v1455 = vld [vmem:[%s37 + $0xf8] sm:$0xff]
    %v1456 = vld [vmem:[%s39] sm:$0xf]
    %v1458 = vperm.slane %v1456, 0
    %v1459 = vperm.slane %v1456, 1
    %v1460 = vperm.slane %v1456, 2
    %v1461 = vperm.slane %v1456, 3
    %v1498 = vunpack.c.l.b16 %v1424
    %v1499 = vunpack.c.h.b16 %v1424
    %v1500 = vunpack.c.l.b16 %v1425
    %v1501 = vunpack.c.h.b16 %v1425
    %v1502 = vunpack.c.l.b16 %v1426
    %v1503 = vunpack.c.h.b16 %v1426
    %v1504 = vunpack.c.l.b16 %v1427
    %v1505 = vunpack.c.h.b16 %v1427
    %v1506 = vunpack.c.l.b16 %v1428
    %v1507 = vunpack.c.h.b16 %v1428
    %v1508 = vunpack.c.l.b16 %v1429
    %v1509 = vunpack.c.h.b16 %v1429
    %v1510 = vunpack.c.l.b16 %v1430
    %v1511 = vunpack.c.h.b16 %v1430
    %v1512 = vunpack.c.l.b16 %v1431
    %v1513 = vunpack.c.h.b16 %v1431
    %v1514 = vunpack.c.l.b16 %v1432
    %v1515 = vunpack.c.h.b16 %v1432
    %v1516 = vunpack.c.l.b16 %v1433
    %v1517 = vunpack.c.h.b16 %v1433
    %v1518 = vunpack.c.l.b16 %v1434
    %v1519 = vunpack.c.h.b16 %v1434
    %v1520 = vunpack.c.l.b16 %v1435
    %v1521 = vunpack.c.h.b16 %v1435
    %v1522 = vunpack.c.l.b16 %v1436
    %v1523 = vunpack.c.h.b16 %v1436
    %v1524 = vunpack.c.l.b16 %v1437
    %v1525 = vunpack.c.h.b16 %v1437
    %v1526 = vunpack.c.l.b16 %v1438
    %v1527 = vunpack.c.h.b16 %v1438
    %v1528 = vunpack.c.l.b16 %v1439
    %v1529 = vunpack.c.h.b16 %v1439
    %v1530 = vunpack.c.l.b16 %v1440
    %v1531 = vunpack.c.h.b16 %v1440
    %v1532 = vunpack.c.l.b16 %v1441
    %v1533 = vunpack.c.h.b16 %v1441
    %v1534 = vunpack.c.l.b16 %v1442
    %v1535 = vunpack.c.h.b16 %v1442
    %v1536 = vunpack.c.l.b16 %v1443
    %v1537 = vunpack.c.h.b16 %v1443
    %v1538 = vunpack.c.l.b16 %v1444
    %v1539 = vunpack.c.h.b16 %v1444
    %v1540 = vunpack.c.l.b16 %v1445
    %v1541 = vunpack.c.h.b16 %v1445
    %v1542 = vunpack.c.l.b16 %v1446
    %v1543 = vunpack.c.h.b16 %v1446
    %v1544 = vunpack.c.l.b16 %v1447
    %v1545 = vunpack.c.h.b16 %v1447
    %v1546 = vunpack.c.l.b16 %v1448
    %v1547 = vunpack.c.h.b16 %v1448
    %v1548 = vunpack.c.l.b16 %v1449
    %v1549 = vunpack.c.h.b16 %v1449
    %v1550 = vunpack.c.l.b16 %v1450
    %v1551 = vunpack.c.h.b16 %v1450
    %v1552 = vunpack.c.l.b16 %v1451
    %v1553 = vunpack.c.h.b16 %v1451
    %v1554 = vunpack.c.l.b16 %v1452
    %v1555 = vunpack.c.h.b16 %v1452
    %v1556 = vunpack.c.l.b16 %v1453
    %v1557 = vunpack.c.h.b16 %v1453
    %v1558 = vunpack.c.l.b16 %v1454
    %v1559 = vunpack.c.h.b16 %v1454
    %v1560 = vunpack.c.l.b16 %v1455
    %v1561 = vunpack.c.h.b16 %v1455
    %v1562 = vpack.c.b16 %v1502, %v1498
    %v1563 = vpack.c.b16 %v1503, %v1499
    %v1564 = vpack.c.b16 %v1504, %v1500
    %v1565 = vpack.c.b16 %v1505, %v1501
    %v1566 = vpack.c.b16 %v1510, %v1506
    %v1567 = vpack.c.b16 %v1511, %v1507
    %v1568 = vpack.c.b16 %v1512, %v1508
    %v1569 = vpack.c.b16 %v1513, %v1509
    %v1570 = vpack.c.b16 %v1518, %v1514
    %v1571 = vpack.c.b16 %v1519, %v1515
    %v1572 = vpack.c.b16 %v1520, %v1516
    %v1573 = vpack.c.b16 %v1521, %v1517
    %v1574 = vpack.c.b16 %v1526, %v1522
    %v1575 = vpack.c.b16 %v1527, %v1523
    %v1576 = vpack.c.b16 %v1528, %v1524
    %v1577 = vpack.c.b16 %v1529, %v1525
    %v1578 = vpack.c.b16 %v1534, %v1530
    %v1579 = vpack.c.b16 %v1535, %v1531
    %v1580 = vpack.c.b16 %v1536, %v1532
    %v1581 = vpack.c.b16 %v1537, %v1533
    %v1582 = vpack.c.b16 %v1542, %v1538
    %v1583 = vpack.c.b16 %v1543, %v1539
    %v1584 = vpack.c.b16 %v1544, %v1540
    %v1585 = vpack.c.b16 %v1545, %v1541
    %v1586 = vpack.c.b16 %v1550, %v1546
    %v1587 = vpack.c.b16 %v1551, %v1547
    %v1588 = vpack.c.b16 %v1552, %v1548
    %v1589 = vpack.c.b16 %v1553, %v1549
    %v1590 = vpack.c.b16 %v1558, %v1554
    %v1591 = vpack.c.b16 %v1559, %v1555
    %v1592 = vpack.c.b16 %v1560, %v1556
    %v1593 = vpack.c.b16 %v1561, %v1557
    %1626 = vmatpush.bf16.msra.mxu0 %v1590
    %1627 = vmatpush.bf16.msra.mxu0 %v1586
    %1628 = vmatpush.bf16.msra.mxu0 %v1582
    %1629 = vmatpush.bf16.msra.mxu0 %v1578
    %1630 = vmatpush.bf16.msra.mxu0 %v1574
    %1631 = vmatpush.bf16.msra.mxu0 %v1570
    %1632 = vmatpush.bf16.msra.mxu0 %v1566
    %1633 = vmatpush.bf16.msra.mxu0 %v1562
    %1634 = vmatmul.bf16.gmra.mxu0 %v1423
    %v1635 = vpop.f32.mrf.mxu0
    %v1636 = vadd.f32 %v1458, %v1635
    %v1637 = vpop.f32.mrf.mxu0
    %v1638 = vadd.f32 %v1458, %v1637
    %1639 = vdwg.mxu0
    %1640 = vmatpush.bf16.msra.mxu0 %v1591
    %1641 = vmatpush.bf16.msra.mxu0 %v1587
    %1642 = vmatpush.bf16.msra.mxu0 %v1583
    %1643 = vmatpush.bf16.msra.mxu0 %v1579
    %1644 = vmatpush.bf16.msra.mxu0 %v1575
    %1645 = vmatpush.bf16.msra.mxu0 %v1571
    %1646 = vmatpush.bf16.msra.mxu0 %v1567
    %1647 = vmatpush.bf16.msra.mxu0 %v1563
    %1648 = vmatmul.bf16.gmra.mxu0 %v1423
    %v1649 = vpop.f32.mrf.mxu0
    %v1650 = vadd.f32 %v1459, %v1649
    %v1651 = vpop.f32.mrf.mxu0
    %v1652 = vadd.f32 %v1459, %v1651
    %1653 = vdwg.mxu0
    %1654 = vmatpush.bf16.msra.mxu0 %v1592
    %1655 = vmatpush.bf16.msra.mxu0 %v1588
    %1656 = vmatpush.bf16.msra.mxu0 %v1584
    %1657 = vmatpush.bf16.msra.mxu0 %v1580
    %1658 = vmatpush.bf16.msra.mxu0 %v1576
    %1659 = vmatpush.bf16.msra.mxu0 %v1572
    %1660 = vmatpush.bf16.msra.mxu0 %v1568
    %1661 = vmatpush.bf16.msra.mxu0 %v1564
    %1662 = vmatmul.bf16.gmra.mxu0 %v1423
    %v1663 = vpop.f32.mrf.mxu0
    %v1664 = vadd.f32 %v1460, %v1663
    %v1665 = vpop.f32.mrf.mxu0
    %v1666 = vadd.f32 %v1460, %v1665
    %1667 = vdwg.mxu0
    %1668 = vmatpush.bf16.msra.mxu0 %v1593
    %1669 = vmatpush.bf16.msra.mxu0 %v1589
    %1670 = vmatpush.bf16.msra.mxu0 %v1585
    %1671 = vmatpush.bf16.msra.mxu0 %v1581
    %1672 = vmatpush.bf16.msra.mxu0 %v1577
    %1673 = vmatpush.bf16.msra.mxu0 %v1573
    %1674 = vmatpush.bf16.msra.mxu0 %v1569
    %1675 = vmatpush.bf16.msra.mxu0 %v1565
    %1676 = vmatmul.bf16.gmra.mxu0 %v1423
    %v1677 = vpop.f32.mrf.mxu0
    %v1678 = vadd.f32 %v1461, %v1677
    %v1679 = vpop.f32.mrf.mxu0
    %v1680 = vadd.f32 %v1461, %v1679
    %1681 = vdwg.mxu0
    %v1682 = vmul.f32 %v1636, 1.702
    %v1683 = vmul.f32 %v1650, 1.702
    %v1684 = vmul.f32 %v1664, 1.702
    %v1685 = vmul.f32 %v1678, 1.702
    %v1686 = vmul.f32 %v1638, 1.702
    %v1687 = vmul.f32 %v1652, 1.702
    %v1688 = vmul.f32 %v1666, 1.702
    %v1689 = vmul.f32 %v1680, 1.702
    %v1690 = vxor.u32 %v1682, 2147483648
    %v1691 = vxor.u32 %v1683, 2147483648
    %v1692 = vxor.u32 %v1684, 2147483648
    %v1693 = vxor.u32 %v1685, 2147483648
    %v1694 = vxor.u32 %v1686, 2147483648
    %v1695 = vxor.u32 %v1687, 2147483648
    %v1696 = vxor.u32 %v1688, 2147483648
    %v1697 = vxor.u32 %v1689, 2147483648
    %v1698 = vmul.f32 %v1690, 1.442695
    %v1699 = vpow.pop %v1698
    %v1700 = vmul.f32 %v1691, 1.442695
    %v1701 = vpow.pop %v1700
    %v1702 = vmul.f32 %v1692, 1.442695
    %v1703 = vpow.pop %v1702
    %v1704 = vmul.f32 %v1693, 1.442695
    %v1705 = vpow.pop %v1704
    %v1706 = vmul.f32 %v1694, 1.442695
    %v1707 = vpow.pop %v1706
    %v1708 = vmul.f32 %v1695, 1.442695
    %v1709 = vpow.pop %v1708
    %v1710 = vmul.f32 %v1696, 1.442695
    %v1711 = vpow.pop %v1710
    %v1712 = vmul.f32 %v1697, 1.442695
    %v1713 = vpow.pop %v1712
    %v1714 = vadd.f32 %v1699, 1.0
    %v1715 = vadd.f32 %v1701, 1.0
    %v1716 = vadd.f32 %v1703, 1.0
    %v1717 = vadd.f32 %v1705, 1.0
    %v1718 = vadd.f32 %v1707, 1.0
    %v1719 = vadd.f32 %v1709, 1.0
    %v1720 = vadd.f32 %v1711, 1.0
    %v1721 = vadd.f32 %v1713, 1.0
    %v1722 = vrcp.pop %v1714
    %v1723 = vmul.f32 %v1714, %v1722
    %v1724 = vsub.f32 1.0, %v1723
    %v1725 = vmul.f32 %v1722, %v1724
    %v1726 = vadd.f32 %v1722, %v1725
    %vm1727 = vweird.f32 %v1714
    %vm1728 = vweird.f32 %v1722
    %vm1729 = vmor %vm1727, %vm1728
    %v1730 = vsel %vm1729, %v1722, %v1726
    %v1731 = vand.u32 2147483647, %v1714
    %vm1732 = vcmp.eq.f32.partialorder %v1731, 8.507059e+37
    %v1733 = vand.u32 %v1714, 2147483648
    %v1734 = vor.u32 1.1754944e-38, %v1733
    %v1735 = vsel %vm1732, %v1734, %v1730
    %v1736 = vmul.f32 1.0, %v1735
    %v1737 = vrcp.pop %v1715
    %v1738 = vmul.f32 %v1715, %v1737
    %v1739 = vsub.f32 1.0, %v1738
    %v1740 = vmul.f32 %v1737, %v1739
    %v1741 = vadd.f32 %v1737, %v1740
    %vm1742 = vweird.f32 %v1715
    %vm1743 = vweird.f32 %v1737
    %vm1744 = vmor %vm1742, %vm1743
    %v1745 = vsel %vm1744, %v1737, %v1741
    %v1746 = vand.u32 2147483647, %v1715
    %vm1747 = vcmp.eq.f32.partialorder %v1746, 8.507059e+37
    %v1748 = vand.u32 %v1715, 2147483648
    %v1749 = vor.u32 1.1754944e-38, %v1748
    %v1750 = vsel %vm1747, %v1749, %v1745
    %v1751 = vmul.f32 1.0, %v1750
    %v1752 = vrcp.pop %v1716
    %v1753 = vmul.f32 %v1716, %v1752
    %v1754 = vsub.f32 1.0, %v1753
    %v1755 = vmul.f32 %v1752, %v1754
    %v1756 = vadd.f32 %v1752, %v1755
    %vm1757 = vweird.f32 %v1716
    %vm1758 = vweird.f32 %v1752
    %vm1759 = vmor %vm1757, %vm1758
    %v1760 = vsel %vm1759, %v1752, %v1756
    %v1761 = vand.u32 2147483647, %v1716
    %vm1762 = vcmp.eq.f32.partialorder %v1761, 8.507059e+37
    %v1763 = vand.u32 %v1716, 2147483648
    %v1764 = vor.u32 1.1754944e-38, %v1763
    %v1765 = vsel %vm1762, %v1764, %v1760
    %v1766 = vmul.f32 1.0, %v1765
    %v1767 = vrcp.pop %v1717
    %v1768 = vmul.f32 %v1717, %v1767
    %v1769 = vsub.f32 1.0, %v1768
    %v1770 = vmul.f32 %v1767, %v1769
    %v1771 = vadd.f32 %v1767, %v1770
    %vm1772 = vweird.f32 %v1717
    %vm1773 = vweird.f32 %v1767
    %vm1774 = vmor %vm1772, %vm1773
    %v1775 = vsel %vm1774, %v1767, %v1771
    %v1776 = vand.u32 2147483647, %v1717
    %vm1777 = vcmp.eq.f32.partialorder %v1776, 8.507059e+37
    %v1778 = vand.u32 %v1717, 2147483648
    %v1779 = vor.u32 1.1754944e-38, %v1778
    %v1780 = vsel %vm1777, %v1779, %v1775
    %v1781 = vmul.f32 1.0, %v1780
    %v1782 = vrcp.pop %v1718
    %v1783 = vmul.f32 %v1718, %v1782
    %v1784 = vsub.f32 1.0, %v1783
    %v1785 = vmul.f32 %v1782, %v1784
    %v1786 = vadd.f32 %v1782, %v1785
    %vm1787 = vweird.f32 %v1718
    %vm1788 = vweird.f32 %v1782
    %vm1789 = vmor %vm1787, %vm1788
    %v1790 = vsel %vm1789, %v1782, %v1786
    %v1791 = vand.u32 2147483647, %v1718
    %vm1792 = vcmp.eq.f32.partialorder %v1791, 8.507059e+37
    %v1793 = vand.u32 %v1718, 2147483648
    %v1794 = vor.u32 1.1754944e-38, %v1793
    %v1795 = vsel %vm1792, %v1794, %v1790
    %v1796 = vmul.f32 1.0, %v1795
    %v1797 = vrcp.pop %v1719
    %v1798 = vmul.f32 %v1719, %v1797
    %v1799 = vsub.f32 1.0, %v1798
    %v1800 = vmul.f32 %v1797, %v1799
    %v1801 = vadd.f32 %v1797, %v1800
    %vm1802 = vweird.f32 %v1719
    %vm1803 = vweird.f32 %v1797
    %vm1804 = vmor %vm1802, %vm1803
    %v1805 = vsel %vm1804, %v1797, %v1801
    %v1806 = vand.u32 2147483647, %v1719
    %vm1807 = vcmp.eq.f32.partialorder %v1806, 8.507059e+37
    %v1808 = vand.u32 %v1719, 2147483648
    %v1809 = vor.u32 1.1754944e-38, %v1808
    %v1810 = vsel %vm1807, %v1809, %v1805
    %v1811 = vmul.f32 1.0, %v1810
    %v1812 = vrcp.pop %v1720
    %v1813 = vmul.f32 %v1720, %v1812
    %v1814 = vsub.f32 1.0, %v1813
    %v1815 = vmul.f32 %v1812, %v1814
    %v1816 = vadd.f32 %v1812, %v1815
    %vm1817 = vweird.f32 %v1720
    %vm1818 = vweird.f32 %v1812
    %vm1819 = vmor %vm1817, %vm1818
    %v1820 = vsel %vm1819, %v1812, %v1816
    %v1821 = vand.u32 2147483647, %v1720
    %vm1822 = vcmp.eq.f32.partialorder %v1821, 8.507059e+37
    %v1823 = vand.u32 %v1720, 2147483648
    %v1824 = vor.u32 1.1754944e-38, %v1823
    %v1825 = vsel %vm1822, %v1824, %v1820
    %v1826 = vmul.f32 1.0, %v1825
    %v1827 = vrcp.pop %v1721
    %v1828 = vmul.f32 %v1721, %v1827
    %v1829 = vsub.f32 1.0, %v1828
    %v1830 = vmul.f32 %v1827, %v1829
    %v1831 = vadd.f32 %v1827, %v1830
    %vm1832 = vweird.f32 %v1721
    %vm1833 = vweird.f32 %v1827
    %vm1834 = vmor %vm1832, %vm1833
    %v1835 = vsel %vm1834, %v1827, %v1831
    %v1836 = vand.u32 2147483647, %v1721
    %vm1837 = vcmp.eq.f32.partialorder %v1836, 8.507059e+37
    %v1838 = vand.u32 %v1721, 2147483648
    %v1839 = vor.u32 1.1754944e-38, %v1838
    %v1840 = vsel %vm1837, %v1839, %v1835
    %v1841 = vmul.f32 1.0, %v1840
    %v1842 = vmul.f32 %v1636, %v1736
    %v1843 = vmul.f32 %v1650, %v1751
    %v1844 = vmul.f32 %v1664, %v1766
    %v1845 = vmul.f32 %v1678, %v1781
    %v1846 = vmul.f32 %v1638, %v1796
    %v1847 = vmul.f32 %v1652, %v1811
    %v1848 = vmul.f32 %v1666, %v1826
    %v1849 = vmul.f32 %v1680, %v1841
    %v1850 = vpack.c.bf16 %v1846, %v1842
    %v1851 = vpack.c.bf16 %v1847, %v1843
    %v1852 = vpack.c.bf16 %v1848, %v1844
    %v1853 = vpack.c.bf16 %v1849, %v1845
    %v1854 = vld [vmem:[%s41] sm:$0xf]
    %v1855 = vld [vmem:[%s41 + $0x4] sm:$0xf]
    %v1856 = vld [vmem:[%s41 + $0x8] sm:$0xf]
    %v1857 = vld [vmem:[%s41 + $0xc] sm:$0xf]
    %v1858 = vld [vmem:[%s41 + $0x10] sm:$0xf]
    %v1859 = vld [vmem:[%s41 + $0x14] sm:$0xf]
    %v1860 = vld [vmem:[%s41 + $0x18] sm:$0xf]
    %v1861 = vld [vmem:[%s41 + $0x1c] sm:$0xf]
    %v1862 = vld [vmem:[%s41 + $0x20] sm:$0xf]
    %v1863 = vld [vmem:[%s41 + $0x24] sm:$0xf]
    %v1864 = vld [vmem:[%s41 + $0x28] sm:$0xf]
    %v1865 = vld [vmem:[%s41 + $0x2c] sm:$0xf]
    %v1866 = vld [vmem:[%s41 + $0x30] sm:$0xf]
    %v1867 = vld [vmem:[%s41 + $0x34] sm:$0xf]
    %v1868 = vld [vmem:[%s41 + $0x38] sm:$0xf]
    %v1869 = vld [vmem:[%s41 + $0x3c] sm:$0xf]
    %v1870 = vld [vmem:[%s41 + $0x40] sm:$0xf]
    %v1871 = vld [vmem:[%s41 + $0x44] sm:$0xf]
    %v1872 = vld [vmem:[%s41 + $0x48] sm:$0xf]
    %v1873 = vld [vmem:[%s41 + $0x4c] sm:$0xf]
    %v1874 = vld [vmem:[%s41 + $0x50] sm:$0xf]
    %v1875 = vld [vmem:[%s41 + $0x54] sm:$0xf]
    %v1876 = vld [vmem:[%s41 + $0x58] sm:$0xf]
    %v1877 = vld [vmem:[%s41 + $0x5c] sm:$0xf]
    %v1878 = vld [vmem:[%s41 + $0x60] sm:$0xf]
    %v1879 = vld [vmem:[%s41 + $0x64] sm:$0xf]
    %v1880 = vld [vmem:[%s41 + $0x68] sm:$0xf]
    %v1881 = vld [vmem:[%s41 + $0x6c] sm:$0xf]
    %v1882 = vld [vmem:[%s41 + $0x70] sm:$0xf]
    %v1883 = vld [vmem:[%s41 + $0x74] sm:$0xf]
    %v1884 = vld [vmem:[%s41 + $0x78] sm:$0xf]
    %v1885 = vld [vmem:[%s41 + $0x7c] sm:$0xf]
    %v1886 = vld [vmem:[%s41 + $0x80] sm:$0xf]
    %v1887 = vld [vmem:[%s41 + $0x84] sm:$0xf]
    %v1888 = vld [vmem:[%s41 + $0x88] sm:$0xf]
    %v1889 = vld [vmem:[%s41 + $0x8c] sm:$0xf]
    %v1890 = vld [vmem:[%s41 + $0x90] sm:$0xf]
    %v1891 = vld [vmem:[%s41 + $0x94] sm:$0xf]
    %v1892 = vld [vmem:[%s41 + $0x98] sm:$0xf]
    %v1893 = vld [vmem:[%s41 + $0x9c] sm:$0xf]
    %v1894 = vld [vmem:[%s41 + $0xa0] sm:$0xf]
    %v1895 = vld [vmem:[%s41 + $0xa4] sm:$0xf]
    %v1896 = vld [vmem:[%s41 + $0xa8] sm:$0xf]
    %v1897 = vld [vmem:[%s41 + $0xac] sm:$0xf]
    %v1898 = vld [vmem:[%s41 + $0xb0] sm:$0xf]
    %v1899 = vld [vmem:[%s41 + $0xb4] sm:$0xf]
    %v1900 = vld [vmem:[%s41 + $0xb8] sm:$0xf]
    %v1901 = vld [vmem:[%s41 + $0xbc] sm:$0xf]
    %v1902 = vld [vmem:[%s41 + $0xc0] sm:$0xf]
    %v1903 = vld [vmem:[%s41 + $0xc4] sm:$0xf]
    %v1904 = vld [vmem:[%s41 + $0xc8] sm:$0xf]
    %v1905 = vld [vmem:[%s41 + $0xcc] sm:$0xf]
    %v1906 = vld [vmem:[%s41 + $0xd0] sm:$0xf]
    %v1907 = vld [vmem:[%s41 + $0xd4] sm:$0xf]
    %v1908 = vld [vmem:[%s41 + $0xd8] sm:$0xf]
    %v1909 = vld [vmem:[%s41 + $0xdc] sm:$0xf]
    %v1910 = vld [vmem:[%s41 + $0xe0] sm:$0xf]
    %v1911 = vld [vmem:[%s41 + $0xe4] sm:$0xf]
    %v1912 = vld [vmem:[%s41 + $0xe8] sm:$0xf]
    %v1913 = vld [vmem:[%s41 + $0xec] sm:$0xf]
    %v1914 = vld [vmem:[%s41 + $0xf0] sm:$0xf]
    %v1915 = vld [vmem:[%s41 + $0xf4] sm:$0xf]
    %v1916 = vld [vmem:[%s41 + $0xf8] sm:$0xf]
    %v1917 = vld [vmem:[%s41 + $0xfc] sm:$0xf]
    %v1982 = vunpack.c.l.b16 %v1854
    %v1983 = vunpack.c.l.b16 %v1855
    %v1984 = vunpack.c.l.b16 %v1856
    %v1985 = vunpack.c.l.b16 %v1857
    %v1986 = vunpack.c.l.b16 %v1858
    %v1987 = vunpack.c.l.b16 %v1859
    %v1988 = vunpack.c.l.b16 %v1860
    %v1989 = vunpack.c.l.b16 %v1861
    %v1990 = vunpack.c.l.b16 %v1862
    %v1991 = vunpack.c.l.b16 %v1863
    %v1992 = vunpack.c.l.b16 %v1864
    %v1993 = vunpack.c.l.b16 %v1865
    %v1994 = vunpack.c.l.b16 %v1866
    %v1995 = vunpack.c.l.b16 %v1867
    %v1996 = vunpack.c.l.b16 %v1868
    %v1997 = vunpack.c.l.b16 %v1869
    %v1998 = vunpack.c.l.b16 %v1870
    %v1999 = vunpack.c.l.b16 %v1871
    %v2000 = vunpack.c.l.b16 %v1872
    %v2001 = vunpack.c.l.b16 %v1873
    %v2002 = vunpack.c.l.b16 %v1874
    %v2003 = vunpack.c.l.b16 %v1875
    %v2004 = vunpack.c.l.b16 %v1876
    %v2005 = vunpack.c.l.b16 %v1877
    %v2006 = vunpack.c.l.b16 %v1878
    %v2007 = vunpack.c.l.b16 %v1879
    %v2008 = vunpack.c.l.b16 %v1880
    %v2009 = vunpack.c.l.b16 %v1881
    %v2010 = vunpack.c.l.b16 %v1882
    %v2011 = vunpack.c.l.b16 %v1883
    %v2012 = vunpack.c.l.b16 %v1884
    %v2013 = vunpack.c.l.b16 %v1885
    %v2014 = vunpack.c.l.b16 %v1886
    %v2015 = vunpack.c.l.b16 %v1887
    %v2016 = vunpack.c.l.b16 %v1888
    %v2017 = vunpack.c.l.b16 %v1889
    %v2018 = vunpack.c.l.b16 %v1890
    %v2019 = vunpack.c.l.b16 %v1891
    %v2020 = vunpack.c.l.b16 %v1892
    %v2021 = vunpack.c.l.b16 %v1893
    %v2022 = vunpack.c.l.b16 %v1894
    %v2023 = vunpack.c.l.b16 %v1895
    %v2024 = vunpack.c.l.b16 %v1896
    %v2025 = vunpack.c.l.b16 %v1897
    %v2026 = vunpack.c.l.b16 %v1898
    %v2027 = vunpack.c.l.b16 %v1899
    %v2028 = vunpack.c.l.b16 %v1900
    %v2029 = vunpack.c.l.b16 %v1901
    %v2030 = vunpack.c.l.b16 %v1902
    %v2031 = vunpack.c.l.b16 %v1903
    %v2032 = vunpack.c.l.b16 %v1904
    %v2033 = vunpack.c.l.b16 %v1905
    %v2034 = vunpack.c.l.b16 %v1906
    %v2035 = vunpack.c.l.b16 %v1907
    %v2036 = vunpack.c.l.b16 %v1908
    %v2037 = vunpack.c.l.b16 %v1909
    %v2038 = vunpack.c.l.b16 %v1910
    %v2039 = vunpack.c.l.b16 %v1911
    %v2040 = vunpack.c.l.b16 %v1912
    %v2041 = vunpack.c.l.b16 %v1913
    %v2042 = vunpack.c.l.b16 %v1914
    %v2043 = vunpack.c.l.b16 %v1915
    %v2044 = vunpack.c.l.b16 %v1916
    %v2045 = vunpack.c.l.b16 %v1917
    %v2046 = vpack.c.b16 %v1983, %v1982
    %v2047 = vpack.c.b16 %v1985, %v1984
    %v2048 = vpack.c.b16 %v1987, %v1986
    %v2049 = vpack.c.b16 %v1989, %v1988
    %v2050 = vpack.c.b16 %v1991, %v1990
    %v2051 = vpack.c.b16 %v1993, %v1992
    %v2052 = vpack.c.b16 %v1995, %v1994
    %v2053 = vpack.c.b16 %v1997, %v1996
    %v2054 = vpack.c.b16 %v1999, %v1998
    %v2055 = vpack.c.b16 %v2001, %v2000
    %v2056 = vpack.c.b16 %v2003, %v2002
    %v2057 = vpack.c.b16 %v2005, %v2004
    %v2058 = vpack.c.b16 %v2007, %v2006
    %v2059 = vpack.c.b16 %v2009, %v2008
    %v2060 = vpack.c.b16 %v2011, %v2010
    %v2061 = vpack.c.b16 %v2013, %v2012
    %v2062 = vpack.c.b16 %v2015, %v2014
    %v2063 = vpack.c.b16 %v2017, %v2016
    %v2064 = vpack.c.b16 %v2019, %v2018
    %v2065 = vpack.c.b16 %v2021, %v2020
    %v2066 = vpack.c.b16 %v2023, %v2022
    %v2067 = vpack.c.b16 %v2025, %v2024
    %v2068 = vpack.c.b16 %v2027, %v2026
    %v2069 = vpack.c.b16 %v2029, %v2028
    %v2070 = vpack.c.b16 %v2031, %v2030
    %v2071 = vpack.c.b16 %v2033, %v2032
    %v2072 = vpack.c.b16 %v2035, %v2034
    %v2073 = vpack.c.b16 %v2037, %v2036
    %v2074 = vpack.c.b16 %v2039, %v2038
    %v2075 = vpack.c.b16 %v2041, %v2040
    %v2076 = vpack.c.b16 %v2043, %v2042
    %v2077 = vpack.c.b16 %v2045, %v2044
    %2110 = vmatpush.bf16.msra.mxu0 %v2053
    %2111 = vmatpush.bf16.msra.mxu0 %v2052
    %2112 = vmatpush.bf16.msra.mxu0 %v2051
    %2113 = vmatpush.bf16.msra.mxu0 %v2050
    %2114 = vmatpush.bf16.msra.mxu0 %v2049
    %2115 = vmatpush.bf16.msra.mxu0 %v2048
    %2116 = vmatpush.bf16.msra.mxu0 %v2047
    %2117 = vmatpush.bf16.msra.mxu0 %v2046
    %2118 = vmatmul.bf16.gmra.mxu0 %v1850
    %v2119 = vpop.f32.mrf.mxu0
    %v2120 = vadd.f32 0.0, %v2119
    %v2121 = vpop.f32.mrf.mxu0
    %v2122 = vadd.f32 0.0, %v2121
    %2123 = vdwg.mxu0
    %2124 = vmatpush.bf16.msra.mxu0 %v2061
    %2125 = vmatpush.bf16.msra.mxu0 %v2060
    %2126 = vmatpush.bf16.msra.mxu0 %v2059
    %2127 = vmatpush.bf16.msra.mxu0 %v2058
    %2128 = vmatpush.bf16.msra.mxu0 %v2057
    %2129 = vmatpush.bf16.msra.mxu0 %v2056
    %2130 = vmatpush.bf16.msra.mxu0 %v2055
    %2131 = vmatpush.bf16.msra.mxu0 %v2054
    %2132 = vmatmul.bf16.gmra.mxu0 %v1851
    %v2133 = vpop.f32.mrf.mxu0
    %v2134 = vadd.f32 %v2120, %v2133
    %v2135 = vpop.f32.mrf.mxu0
    %v2136 = vadd.f32 %v2122, %v2135
    %2137 = vdwg.mxu0
    %2138 = vmatpush.bf16.msra.mxu0 %v2069
    %2139 = vmatpush.bf16.msra.mxu0 %v2068
    %2140 = vmatpush.bf16.msra.mxu0 %v2067
    %2141 = vmatpush.bf16.msra.mxu0 %v2066
    %2142 = vmatpush.bf16.msra.mxu0 %v2065
    %2143 = vmatpush.bf16.msra.mxu0 %v2064
    %2144 = vmatpush.bf16.msra.mxu0 %v2063
    %2145 = vmatpush.bf16.msra.mxu0 %v2062
    %2146 = vmatmul.bf16.gmra.mxu0 %v1852
    %v2147 = vpop.f32.mrf.mxu0
    %v2148 = vadd.f32 %v2134, %v2147
    %v2149 = vpop.f32.mrf.mxu0
    %v2150 = vadd.f32 %v2136, %v2149
    %2151 = vdwg.mxu0
    %2152 = vmatpush.bf16.msra.mxu0 %v2077
    %2153 = vmatpush.bf16.msra.mxu0 %v2076
    %2154 = vmatpush.bf16.msra.mxu0 %v2075
    %2155 = vmatpush.bf16.msra.mxu0 %v2074
    %2156 = vmatpush.bf16.msra.mxu0 %v2073
    %2157 = vmatpush.bf16.msra.mxu0 %v2072
    %2158 = vmatpush.bf16.msra.mxu0 %v2071
    %2159 = vmatpush.bf16.msra.mxu0 %v2070
    %2160 = vmatmul.bf16.gmra.mxu0 %v1853
    %v2161 = vpop.f32.mrf.mxu0
    %v2162 = vadd.f32 %v2148, %v2161
    %v2163 = vpop.f32.mrf.mxu0
    %v2164 = vadd.f32 %v2150, %v2163
    %2165 = vdwg.mxu0
    %v2166 = vadd.f32 %v1365, %v2162
    %v2167 = vadd.f32 %v1366, %v2164
    %v2168 = vld [vmem:[%s43] sm:$0x1]
    %v2170 = vperm.slane %v2168, 0
    %v2172 = vadd.f32 %v2166, %v2170
    %v2173 = vadd.f32 %v2167, %v2170
    %2174 = vadd.xlane.f32.xlu0 %v2172
    %v2175 = vpop.xlane.xlu0 %2174
    %2176 = vadd.xlane.f32.xlu0 %v2173
    %v2177 = vpop.xlane.xlu0 %2176
    %v2178 = vmul.f32 %v2175, %v520
    %v2179 = vmul.f32 %v2177, %v520
    %v2180 = vmul.f32 %v2172, %v2172
    %v2181 = vmul.f32 %v2173, %v2173
    %2182 = vadd.xlane.f32.xlu0 %v2180
    %v2183 = vpop.xlane.xlu0 %2182
    %2184 = vadd.xlane.f32.xlu0 %v2181
    %v2185 = vpop.xlane.xlu0 %2184
    %v2186 = vmul.f32 %v2183, %v520
    %v2187 = vmul.f32 %v2185, %v520
    %v2188 = vmul.f32 %v2178, %v2178
    %v2189 = vmul.f32 %v2179, %v2179
    %v2190 = vsub.f32 %v2186, %v2188
    %v2191 = vsub.f32 %v2187, %v2189
    %v2192 = vsub.f32 %v2172, %v2178
    %v2193 = vsub.f32 %v2173, %v2179
    %v2194 = vadd.f32 %v2190, 1e-05
    %v2195 = vadd.f32 %v2191, 1e-05
    %v2196 = vrsqrt.pop %v2194
    %v2197 = vmul.f32 %v2196, %v2194
    %v2198 = vmul.f32 %v2197, %v2196
    %v2199 = vmul.f32 0.5, %v2198
    %v2200 = vsub.f32 1.5, %v2199
    %v2201 = vmul.f32 %v2196, %v2200
    %vm2202 = vweird.f32 %v2194
    %vm2203 = vweird.f32 %v2196
    %vm2204 = vmor %vm2202, %vm2203
    %v2205 = vsel %vm2204, %v2196, %v2201
    %v2206 = vrsqrt.pop %v2195
    %v2207 = vmul.f32 %v2206, %v2195
    %v2208 = vmul.f32 %v2207, %v2206
    %v2209 = vmul.f32 0.5, %v2208
    %v2210 = vsub.f32 1.5, %v2209
    %v2211 = vmul.f32 %v2206, %v2210
    %vm2212 = vweird.f32 %v2195
    %vm2213 = vweird.f32 %v2206
    %vm2214 = vmor %vm2212, %vm2213
    %v2215 = vsel %vm2214, %v2206, %v2211
    %v2216 = vmul.f32 %v2192, %v2205
    %v2217 = vmul.f32 %v2193, %v2215
    %v2218 = vld [vmem:[%s45] sm:$0x1]
    %v2220 = vperm.slane %v2218, 0
    %v2222 = vmul.f32 %v2216, %v2220
    %v2223 = vmul.f32 %v2217, %v2220
    %v2224 = vld [vmem:[%s47] sm:$0x1]
    %v2226 = vperm.slane %v2224, 0
    %v2228 = vadd.f32 %v2222, %v2226
    %v2229 = vadd.f32 %v2223, %v2226
    %v2230 = vpack.c.bf16 %v2229, %v2228
    %v2231 = vld [vmem:[%s49] sm:$0xf]
    %v2232 = vld [vmem:[%s49 + $0x4] sm:$0xf]
    %v2233 = vld [vmem:[%s49 + $0x8] sm:$0xf]
    %v2234 = vld [vmem:[%s49 + $0xc] sm:$0xf]
    %v2235 = vld [vmem:[%s49 + $0x10] sm:$0xf]
    %v2236 = vld [vmem:[%s49 + $0x14] sm:$0xf]
    %v2237 = vld [vmem:[%s49 + $0x18] sm:$0xf]
    %v2238 = vld [vmem:[%s49 + $0x1c] sm:$0xf]
    %v2239 = vld [vmem:[%s49 + $0x20] sm:$0xf]
    %v2240 = vld [vmem:[%s49 + $0x24] sm:$0xf]
    %v2241 = vld [vmem:[%s49 + $0x28] sm:$0xf]
    %v2242 = vld [vmem:[%s49 + $0x2c] sm:$0xf]
    %v2243 = vld [vmem:[%s49 + $0x30] sm:$0xf]
    %v2244 = vld [vmem:[%s49 + $0x34] sm:$0xf]
    %v2245 = vld [vmem:[%s49 + $0x38] sm:$0xf]
    %v2246 = vld [vmem:[%s49 + $0x3c] sm:$0xf]
    %v2247 = vld [vmem:[%s51] sm:$0x1]
    %v2249 = vperm.slane %v2247, 0
    %v2267 = vunpack.c.l.b16 %v2231
    %v2268 = vunpack.c.l.b16 %v2232
    %v2269 = vunpack.c.l.b16 %v2233
    %v2270 = vunpack.c.l.b16 %v2234
    %v2271 = vunpack.c.l.b16 %v2235
    %v2272 = vunpack.c.l.b16 %v2236
    %v2273 = vunpack.c.l.b16 %v2237
    %v2274 = vunpack.c.l.b16 %v2238
    %v2275 = vunpack.c.l.b16 %v2239
    %v2276 = vunpack.c.l.b16 %v2240
    %v2277 = vunpack.c.l.b16 %v2241
    %v2278 = vunpack.c.l.b16 %v2242
    %v2279 = vunpack.c.l.b16 %v2243
    %v2280 = vunpack.c.l.b16 %v2244
    %v2281 = vunpack.c.l.b16 %v2245
    %v2282 = vunpack.c.l.b16 %v2246
    %v2283 = vpack.c.b16 %v2268, %v2267
    %v2284 = vpack.c.b16 %v2270, %v2269
    %v2285 = vpack.c.b16 %v2272, %v2271
    %v2286 = vpack.c.b16 %v2274, %v2273
    %v2287 = vpack.c.b16 %v2276, %v2275
    %v2288 = vpack.c.b16 %v2278, %v2277
    %v2289 = vpack.c.b16 %v2280, %v2279
    %v2290 = vpack.c.b16 %v2282, %v2281
    %2299 = vmatpush.bf16.msra.mxu0 %v2290
    %2300 = vmatpush.bf16.msra.mxu0 %v2289
    %2301 = vmatpush.bf16.msra.mxu0 %v2288
    %2302 = vmatpush.bf16.msra.mxu0 %v2287
    %2303 = vmatpush.bf16.msra.mxu0 %v2286
    %2304 = vmatpush.bf16.msra.mxu0 %v2285
    %2305 = vmatpush.bf16.msra.mxu0 %v2284
    %2306 = vmatpush.bf16.msra.mxu0 %v2283
    %2307 = vmatmul.bf16.gmra.mxu0 %v2230
    %v2308 = vpop.f32.mrf.mxu0
    %v2309 = vadd.f32 %v2249, %v2308
    %v2310 = vpop.f32.mrf.mxu0
    %v2311 = vadd.f32 %v2249, %v2310
    %2312 = vdwg.mxu0
    %v2313 = vld [vmem:[%s53] sm:$0xf]
    %v2314 = vld [vmem:[%s53 + $0x4] sm:$0xf]
    %v2315 = vld [vmem:[%s53 + $0x8] sm:$0xf]
    %v2316 = vld [vmem:[%s53 + $0xc] sm:$0xf]
    %v2317 = vld [vmem:[%s53 + $0x10] sm:$0xf]
    %v2318 = vld [vmem:[%s53 + $0x14] sm:$0xf]
    %v2319 = vld [vmem:[%s53 + $0x18] sm:$0xf]
    %v2320 = vld [vmem:[%s53 + $0x1c] sm:$0xf]
    %v2321 = vld [vmem:[%s53 + $0x20] sm:$0xf]
    %v2322 = vld [vmem:[%s53 + $0x24] sm:$0xf]
    %v2323 = vld [vmem:[%s53 + $0x28] sm:$0xf]
    %v2324 = vld [vmem:[%s53 + $0x2c] sm:$0xf]
    %v2325 = vld [vmem:[%s53 + $0x30] sm:$0xf]
    %v2326 = vld [vmem:[%s53 + $0x34] sm:$0xf]
    %v2327 = vld [vmem:[%s53 + $0x38] sm:$0xf]
    %v2328 = vld [vmem:[%s53 + $0x3c] sm:$0xf]
    %v2329 = vld [vmem:[%s55] sm:$0x1]
    %v2331 = vperm.slane %v2329, 0
    %v2349 = vunpack.c.l.b16 %v2313
    %v2350 = vunpack.c.l.b16 %v2314
    %v2351 = vunpack.c.l.b16 %v2315
    %v2352 = vunpack.c.l.b16 %v2316
    %v2353 = vunpack.c.l.b16 %v2317
    %v2354 = vunpack.c.l.b16 %v2318
    %v2355 = vunpack.c.l.b16 %v2319
    %v2356 = vunpack.c.l.b16 %v2320
    %v2357 = vunpack.c.l.b16 %v2321
    %v2358 = vunpack.c.l.b16 %v2322
    %v2359 = vunpack.c.l.b16 %v2323
    %v2360 = vunpack.c.l.b16 %v2324
    %v2361 = vunpack.c.l.b16 %v2325
    %v2362 = vunpack.c.l.b16 %v2326
    %v2363 = vunpack.c.l.b16 %v2327
    %v2364 = vunpack.c.l.b16 %v2328
    %v2365 = vpack.c.b16 %v2350, %v2349
    %v2366 = vpack.c.b16 %v2352, %v2351
    %v2367 = vpack.c.b16 %v2354, %v2353
    %v2368 = vpack.c.b16 %v2356, %v2355
    %v2369 = vpack.c.b16 %v2358, %v2357
    %v2370 = vpack.c.b16 %v2360, %v2359
    %v2371 = vpack.c.b16 %v2362, %v2361
    %v2372 = vpack.c.b16 %v2364, %v2363
    %2381 = vmatpush.bf16.msra.mxu0 %v2372
    %2382 = vmatpush.bf16.msra.mxu0 %v2371
    %2383 = vmatpush.bf16.msra.mxu0 %v2370
    %2384 = vmatpush.bf16.msra.mxu0 %v2369
    %2385 = vmatpush.bf16.msra.mxu0 %v2368
    %2386 = vmatpush.bf16.msra.mxu0 %v2367
    %2387 = vmatpush.bf16.msra.mxu0 %v2366
    %2388 = vmatpush.bf16.msra.mxu0 %v2365
    %2389 = vmatmul.bf16.gmra.mxu0 %v2230
    %v2390 = vpop.f32.mrf.mxu0
    %v2391 = vadd.f32 %v2331, %v2390
    %v2392 = vpop.f32.mrf.mxu0
    %v2393 = vadd.f32 %v2331, %v2392
    %2394 = vdwg.mxu0
    %v2395 = vld [vmem:[%s57] sm:$0xf]
    %v2396 = vld [vmem:[%s57 + $0x4] sm:$0xf]
    %v2397 = vld [vmem:[%s57 + $0x8] sm:$0xf]
    %v2398 = vld [vmem:[%s57 + $0xc] sm:$0xf]
    %v2399 = vld [vmem:[%s57 + $0x10] sm:$0xf]
    %v2400 = vld [vmem:[%s57 + $0x14] sm:$0xf]
    %v2401 = vld [vmem:[%s57 + $0x18] sm:$0xf]
    %v2402 = vld [vmem:[%s57 + $0x1c] sm:$0xf]
    %v2403 = vld [vmem:[%s57 + $0x20] sm:$0xf]
    %v2404 = vld [vmem:[%s57 + $0x24] sm:$0xf]
    %v2405 = vld [vmem:[%s57 + $0x28] sm:$0xf]
    %v2406 = vld [vmem:[%s57 + $0x2c] sm:$0xf]
    %v2407 = vld [vmem:[%s57 + $0x30] sm:$0xf]
    %v2408 = vld [vmem:[%s57 + $0x34] sm:$0xf]
    %v2409 = vld [vmem:[%s57 + $0x38] sm:$0xf]
    %v2410 = vld [vmem:[%s57 + $0x3c] sm:$0xf]
    %v2411 = vld [vmem:[%s59] sm:$0x1]
    %v2413 = vperm.slane %v2411, 0
    %v2431 = vunpack.c.l.b16 %v2395
    %v2432 = vunpack.c.l.b16 %v2396
    %v2433 = vunpack.c.l.b16 %v2397
    %v2434 = vunpack.c.l.b16 %v2398
    %v2435 = vunpack.c.l.b16 %v2399
    %v2436 = vunpack.c.l.b16 %v2400
    %v2437 = vunpack.c.l.b16 %v2401
    %v2438 = vunpack.c.l.b16 %v2402
    %v2439 = vunpack.c.l.b16 %v2403
    %v2440 = vunpack.c.l.b16 %v2404
    %v2441 = vunpack.c.l.b16 %v2405
    %v2442 = vunpack.c.l.b16 %v2406
    %v2443 = vunpack.c.l.b16 %v2407
    %v2444 = vunpack.c.l.b16 %v2408
    %v2445 = vunpack.c.l.b16 %v2409
    %v2446 = vunpack.c.l.b16 %v2410
    %v2447 = vpack.c.b16 %v2432, %v2431
    %v2448 = vpack.c.b16 %v2434, %v2433
    %v2449 = vpack.c.b16 %v2436, %v2435
    %v2450 = vpack.c.b16 %v2438, %v2437
    %v2451 = vpack.c.b16 %v2440, %v2439
    %v2452 = vpack.c.b16 %v2442, %v2441
    %v2453 = vpack.c.b16 %v2444, %v2443
    %v2454 = vpack.c.b16 %v2446, %v2445
    %2463 = vmatpush.bf16.msra.mxu0 %v2454
    %2464 = vmatpush.bf16.msra.mxu0 %v2453
    %2465 = vmatpush.bf16.msra.mxu0 %v2452
    %2466 = vmatpush.bf16.msra.mxu0 %v2451
    %2467 = vmatpush.bf16.msra.mxu0 %v2450
    %2468 = vmatpush.bf16.msra.mxu0 %v2449
    %2469 = vmatpush.bf16.msra.mxu0 %v2448
    %2470 = vmatpush.bf16.msra.mxu0 %v2447
    %2471 = vmatmul.bf16.gmra.mxu0 %v2230
    %v2472 = vpop.f32.mrf.mxu0
    %v2473 = vadd.f32 %v2413, %v2472
    %v2474 = vpop.f32.mrf.mxu0
    %v2475 = vadd.f32 %v2413, %v2474
    %2476 = vdwg.mxu0
    %v2477 = vpack.c.bf16 %v2311, %v2309
    %v2478 = vpack.c.bf16 %v2393, %v2391
    %v2480 = vsel %vm880, %v2477, 0
    %v2483 = vsel %vm880, %v2478, 0
    %2485 = vmatpush.bf16.xpose.msra.mxu0 0
    %2486 = vmatpush.bf16.xpose.msra.mxu0 0
    %2487 = vmatpush.bf16.xpose.msra.mxu0 0
    %2488 = vmatpush.bf16.xpose.msra.mxu0 0
    %2489 = vmatpush.bf16.xpose.msra.mxu0 0
    %2490 = vmatpush.bf16.xpose.msra.mxu0 0
    %2491 = vmatpush.bf16.xpose.msra.mxu0 0
    %2492 = vmatpush.bf16.xpose.msra.mxu0 %v2483
    %2493 = vmatmul.bf16.gmra.mxu0 %v2480
    %v2494 = vpop.f32.mrf.mxu0
    %v2495 = vadd.f32 %v573, %v2494
    %v2496 = vpop.f32.mrf.mxu0
    %v2497 = vadd.f32 %v574, %v2496
    %2498 = vdwg.mxu0
    %v2499 = vsel %vm901, %v2495, -inf
    %2500 = vmax.xlane.f32.xlu0 %v2499
    %v2501 = vpop.xlane.xlu0 %2500
    %v2502 = vsel %vm901, %v2497, -inf
    %2503 = vmax.xlane.f32.xlu0 %v2502
    %v2504 = vpop.xlane.xlu0 %2503
    %v2505 = vsub.f32 %v2495, %v2501
    %v2506 = vsub.f32 %v2497, %v2504
    %v2507 = vmul.f32 %v2505, 1.442695
    %v2508 = vpow.pop %v2507
    %v2509 = vmul.f32 %v2506, 1.442695
    %v2510 = vpow.pop %v2509
    %v2511 = vsel %vm901, %v2508, 0.0
    %2512 = vadd.xlane.f32.xlu0 %v2511
    %v2513 = vpop.xlane.xlu0 %2512
    %v2514 = vsel %vm901, %v2510, 0.0
    %2515 = vadd.xlane.f32.xlu0 %v2514
    %v2516 = vpop.xlane.xlu0 %2515
    %v2517 = vrcp.pop %v2513
    %v2518 = vrcp.pop %v2516
    %v2519 = vmul.f32 %v2508, %v2517
    %v2520 = vmul.f32 %v2510, %v2518
    %v2521 = vpack.c.bf16 %v2520, %v2519
    %v2522 = vpack.c.bf16 %v2475, %v2473
    %v2524 = vsel %vm901, %v2521, 0
    %2526 = vmatpush.bf16.msra.mxu0 0
    %2527 = vmatpush.bf16.msra.mxu0 0
    %2528 = vmatpush.bf16.msra.mxu0 0
    %2529 = vmatpush.bf16.msra.mxu0 0
    %2530 = vmatpush.bf16.msra.mxu0 0
    %2531 = vmatpush.bf16.msra.mxu0 0
    %2532 = vmatpush.bf16.msra.mxu0 0
    %2533 = vmatpush.bf16.msra.mxu0 %v2522
    %2534 = vmatmul.bf16.gmra.mxu0 %v2524
    %v2535 = vpop.f32.mrf.mxu0
    %v2536 = vadd.f32 0.0, %v2535
    %v2537 = vpop.f32.mrf.mxu0
    %v2538 = vadd.f32 0.0, %v2537
    %2539 = vdwg.mxu0
    %v2540 = vld [vmem:[%s61] sm:$0xf]
    %v2541 = vld [vmem:[%s61 + $0x4] sm:$0xf]
    %v2542 = vld [vmem:[%s61 + $0x8] sm:$0xf]
    %v2543 = vld [vmem:[%s61 + $0xc] sm:$0xf]
    %v2544 = vld [vmem:[%s61 + $0x10] sm:$0xf]
    %v2545 = vld [vmem:[%s61 + $0x14] sm:$0xf]
    %v2546 = vld [vmem:[%s61 + $0x18] sm:$0xf]
    %v2547 = vld [vmem:[%s61 + $0x1c] sm:$0xf]
    %v2548 = vpack.c.bf16 %v2538, %v2536
    %s2549 = scalar_lea.vmem %s49, 64
    %v2550 = vld [vmem:[%s2549] sm:$0xf]
    %v2551 = vld [vmem:[%s2549 + $0x4] sm:$0xf]
    %v2552 = vld [vmem:[%s2549 + $0x8] sm:$0xf]
    %v2553 = vld [vmem:[%s2549 + $0xc] sm:$0xf]
    %v2554 = vld [vmem:[%s2549 + $0x10] sm:$0xf]
    %v2555 = vld [vmem:[%s2549 + $0x14] sm:$0xf]
    %v2556 = vld [vmem:[%s2549 + $0x18] sm:$0xf]
    %v2557 = vld [vmem:[%s2549 + $0x1c] sm:$0xf]
    %v2558 = vld [vmem:[%s2549 + $0x20] sm:$0xf]
    %v2559 = vld [vmem:[%s2549 + $0x24] sm:$0xf]
    %v2560 = vld [vmem:[%s2549 + $0x28] sm:$0xf]
    %v2561 = vld [vmem:[%s2549 + $0x2c] sm:$0xf]
    %v2562 = vld [vmem:[%s2549 + $0x30] sm:$0xf]
    %v2563 = vld [vmem:[%s2549 + $0x34] sm:$0xf]
    %v2564 = vld [vmem:[%s2549 + $0x38] sm:$0xf]
    %v2565 = vld [vmem:[%s2549 + $0x3c] sm:$0xf]
    %s2566 = scalar_lea.vmem %s51, 1
    %v2567 = vld [vmem:[%s2566] sm:$0x1]
    %v2569 = vperm.slane %v2567, 0
    %v2587 = vunpack.c.l.b16 %v2550
    %v2588 = vunpack.c.l.b16 %v2551
    %v2589 = vunpack.c.l.b16 %v2552
    %v2590 = vunpack.c.l.b16 %v2553
    %v2591 = vunpack.c.l.b16 %v2554
    %v2592 = vunpack.c.l.b16 %v2555
    %v2593 = vunpack.c.l.b16 %v2556
    %v2594 = vunpack.c.l.b16 %v2557
    %v2595 = vunpack.c.l.b16 %v2558
    %v2596 = vunpack.c.l.b16 %v2559
    %v2597 = vunpack.c.l.b16 %v2560
    %v2598 = vunpack.c.l.b16 %v2561
    %v2599 = vunpack.c.l.b16 %v2562
    %v2600 = vunpack.c.l.b16 %v2563
    %v2601 = vunpack.c.l.b16 %v2564
    %v2602 = vunpack.c.l.b16 %v2565
    %v2603 = vpack.c.b16 %v2588, %v2587
    %v2604 = vpack.c.b16 %v2590, %v2589
    %v2605 = vpack.c.b16 %v2592, %v2591
    %v2606 = vpack.c.b16 %v2594, %v2593
    %v2607 = vpack.c.b16 %v2596, %v2595
    %v2608 = vpack.c.b16 %v2598, %v2597
    %v2609 = vpack.c.b16 %v2600, %v2599
    %v2610 = vpack.c.b16 %v2602, %v2601
    %2619 = vmatpush.bf16.msra.mxu0 %v2610
    %2620 = vmatpush.bf16.msra.mxu0 %v2609
    %2621 = vmatpush.bf16.msra.mxu0 %v2608
    %2622 = vmatpush.bf16.msra.mxu0 %v2607
    %2623 = vmatpush.bf16.msra.mxu0 %v2606
    %2624 = vmatpush.bf16.msra.mxu0 %v2605
    %2625 = vmatpush.bf16.msra.mxu0 %v2604
    %2626 = vmatpush.bf16.msra.mxu0 %v2603
    %2627 = vmatmul.bf16.gmra.mxu0 %v2230
    %v2628 = vpop.f32.mrf.mxu0
    %v2629 = vadd.f32 %v2569, %v2628
    %v2630 = vpop.f32.mrf.mxu0
    %v2631 = vadd.f32 %v2569, %v2630
    %2632 = vdwg.mxu0
    %s2633 = scalar_lea.vmem %s53, 64
    %v2634 = vld [vmem:[%s2633] sm:$0xf]
    %v2635 = vld [vmem:[%s2633 + $0x4] sm:$0xf]
    %v2636 = vld [vmem:[%s2633 + $0x8] sm:$0xf]
    %v2637 = vld [vmem:[%s2633 + $0xc] sm:$0xf]
    %v2638 = vld [vmem:[%s2633 + $0x10] sm:$0xf]
    %v2639 = vld [vmem:[%s2633 + $0x14] sm:$0xf]
    %v2640 = vld [vmem:[%s2633 + $0x18] sm:$0xf]
    %v2641 = vld [vmem:[%s2633 + $0x1c] sm:$0xf]
    %v2642 = vld [vmem:[%s2633 + $0x20] sm:$0xf]
    %v2643 = vld [vmem:[%s2633 + $0x24] sm:$0xf]
    %v2644 = vld [vmem:[%s2633 + $0x28] sm:$0xf]
    %v2645 = vld [vmem:[%s2633 + $0x2c] sm:$0xf]
    %v2646 = vld [vmem:[%s2633 + $0x30] sm:$0xf]
    %v2647 = vld [vmem:[%s2633 + $0x34] sm:$0xf]
    %v2648 = vld [vmem:[%s2633 + $0x38] sm:$0xf]
    %v2649 = vld [vmem:[%s2633 + $0x3c] sm:$0xf]
    %s2650 = scalar_lea.vmem %s55, 1
    %v2651 = vld [vmem:[%s2650] sm:$0x1]
    %v2653 = vperm.slane %v2651, 0
    %v2671 = vunpack.c.l.b16 %v2634
    %v2672 = vunpack.c.l.b16 %v2635
    %v2673 = vunpack.c.l.b16 %v2636
    %v2674 = vunpack.c.l.b16 %v2637
    %v2675 = vunpack.c.l.b16 %v2638
    %v2676 = vunpack.c.l.b16 %v2639
    %v2677 = vunpack.c.l.b16 %v2640
    %v2678 = vunpack.c.l.b16 %v2641
    %v2679 = vunpack.c.l.b16 %v2642
    %v2680 = vunpack.c.l.b16 %v2643
    %v2681 = vunpack.c.l.b16 %v2644
    %v2682 = vunpack.c.l.b16 %v2645
    %v2683 = vunpack.c.l.b16 %v2646
    %v2684 = vunpack.c.l.b16 %v2647
    %v2685 = vunpack.c.l.b16 %v2648
    %v2686 = vunpack.c.l.b16 %v2649
    %v2687 = vpack.c.b16 %v2672, %v2671
    %v2688 = vpack.c.b16 %v2674, %v2673
    %v2689 = vpack.c.b16 %v2676, %v2675
    %v2690 = vpack.c.b16 %v2678, %v2677
    %v2691 = vpack.c.b16 %v2680, %v2679
    %v2692 = vpack.c.b16 %v2682, %v2681
    %v2693 = vpack.c.b16 %v2684, %v2683
    %v2694 = vpack.c.b16 %v2686, %v2685
    %2703 = vmatpush.bf16.msra.mxu0 %v2694
    %2704 = vmatpush.bf16.msra.mxu0 %v2693
    %2705 = vmatpush.bf16.msra.mxu0 %v2692
    %2706 = vmatpush.bf16.msra.mxu0 %v2691
    %2707 = vmatpush.bf16.msra.mxu0 %v2690
    %2708 = vmatpush.bf16.msra.mxu0 %v2689
    %2709 = vmatpush.bf16.msra.mxu0 %v2688
    %2710 = vmatpush.bf16.msra.mxu0 %v2687
    %2711 = vmatmul.bf16.gmra.mxu0 %v2230
    %v2712 = vpop.f32.mrf.mxu0
    %v2713 = vadd.f32 %v2653, %v2712
    %v2714 = vpop.f32.mrf.mxu0
    %v2715 = vadd.f32 %v2653, %v2714
    %2716 = vdwg.mxu0
    %s2717 = scalar_lea.vmem %s57, 64
    %v2718 = vld [vmem:[%s2717] sm:$0xf]
    %v2719 = vld [vmem:[%s2717 + $0x4] sm:$0xf]
    %v2720 = vld [vmem:[%s2717 + $0x8] sm:$0xf]
    %v2721 = vld [vmem:[%s2717 + $0xc] sm:$0xf]
    %v2722 = vld [vmem:[%s2717 + $0x10] sm:$0xf]
    %v2723 = vld [vmem:[%s2717 + $0x14] sm:$0xf]
    %v2724 = vld [vmem:[%s2717 + $0x18] sm:$0xf]
    %v2725 = vld [vmem:[%s2717 + $0x1c] sm:$0xf]
    %v2726 = vld [vmem:[%s2717 + $0x20] sm:$0xf]
    %v2727 = vld [vmem:[%s2717 + $0x24] sm:$0xf]
    %v2728 = vld [vmem:[%s2717 + $0x28] sm:$0xf]
    %v2729 = vld [vmem:[%s2717 + $0x2c] sm:$0xf]
    %v2730 = vld [vmem:[%s2717 + $0x30] sm:$0xf]
    %v2731 = vld [vmem:[%s2717 + $0x34] sm:$0xf]
    %v2732 = vld [vmem:[%s2717 + $0x38] sm:$0xf]
    %v2733 = vld [vmem:[%s2717 + $0x3c] sm:$0xf]
    %s2734 = scalar_lea.vmem %s59, 1
    %v2735 = vld [vmem:[%s2734] sm:$0x1]
    %v2737 = vperm.slane %v2735, 0
    %v2755 = vunpack.c.l.b16 %v2718
    %v2756 = vunpack.c.l.b16 %v2719
    %v2757 = vunpack.c.l.b16 %v2720
    %v2758 = vunpack.c.l.b16 %v2721
    %v2759 = vunpack.c.l.b16 %v2722
    %v2760 = vunpack.c.l.b16 %v2723
    %v2761 = vunpack.c.l.b16 %v2724
    %v2762 = vunpack.c.l.b16 %v2725
    %v2763 = vunpack.c.l.b16 %v2726
    %v2764 = vunpack.c.l.b16 %v2727
    %v2765 = vunpack.c.l.b16 %v2728
    %v2766 = vunpack.c.l.b16 %v2729
    %v2767 = vunpack.c.l.b16 %v2730
    %v2768 = vunpack.c.l.b16 %v2731
    %v2769 = vunpack.c.l.b16 %v2732
    %v2770 = vunpack.c.l.b16 %v2733
    %v2771 = vpack.c.b16 %v2756, %v2755
    %v2772 = vpack.c.b16 %v2758, %v2757
    %v2773 = vpack.c.b16 %v2760, %v2759
    %v2774 = vpack.c.b16 %v2762, %v2761
    %v2775 = vpack.c.b16 %v2764, %v2763
    %v2776 = vpack.c.b16 %v2766, %v2765
    %v2777 = vpack.c.b16 %v2768, %v2767
    %v2778 = vpack.c.b16 %v2770, %v2769
    %2787 = vmatpush.bf16.msra.mxu0 %v2778
    %2788 = vmatpush.bf16.msra.mxu0 %v2777
    %2789 = vmatpush.bf16.msra.mxu0 %v2776
    %2790 = vmatpush.bf16.msra.mxu0 %v2775
    %2791 = vmatpush.bf16.msra.mxu0 %v2774
    %2792 = vmatpush.bf16.msra.mxu0 %v2773
    %2793 = vmatpush.bf16.msra.mxu0 %v2772
    %2794 = vmatpush.bf16.msra.mxu0 %v2771
    %2795 = vmatmul.bf16.gmra.mxu0 %v2230
    %v2796 = vpop.f32.mrf.mxu0
    %v2797 = vadd.f32 %v2737, %v2796
    %v2798 = vpop.f32.mrf.mxu0
    %v2799 = vadd.f32 %v2737, %v2798
    %2800 = vdwg.mxu0
    %v2801 = vpack.c.bf16 %v2631, %v2629
    %v2802 = vpack.c.bf16 %v2715, %v2713
    %v2804 = vsel %vm880, %v2801, 0
    %v2807 = vsel %vm880, %v2802, 0
    %2809 = vmatpush.bf16.xpose.msra.mxu0 0
    %2810 = vmatpush.bf16.xpose.msra.mxu0 0
    %2811 = vmatpush.bf16.xpose.msra.mxu0 0
    %2812 = vmatpush.bf16.xpose.msra.mxu0 0
    %2813 = vmatpush.bf16.xpose.msra.mxu0 0
    %2814 = vmatpush.bf16.xpose.msra.mxu0 0
    %2815 = vmatpush.bf16.xpose.msra.mxu0 0
    %2816 = vmatpush.bf16.xpose.msra.mxu0 %v2807
    %2817 = vmatmul.bf16.gmra.mxu0 %v2804
    %v2818 = vpop.f32.mrf.mxu0
    %v2819 = vadd.f32 %v573, %v2818
    %v2820 = vpop.f32.mrf.mxu0
    %v2821 = vadd.f32 %v574, %v2820
    %2822 = vdwg.mxu0
    %v2823 = vsel %vm901, %v2819, -inf
    %2824 = vmax.xlane.f32.xlu0 %v2823
    %v2825 = vpop.xlane.xlu0 %2824
    %v2826 = vsel %vm901, %v2821, -inf
    %2827 = vmax.xlane.f32.xlu0 %v2826
    %v2828 = vpop.xlane.xlu0 %2827
    %v2829 = vsub.f32 %v2819, %v2825
    %v2830 = vsub.f32 %v2821, %v2828
    %v2831 = vmul.f32 %v2829, 1.442695
    %v2832 = vpow.pop %v2831
    %v2833 = vmul.f32 %v2830, 1.442695
    %v2834 = vpow.pop %v2833
    %v2835 = vsel %vm901, %v2832, 0.0
    %2836 = vadd.xlane.f32.xlu0 %v2835
    %v2837 = vpop.xlane.xlu0 %2836
    %v2838 = vsel %vm901, %v2834, 0.0
    %2839 = vadd.xlane.f32.xlu0 %v2838
    %v2840 = vpop.xlane.xlu0 %2839
    %v2841 = vrcp.pop %v2837
    %v2842 = vrcp.pop %v2840
    %v2843 = vmul.f32 %v2832, %v2841
    %v2844 = vmul.f32 %v2834, %v2842
    %v2845 = vpack.c.bf16 %v2844, %v2843
    %v2846 = vpack.c.bf16 %v2799, %v2797
    %v2848 = vsel %vm901, %v2845, 0
    %2850 = vmatpush.bf16.msra.mxu0 0
    %2851 = vmatpush.bf16.msra.mxu0 0
    %2852 = vmatpush.bf16.msra.mxu0 0
    %2853 = vmatpush.bf16.msra.mxu0 0
    %2854 = vmatpush.bf16.msra.mxu0 0
    %2855 = vmatpush.bf16.msra.mxu0 0
    %2856 = vmatpush.bf16.msra.mxu0 0
    %2857 = vmatpush.bf16.msra.mxu0 %v2846
    %2858 = vmatmul.bf16.gmra.mxu0 %v2848
    %v2859 = vpop.f32.mrf.mxu0
    %v2860 = vadd.f32 0.0, %v2859
    %v2861 = vpop.f32.mrf.mxu0
    %v2862 = vadd.f32 0.0, %v2861
    %2863 = vdwg.mxu0
    %s2864 = scalar_lea.vmem %s61, 32
    %v2865 = vld [vmem:[%s2864] sm:$0xf]
    %v2866 = vld [vmem:[%s2864 + $0x4] sm:$0xf]
    %v2867 = vld [vmem:[%s2864 + $0x8] sm:$0xf]
    %v2868 = vld [vmem:[%s2864 + $0xc] sm:$0xf]
    %v2869 = vld [vmem:[%s2864 + $0x10] sm:$0xf]
    %v2870 = vld [vmem:[%s2864 + $0x14] sm:$0xf]
    %v2871 = vld [vmem:[%s2864 + $0x18] sm:$0xf]
    %v2872 = vld [vmem:[%s2864 + $0x1c] sm:$0xf]
    %v2873 = vpack.c.bf16 %v2862, %v2860
    %v2882 = vunpack.c.l.b16 %v2865
    %v2883 = vunpack.c.l.b16 %v2866
    %v2884 = vunpack.c.l.b16 %v2867
    %v2885 = vunpack.c.l.b16 %v2868
    %v2886 = vunpack.c.l.b16 %v2869
    %v2887 = vunpack.c.l.b16 %v2870
    %v2888 = vunpack.c.l.b16 %v2871
    %v2889 = vunpack.c.l.b16 %v2872
    %v2890 = vpack.c.b16 %v2883, %v2882
    %v2891 = vpack.c.b16 %v2885, %v2884
    %v2892 = vpack.c.b16 %v2887, %v2886
    %v2893 = vpack.c.b16 %v2889, %v2888
    %v2899 = vsel %vm880, %v2873, 0
    %2901 = vmatpush.bf16.msra.mxu0 0
    %2902 = vmatpush.bf16.msra.mxu0 0
    %2903 = vmatpush.bf16.msra.mxu0 0
    %2904 = vmatpush.bf16.msra.mxu0 0
    %2905 = vmatpush.bf16.msra.mxu0 %v2893
    %2906 = vmatpush.bf16.msra.mxu0 %v2892
    %2907 = vmatpush.bf16.msra.mxu0 %v2891
    %2908 = vmatpush.bf16.msra.mxu0 %v2890
    %2909 = vmatmul.bf16.gmra.mxu0 %v2899
    %v2910 = vpop.f32.mrf.mxu0
    %v2911 = vadd.f32 0.0, %v2910
    %v2912 = vpop.f32.mrf.mxu0
    %v2913 = vadd.f32 0.0, %v2912
    %2914 = vdwg.mxu0
    %v2923 = vunpack.c.l.b16 %v2540
    %v2924 = vunpack.c.l.b16 %v2541
    %v2925 = vunpack.c.l.b16 %v2542
    %v2926 = vunpack.c.l.b16 %v2543
    %v2927 = vunpack.c.l.b16 %v2544
    %v2928 = vunpack.c.l.b16 %v2545
    %v2929 = vunpack.c.l.b16 %v2546
    %v2930 = vunpack.c.l.b16 %v2547
    %v2931 = vpack.c.b16 %v2924, %v2923
    %v2932 = vpack.c.b16 %v2926, %v2925
    %v2933 = vpack.c.b16 %v2928, %v2927
    %v2934 = vpack.c.b16 %v2930, %v2929
    %v2940 = vsel %vm880, %v2548, 0
    %2942 = vmatpush.bf16.msra.mxu0 0
    %2943 = vmatpush.bf16.msra.mxu0 0
    %2944 = vmatpush.bf16.msra.mxu0 0
    %2945 = vmatpush.bf16.msra.mxu0 0
    %2946 = vmatpush.bf16.msra.mxu0 %v2934
    %2947 = vmatpush.bf16.msra.mxu0 %v2933
    %2948 = vmatpush.bf16.msra.mxu0 %v2932
    %2949 = vmatpush.bf16.msra.mxu0 %v2931
    %2950 = vmatmul.bf16.gmra.mxu0 %v2940
    %v2951 = vpop.f32.mrf.mxu0
    %v2952 = vadd.f32 %v2911, %v2951
    %v2953 = vpop.f32.mrf.mxu0
    %v2954 = vadd.f32 %v2913, %v2953
    %2955 = vdwg.mxu0
    %v2956 = vadd.f32 %v2172, %v2952
    %v2957 = vadd.f32 %v2173, %v2954
    %v2958 = vld [vmem:[%s63] sm:$0x1]
    %v2960 = vperm.slane %v2958, 0
    %v2962 = vadd.f32 %v2956, %v2960
    %v2963 = vadd.f32 %v2957, %v2960
    %2964 = vadd.xlane.f32.xlu0 %v2962
    %v2965 = vpop.xlane.xlu0 %2964
    %2966 = vadd.xlane.f32.xlu0 %v2963
    %v2967 = vpop.xlane.xlu0 %2966
    %v2968 = vmul.f32 %v2965, %v520
    %v2969 = vmul.f32 %v2967, %v520
    %v2970 = vmul.f32 %v2962, %v2962
    %v2971 = vmul.f32 %v2963, %v2963
    %2972 = vadd.xlane.f32.xlu0 %v2970
    %v2973 = vpop.xlane.xlu0 %2972
    %2974 = vadd.xlane.f32.xlu0 %v2971
    %v2975 = vpop.xlane.xlu0 %2974
    %v2976 = vmul.f32 %v2973, %v520
    %v2977 = vmul.f32 %v2975, %v520
    %v2978 = vmul.f32 %v2968, %v2968
    %v2979 = vmul.f32 %v2969, %v2969
    %v2980 = vsub.f32 %v2976, %v2978
    %v2981 = vsub.f32 %v2977, %v2979
    %v2982 = vsub.f32 %v2962, %v2968
    %v2983 = vsub.f32 %v2963, %v2969
    %v2984 = vadd.f32 %v2980, 1e-05
    %v2985 = vadd.f32 %v2981, 1e-05
    %v2986 = vrsqrt.pop %v2984
    %v2987 = vmul.f32 %v2986, %v2984
    %v2988 = vmul.f32 %v2987, %v2986
    %v2989 = vmul.f32 0.5, %v2988
    %v2990 = vsub.f32 1.5, %v2989
    %v2991 = vmul.f32 %v2986, %v2990
    %vm2992 = vweird.f32 %v2984
    %vm2993 = vweird.f32 %v2986
    %vm2994 = vmor %vm2992, %vm2993
    %v2995 = vsel %vm2994, %v2986, %v2991
    %v2996 = vrsqrt.pop %v2985
    %v2997 = vmul.f32 %v2996, %v2985
    %v2998 = vmul.f32 %v2997, %v2996
    %v2999 = vmul.f32 0.5, %v2998
    %v3000 = vsub.f32 1.5, %v2999
    %v3001 = vmul.f32 %v2996, %v3000
    %vm3002 = vweird.f32 %v2985
    %vm3003 = vweird.f32 %v2996
    %vm3004 = vmor %vm3002, %vm3003
    %v3005 = vsel %vm3004, %v2996, %v3001
    %v3006 = vmul.f32 %v2982, %v2995
    %v3007 = vmul.f32 %v2983, %v3005
    %v3008 = vld [vmem:[%s65] sm:$0x1]
    %v3010 = vperm.slane %v3008, 0
    %v3012 = vmul.f32 %v3006, %v3010
    %v3013 = vmul.f32 %v3007, %v3010
    %v3014 = vld [vmem:[#allocation18] sm:$0x1]
    %v3016 = vperm.slane %v3014, 0
    %v3018 = vadd.f32 %v3012, %v3016
    %v3019 = vadd.f32 %v3013, %v3016
    %v3020 = vpack.c.bf16 %v3019, %v3018
    %v3021 = vld [vmem:[%s69] sm:$0xff]
    %v3022 = vld [vmem:[%s69 + $0x8] sm:$0xff]
    %v3023 = vld [vmem:[%s69 + $0x10] sm:$0xff]
    %v3024 = vld [vmem:[%s69 + $0x18] sm:$0xff]
    %v3025 = vld [vmem:[%s69 + $0x20] sm:$0xff]
    %v3026 = vld [vmem:[%s69 + $0x28] sm:$0xff]
    %v3027 = vld [vmem:[%s69 + $0x30] sm:$0xff]
    %v3028 = vld [vmem:[%s69 + $0x38] sm:$0xff]
    %v3029 = vld [vmem:[%s69 + $0x40] sm:$0xff]
    %v3030 = vld [vmem:[%s69 + $0x48] sm:$0xff]
    %v3031 = vld [vmem:[%s69 + $0x50] sm:$0xff]
    %v3032 = vld [vmem:[%s69 + $0x58] sm:$0xff]
    %v3033 = vld [vmem:[%s69 + $0x60] sm:$0xff]
    %v3034 = vld [vmem:[%s69 + $0x68] sm:$0xff]
    %v3035 = vld [vmem:[%s69 + $0x70] sm:$0xff]
    %v3036 = vld [vmem:[%s69 + $0x78] sm:$0xff]
    %v3037 = vld [vmem:[%s69 + $0x80] sm:$0xff]
    %v3038 = vld [vmem:[%s69 + $0x88] sm:$0xff]
    %v3039 = vld [vmem:[%s69 + $0x90] sm:$0xff]
    %v3040 = vld [vmem:[%s69 + $0x98] sm:$0xff]
    %v3041 = vld [vmem:[%s69 + $0xa0] sm:$0xff]
    %v3042 = vld [vmem:[%s69 + $0xa8] sm:$0xff]
    %v3043 = vld [vmem:[%s69 + $0xb0] sm:$0xff]
    %v3044 = vld [vmem:[%s69 + $0xb8] sm:$0xff]
    %v3045 = vld [vmem:[%s69 + $0xc0] sm:$0xff]
    %v3046 = vld [vmem:[%s69 + $0xc8] sm:$0xff]
    %v3047 = vld [vmem:[%s69 + $0xd0] sm:$0xff]
    %v3048 = vld [vmem:[%s69 + $0xd8] sm:$0xff]
    %v3049 = vld [vmem:[%s69 + $0xe0] sm:$0xff]
    %v3050 = vld [vmem:[%s69 + $0xe8] sm:$0xff]
    %v3051 = vld [vmem:[%s69 + $0xf0] sm:$0xff]
    %v3052 = vld [vmem:[%s69 + $0xf8] sm:$0xff]
    %v3053 = vld [vmem:[%s71] sm:$0xf]
    %v3055 = vperm.slane %v3053, 0
    %v3056 = vperm.slane %v3053, 1
    %v3057 = vperm.slane %v3053, 2
    %v3058 = vperm.slane %v3053, 3
    %v3095 = vunpack.c.l.b16 %v3021
    %v3096 = vunpack.c.h.b16 %v3021
    %v3097 = vunpack.c.l.b16 %v3022
    %v3098 = vunpack.c.h.b16 %v3022
    %v3099 = vunpack.c.l.b16 %v3023
    %v3100 = vunpack.c.h.b16 %v3023
    %v3101 = vunpack.c.l.b16 %v3024
    %v3102 = vunpack.c.h.b16 %v3024
    %v3103 = vunpack.c.l.b16 %v3025
    %v3104 = vunpack.c.h.b16 %v3025
    %v3105 = vunpack.c.l.b16 %v3026
    %v3106 = vunpack.c.h.b16 %v3026
    %v3107 = vunpack.c.l.b16 %v3027
    %v3108 = vunpack.c.h.b16 %v3027
    %v3109 = vunpack.c.l.b16 %v3028
    %v3110 = vunpack.c.h.b16 %v3028
    %v3111 = vunpack.c.l.b16 %v3029
    %v3112 = vunpack.c.h.b16 %v3029
    %v3113 = vunpack.c.l.b16 %v3030
    %v3114 = vunpack.c.h.b16 %v3030
    %v3115 = vunpack.c.l.b16 %v3031
    %v3116 = vunpack.c.h.b16 %v3031
    %v3117 = vunpack.c.l.b16 %v3032
    %v3118 = vunpack.c.h.b16 %v3032
    %v3119 = vunpack.c.l.b16 %v3033
    %v3120 = vunpack.c.h.b16 %v3033
    %v3121 = vunpack.c.l.b16 %v3034
    %v3122 = vunpack.c.h.b16 %v3034
    %v3123 = vunpack.c.l.b16 %v3035
    %v3124 = vunpack.c.h.b16 %v3035
    %v3125 = vunpack.c.l.b16 %v3036
    %v3126 = vunpack.c.h.b16 %v3036
    %v3127 = vunpack.c.l.b16 %v3037
    %v3128 = vunpack.c.h.b16 %v3037
    %v3129 = vunpack.c.l.b16 %v3038
    %v3130 = vunpack.c.h.b16 %v3038
    %v3131 = vunpack.c.l.b16 %v3039
    %v3132 = vunpack.c.h.b16 %v3039
    %v3133 = vunpack.c.l.b16 %v3040
    %v3134 = vunpack.c.h.b16 %v3040
    %v3135 = vunpack.c.l.b16 %v3041
    %v3136 = vunpack.c.h.b16 %v3041
    %v3137 = vunpack.c.l.b16 %v3042
    %v3138 = vunpack.c.h.b16 %v3042
    %v3139 = vunpack.c.l.b16 %v3043
    %v3140 = vunpack.c.h.b16 %v3043
    %v3141 = vunpack.c.l.b16 %v3044
    %v3142 = vunpack.c.h.b16 %v3044
    %v3143 = vunpack.c.l.b16 %v3045
    %v3144 = vunpack.c.h.b16 %v3045
    %v3145 = vunpack.c.l.b16 %v3046
    %v3146 = vunpack.c.h.b16 %v3046
    %v3147 = vunpack.c.l.b16 %v3047
    %v3148 = vunpack.c.h.b16 %v3047
    %v3149 = vunpack.c.l.b16 %v3048
    %v3150 = vunpack.c.h.b16 %v3048
    %v3151 = vunpack.c.l.b16 %v3049
    %v3152 = vunpack.c.h.b16 %v3049
    %v3153 = vunpack.c.l.b16 %v3050
    %v3154 = vunpack.c.h.b16 %v3050
    %v3155 = vunpack.c.l.b16 %v3051
    %v3156 = vunpack.c.h.b16 %v3051
    %v3157 = vunpack.c.l.b16 %v3052
    %v3158 = vunpack.c.h.b16 %v3052
    %v3159 = vpack.c.b16 %v3099, %v3095
    %v3160 = vpack.c.b16 %v3100, %v3096
    %v3161 = vpack.c.b16 %v3101, %v3097
    %v3162 = vpack.c.b16 %v3102, %v3098
    %v3163 = vpack.c.b16 %v3107, %v3103
    %v3164 = vpack.c.b16 %v3108, %v3104
    %v3165 = vpack.c.b16 %v3109, %v3105
    %v3166 = vpack.c.b16 %v3110, %v3106
    %v3167 = vpack.c.b16 %v3115, %v3111
    %v3168 = vpack.c.b16 %v3116, %v3112
    %v3169 = vpack.c.b16 %v3117, %v3113
    %v3170 = vpack.c.b16 %v3118, %v3114
    %v3171 = vpack.c.b16 %v3123, %v3119
    %v3172 = vpack.c.b16 %v3124, %v3120
    %v3173 = vpack.c.b16 %v3125, %v3121
    %v3174 = vpack.c.b16 %v3126, %v3122
    %v3175 = vpack.c.b16 %v3131, %v3127
    %v3176 = vpack.c.b16 %v3132, %v3128
    %v3177 = vpack.c.b16 %v3133, %v3129
    %v3178 = vpack.c.b16 %v3134, %v3130
    %v3179 = vpack.c.b16 %v3139, %v3135
    %v3180 = vpack.c.b16 %v3140, %v3136
    %v3181 = vpack.c.b16 %v3141, %v3137
    %v3182 = vpack.c.b16 %v3142, %v3138
    %v3183 = vpack.c.b16 %v3147, %v3143
    %v3184 = vpack.c.b16 %v3148, %v3144
    %v3185 = vpack.c.b16 %v3149, %v3145
    %v3186 = vpack.c.b16 %v3150, %v3146
    %v3187 = vpack.c.b16 %v3155, %v3151
    %v3188 = vpack.c.b16 %v3156, %v3152
    %v3189 = vpack.c.b16 %v3157, %v3153
    %v3190 = vpack.c.b16 %v3158, %v3154
    %3223 = vmatpush.bf16.msra.mxu0 %v3187
    %3224 = vmatpush.bf16.msra.mxu0 %v3183
    %3225 = vmatpush.bf16.msra.mxu0 %v3179
    %3226 = vmatpush.bf16.msra.mxu0 %v3175
    %3227 = vmatpush.bf16.msra.mxu0 %v3171
    %3228 = vmatpush.bf16.msra.mxu0 %v3167
    %3229 = vmatpush.bf16.msra.mxu0 %v3163
    %3230 = vmatpush.bf16.msra.mxu0 %v3159
    %3231 = vmatmul.bf16.gmra.mxu0 %v3020
    %v3232 = vpop.f32.mrf.mxu0
    %v3233 = vadd.f32 %v3055, %v3232
    %v3234 = vpop.f32.mrf.mxu0
    %v3235 = vadd.f32 %v3055, %v3234
    %3236 = vdwg.mxu0
    %3237 = vmatpush.bf16.msra.mxu0 %v3188
    %3238 = vmatpush.bf16.msra.mxu0 %v3184
    %3239 = vmatpush.bf16.msra.mxu0 %v3180
    %3240 = vmatpush.bf16.msra.mxu0 %v3176
    %3241 = vmatpush.bf16.msra.mxu0 %v3172
    %3242 = vmatpush.bf16.msra.mxu0 %v3168
    %3243 = vmatpush.bf16.msra.mxu0 %v3164
    %3244 = vmatpush.bf16.msra.mxu0 %v3160
    %3245 = vmatmul.bf16.gmra.mxu0 %v3020
    %v3246 = vpop.f32.mrf.mxu0
    %v3247 = vadd.f32 %v3056, %v3246
    %v3248 = vpop.f32.mrf.mxu0
    %v3249 = vadd.f32 %v3056, %v3248
    %3250 = vdwg.mxu0
    %3251 = vmatpush.bf16.msra.mxu0 %v3189
    %3252 = vmatpush.bf16.msra.mxu0 %v3185
    %3253 = vmatpush.bf16.msra.mxu0 %v3181
    %3254 = vmatpush.bf16.msra.mxu0 %v3177
    %3255 = vmatpush.bf16.msra.mxu0 %v3173
    %3256 = vmatpush.bf16.msra.mxu0 %v3169
    %3257 = vmatpush.bf16.msra.mxu0 %v3165
    %3258 = vmatpush.bf16.msra.mxu0 %v3161
    %3259 = vmatmul.bf16.gmra.mxu0 %v3020
    %v3260 = vpop.f32.mrf.mxu0
    %v3261 = vadd.f32 %v3057, %v3260
    %v3262 = vpop.f32.mrf.mxu0
    %v3263 = vadd.f32 %v3057, %v3262
    %3264 = vdwg.mxu0
    %3265 = vmatpush.bf16.msra.mxu0 %v3190
    %3266 = vmatpush.bf16.msra.mxu0 %v3186
    %3267 = vmatpush.bf16.msra.mxu0 %v3182
    %3268 = vmatpush.bf16.msra.mxu0 %v3178
    %3269 = vmatpush.bf16.msra.mxu0 %v3174
    %3270 = vmatpush.bf16.msra.mxu0 %v3170
    %3271 = vmatpush.bf16.msra.mxu0 %v3166
    %3272 = vmatpush.bf16.msra.mxu0 %v3162
    %3273 = vmatmul.bf16.gmra.mxu0 %v3020
    %v3274 = vpop.f32.mrf.mxu0
    %v3275 = vadd.f32 %v3058, %v3274
    %v3276 = vpop.f32.mrf.mxu0
    %v3277 = vadd.f32 %v3058, %v3276
    %3278 = vdwg.mxu0
    %v3279 = vmul.f32 %v3233, 1.702
    %v3280 = vmul.f32 %v3247, 1.702
    %v3281 = vmul.f32 %v3261, 1.702
    %v3282 = vmul.f32 %v3275, 1.702
    %v3283 = vmul.f32 %v3235, 1.702
    %v3284 = vmul.f32 %v3249, 1.702
    %v3285 = vmul.f32 %v3263, 1.702
    %v3286 = vmul.f32 %v3277, 1.702
    %v3287 = vxor.u32 %v3279, 2147483648
    %v3288 = vxor.u32 %v3280, 2147483648
    %v3289 = vxor.u32 %v3281, 2147483648
    %v3290 = vxor.u32 %v3282, 2147483648
    %v3291 = vxor.u32 %v3283, 2147483648
    %v3292 = vxor.u32 %v3284, 2147483648
    %v3293 = vxor.u32 %v3285, 2147483648
    %v3294 = vxor.u32 %v3286, 2147483648
    %v3295 = vmul.f32 %v3287, 1.442695
    %v3296 = vpow.pop %v3295
    %v3297 = vmul.f32 %v3288, 1.442695
    %v3298 = vpow.pop %v3297
    %v3299 = vmul.f32 %v3289, 1.442695
    %v3300 = vpow.pop %v3299
    %v3301 = vmul.f32 %v3290, 1.442695
    %v3302 = vpow.pop %v3301
    %v3303 = vmul.f32 %v3291, 1.442695
    %v3304 = vpow.pop %v3303
    %v3305 = vmul.f32 %v3292, 1.442695
    %v3306 = vpow.pop %v3305
    %v3307 = vmul.f32 %v3293, 1.442695
    %v3308 = vpow.pop %v3307
    %v3309 = vmul.f32 %v3294, 1.442695
    %v3310 = vpow.pop %v3309
    %v3311 = vadd.f32 %v3296, 1.0
    %v3312 = vadd.f32 %v3298, 1.0
    %v3313 = vadd.f32 %v3300, 1.0
    %v3314 = vadd.f32 %v3302, 1.0
    %v3315 = vadd.f32 %v3304, 1.0
    %v3316 = vadd.f32 %v3306, 1.0
    %v3317 = vadd.f32 %v3308, 1.0
    %v3318 = vadd.f32 %v3310, 1.0
    %v3319 = vrcp.pop %v3311
    %v3320 = vmul.f32 %v3311, %v3319
    %v3321 = vsub.f32 1.0, %v3320
    %v3322 = vmul.f32 %v3319, %v3321
    %v3323 = vadd.f32 %v3319, %v3322
    %vm3324 = vweird.f32 %v3311
    %vm3325 = vweird.f32 %v3319
    %vm3326 = vmor %vm3324, %vm3325
    %v3327 = vsel %vm3326, %v3319, %v3323
    %v3328 = vand.u32 2147483647, %v3311
    %vm3329 = vcmp.eq.f32.partialorder %v3328, 8.507059e+37
    %v3330 = vand.u32 %v3311, 2147483648
    %v3331 = vor.u32 1.1754944e-38, %v3330
    %v3332 = vsel %vm3329, %v3331, %v3327
    %v3333 = vmul.f32 1.0, %v3332
    %v3334 = vrcp.pop %v3312
    %v3335 = vmul.f32 %v3312, %v3334
    %v3336 = vsub.f32 1.0, %v3335
    %v3337 = vmul.f32 %v3334, %v3336
    %v3338 = vadd.f32 %v3334, %v3337
    %vm3339 = vweird.f32 %v3312
    %vm3340 = vweird.f32 %v3334
    %vm3341 = vmor %vm3339, %vm3340
    %v3342 = vsel %vm3341, %v3334, %v3338
    %v3343 = vand.u32 2147483647, %v3312
    %vm3344 = vcmp.eq.f32.partialorder %v3343, 8.507059e+37
    %v3345 = vand.u32 %v3312, 2147483648
    %v3346 = vor.u32 1.1754944e-38, %v3345
    %v3347 = vsel %vm3344, %v3346, %v3342
    %v3348 = vmul.f32 1.0, %v3347
    %v3349 = vrcp.pop %v3313
    %v3350 = vmul.f32 %v3313, %v3349
    %v3351 = vsub.f32 1.0, %v3350
    %v3352 = vmul.f32 %v3349, %v3351
    %v3353 = vadd.f32 %v3349, %v3352
    %vm3354 = vweird.f32 %v3313
    %vm3355 = vweird.f32 %v3349
    %vm3356 = vmor %vm3354, %vm3355
    %v3357 = vsel %vm3356, %v3349, %v3353
    %v3358 = vand.u32 2147483647, %v3313
    %vm3359 = vcmp.eq.f32.partialorder %v3358, 8.507059e+37
    %v3360 = vand.u32 %v3313, 2147483648
    %v3361 = vor.u32 1.1754944e-38, %v3360
    %v3362 = vsel %vm3359, %v3361, %v3357
    %v3363 = vmul.f32 1.0, %v3362
    %v3364 = vrcp.pop %v3314
    %v3365 = vmul.f32 %v3314, %v3364
    %v3366 = vsub.f32 1.0, %v3365
    %v3367 = vmul.f32 %v3364, %v3366
    %v3368 = vadd.f32 %v3364, %v3367
    %vm3369 = vweird.f32 %v3314
    %vm3370 = vweird.f32 %v3364
    %vm3371 = vmor %vm3369, %vm3370
    %v3372 = vsel %vm3371, %v3364, %v3368
    %v3373 = vand.u32 2147483647, %v3314
    %vm3374 = vcmp.eq.f32.partialorder %v3373, 8.507059e+37
    %v3375 = vand.u32 %v3314, 2147483648
    %v3376 = vor.u32 1.1754944e-38, %v3375
    %v3377 = vsel %vm3374, %v3376, %v3372
    %v3378 = vmul.f32 1.0, %v3377
    %v3379 = vrcp.pop %v3315
    %v3380 = vmul.f32 %v3315, %v3379
    %v3381 = vsub.f32 1.0, %v3380
    %v3382 = vmul.f32 %v3379, %v3381
    %v3383 = vadd.f32 %v3379, %v3382
    %vm3384 = vweird.f32 %v3315
    %vm3385 = vweird.f32 %v3379
    %vm3386 = vmor %vm3384, %vm3385
    %v3387 = vsel %vm3386, %v3379, %v3383
    %v3388 = vand.u32 2147483647, %v3315
    %vm3389 = vcmp.eq.f32.partialorder %v3388, 8.507059e+37
    %v3390 = vand.u32 %v3315, 2147483648
    %v3391 = vor.u32 1.1754944e-38, %v3390
    %v3392 = vsel %vm3389, %v3391, %v3387
    %v3393 = vmul.f32 1.0, %v3392
    %v3394 = vrcp.pop %v3316
    %v3395 = vmul.f32 %v3316, %v3394
    %v3396 = vsub.f32 1.0, %v3395
    %v3397 = vmul.f32 %v3394, %v3396
    %v3398 = vadd.f32 %v3394, %v3397
    %vm3399 = vweird.f32 %v3316
    %vm3400 = vweird.f32 %v3394
    %vm3401 = vmor %vm3399, %vm3400
    %v3402 = vsel %vm3401, %v3394, %v3398
    %v3403 = vand.u32 2147483647, %v3316
    %vm3404 = vcmp.eq.f32.partialorder %v3403, 8.507059e+37
    %v3405 = vand.u32 %v3316, 2147483648
    %v3406 = vor.u32 1.1754944e-38, %v3405
    %v3407 = vsel %vm3404, %v3406, %v3402
    %v3408 = vmul.f32 1.0, %v3407
    %v3409 = vrcp.pop %v3317
    %v3410 = vmul.f32 %v3317, %v3409
    %v3411 = vsub.f32 1.0, %v3410
    %v3412 = vmul.f32 %v3409, %v3411
    %v3413 = vadd.f32 %v3409, %v3412
    %vm3414 = vweird.f32 %v3317
    %vm3415 = vweird.f32 %v3409
    %vm3416 = vmor %vm3414, %vm3415
    %v3417 = vsel %vm3416, %v3409, %v3413
    %v3418 = vand.u32 2147483647, %v3317
    %vm3419 = vcmp.eq.f32.partialorder %v3418, 8.507059e+37
    %v3420 = vand.u32 %v3317, 2147483648
    %v3421 = vor.u32 1.1754944e-38, %v3420
    %v3422 = vsel %vm3419, %v3421, %v3417
    %v3423 = vmul.f32 1.0, %v3422
    %v3424 = vrcp.pop %v3318
    %v3425 = vmul.f32 %v3318, %v3424
    %v3426 = vsub.f32 1.0, %v3425
    %v3427 = vmul.f32 %v3424, %v3426
    %v3428 = vadd.f32 %v3424, %v3427
    %vm3429 = vweird.f32 %v3318
    %vm3430 = vweird.f32 %v3424
    %vm3431 = vmor %vm3429, %vm3430
    %v3432 = vsel %vm3431, %v3424, %v3428
    %v3433 = vand.u32 2147483647, %v3318
    %vm3434 = vcmp.eq.f32.partialorder %v3433, 8.507059e+37
    %v3435 = vand.u32 %v3318, 2147483648
    %v3436 = vor.u32 1.1754944e-38, %v3435
    %v3437 = vsel %vm3434, %v3436, %v3432
    %v3438 = vmul.f32 1.0, %v3437
    %v3439 = vmul.f32 %v3233, %v3333
    %v3440 = vmul.f32 %v3247, %v3348
    %v3441 = vmul.f32 %v3261, %v3363
    %v3442 = vmul.f32 %v3275, %v3378
    %v3443 = vmul.f32 %v3235, %v3393
    %v3444 = vmul.f32 %v3249, %v3408
    %v3445 = vmul.f32 %v3263, %v3423
    %v3446 = vmul.f32 %v3277, %v3438
    %v3447 = vpack.c.bf16 %v3443, %v3439
    %v3448 = vpack.c.bf16 %v3444, %v3440
    %v3449 = vpack.c.bf16 %v3445, %v3441
    %v3450 = vpack.c.bf16 %v3446, %v3442
    %v3451 = vld [vmem:[%s73] sm:$0xf]
    %v3452 = vld [vmem:[%s73 + $0x4] sm:$0xf]
    %v3453 = vld [vmem:[%s73 + $0x8] sm:$0xf]
    %v3454 = vld [vmem:[%s73 + $0xc] sm:$0xf]
    %v3455 = vld [vmem:[%s73 + $0x10] sm:$0xf]
    %v3456 = vld [vmem:[%s73 + $0x14] sm:$0xf]
    %v3457 = vld [vmem:[%s73 + $0x18] sm:$0xf]
    %v3458 = vld [vmem:[%s73 + $0x1c] sm:$0xf]
    %v3459 = vld [vmem:[%s73 + $0x20] sm:$0xf]
    %v3460 = vld [vmem:[%s73 + $0x24] sm:$0xf]
    %v3461 = vld [vmem:[%s73 + $0x28] sm:$0xf]
    %v3462 = vld [vmem:[%s73 + $0x2c] sm:$0xf]
    %v3463 = vld [vmem:[%s73 + $0x30] sm:$0xf]
    %v3464 = vld [vmem:[%s73 + $0x34] sm:$0xf]
    %v3465 = vld [vmem:[%s73 + $0x38] sm:$0xf]
    %v3466 = vld [vmem:[%s73 + $0x3c] sm:$0xf]
    %v3467 = vld [vmem:[%s73 + $0x40] sm:$0xf]
    %v3468 = vld [vmem:[%s73 + $0x44] sm:$0xf]
    %v3469 = vld [vmem:[%s73 + $0x48] sm:$0xf]
    %v3470 = vld [vmem:[%s73 + $0x4c] sm:$0xf]
    %v3471 = vld [vmem:[%s73 + $0x50] sm:$0xf]
    %v3472 = vld [vmem:[%s73 + $0x54] sm:$0xf]
    %v3473 = vld [vmem:[%s73 + $0x58] sm:$0xf]
    %v3474 = vld [vmem:[%s73 + $0x5c] sm:$0xf]
    %v3475 = vld [vmem:[%s73 + $0x60] sm:$0xf]
    %v3476 = vld [vmem:[%s73 + $0x64] sm:$0xf]
    %v3477 = vld [vmem:[%s73 + $0x68] sm:$0xf]
    %v3478 = vld [vmem:[%s73 + $0x6c] sm:$0xf]
    %v3479 = vld [vmem:[%s73 + $0x70] sm:$0xf]
    %v3480 = vld [vmem:[%s73 + $0x74] sm:$0xf]
    %v3481 = vld [vmem:[%s73 + $0x78] sm:$0xf]
    %v3482 = vld [vmem:[%s73 + $0x7c] sm:$0xf]
    %v3483 = vld [vmem:[%s73 + $0x80] sm:$0xf]
    %v3484 = vld [vmem:[%s73 + $0x84] sm:$0xf]
    %v3485 = vld [vmem:[%s73 + $0x88] sm:$0xf]
    %v3486 = vld [vmem:[%s73 + $0x8c] sm:$0xf]
    %v3487 = vld [vmem:[%s73 + $0x90] sm:$0xf]
    %v3488 = vld [vmem:[%s73 + $0x94] sm:$0xf]
    %v3489 = vld [vmem:[%s73 + $0x98] sm:$0xf]
    %v3490 = vld [vmem:[%s73 + $0x9c] sm:$0xf]
    %v3491 = vld [vmem:[%s73 + $0xa0] sm:$0xf]
    %v3492 = vld [vmem:[%s73 + $0xa4] sm:$0xf]
    %v3493 = vld [vmem:[%s73 + $0xa8] sm:$0xf]
    %v3494 = vld [vmem:[%s73 + $0xac] sm:$0xf]
    %v3495 = vld [vmem:[%s73 + $0xb0] sm:$0xf]
    %v3496 = vld [vmem:[%s73 + $0xb4] sm:$0xf]
    %v3497 = vld [vmem:[%s73 + $0xb8] sm:$0xf]
    %v3498 = vld [vmem:[%s73 + $0xbc] sm:$0xf]
    %v3499 = vld [vmem:[%s73 + $0xc0] sm:$0xf]
    %v3500 = vld [vmem:[%s73 + $0xc4] sm:$0xf]
    %v3501 = vld [vmem:[%s73 + $0xc8] sm:$0xf]
    %v3502 = vld [vmem:[%s73 + $0xcc] sm:$0xf]
    %v3503 = vld [vmem:[%s73 + $0xd0] sm:$0xf]
    %v3504 = vld [vmem:[%s73 + $0xd4] sm:$0xf]
    %v3505 = vld [vmem:[%s73 + $0xd8] sm:$0xf]
    %v3506 = vld [vmem:[%s73 + $0xdc] sm:$0xf]
    %v3507 = vld [vmem:[%s73 + $0xe0] sm:$0xf]
    %v3508 = vld [vmem:[%s73 + $0xe4] sm:$0xf]
    %v3509 = vld [vmem:[%s73 + $0xe8] sm:$0xf]
    %v3510 = vld [vmem:[%s73 + $0xec] sm:$0xf]
    %v3511 = vld [vmem:[%s73 + $0xf0] sm:$0xf]
    %v3512 = vld [vmem:[%s73 + $0xf4] sm:$0xf]
    %v3513 = vld [vmem:[%s73 + $0xf8] sm:$0xf]
    %v3514 = vld [vmem:[%s73 + $0xfc] sm:$0xf]
    %v3579 = vunpack.c.l.b16 %v3451
    %v3580 = vunpack.c.l.b16 %v3452
    %v3581 = vunpack.c.l.b16 %v3453
    %v3582 = vunpack.c.l.b16 %v3454
    %v3583 = vunpack.c.l.b16 %v3455
    %v3584 = vunpack.c.l.b16 %v3456
    %v3585 = vunpack.c.l.b16 %v3457
    %v3586 = vunpack.c.l.b16 %v3458
    %v3587 = vunpack.c.l.b16 %v3459
    %v3588 = vunpack.c.l.b16 %v3460
    %v3589 = vunpack.c.l.b16 %v3461
    %v3590 = vunpack.c.l.b16 %v3462
    %v3591 = vunpack.c.l.b16 %v3463
    %v3592 = vunpack.c.l.b16 %v3464
    %v3593 = vunpack.c.l.b16 %v3465
    %v3594 = vunpack.c.l.b16 %v3466
    %v3595 = vunpack.c.l.b16 %v3467
    %v3596 = vunpack.c.l.b16 %v3468
    %v3597 = vunpack.c.l.b16 %v3469
    %v3598 = vunpack.c.l.b16 %v3470
    %v3599 = vunpack.c.l.b16 %v3471
    %v3600 = vunpack.c.l.b16 %v3472
    %v3601 = vunpack.c.l.b16 %v3473
    %v3602 = vunpack.c.l.b16 %v3474
    %v3603 = vunpack.c.l.b16 %v3475
    %v3604 = vunpack.c.l.b16 %v3476
    %v3605 = vunpack.c.l.b16 %v3477
    %v3606 = vunpack.c.l.b16 %v3478
    %v3607 = vunpack.c.l.b16 %v3479
    %v3608 = vunpack.c.l.b16 %v3480
    %v3609 = vunpack.c.l.b16 %v3481
    %v3610 = vunpack.c.l.b16 %v3482
    %v3611 = vunpack.c.l.b16 %v3483
    %v3612 = vunpack.c.l.b16 %v3484
    %v3613 = vunpack.c.l.b16 %v3485
    %v3614 = vunpack.c.l.b16 %v3486
    %v3615 = vunpack.c.l.b16 %v3487
    %v3616 = vunpack.c.l.b16 %v3488
    %v3617 = vunpack.c.l.b16 %v3489
    %v3618 = vunpack.c.l.b16 %v3490
    %v3619 = vunpack.c.l.b16 %v3491
    %v3620 = vunpack.c.l.b16 %v3492
    %v3621 = vunpack.c.l.b16 %v3493
    %v3622 = vunpack.c.l.b16 %v3494
    %v3623 = vunpack.c.l.b16 %v3495
    %v3624 = vunpack.c.l.b16 %v3496
    %v3625 = vunpack.c.l.b16 %v3497
    %v3626 = vunpack.c.l.b16 %v3498
    %v3627 = vunpack.c.l.b16 %v3499
    %v3628 = vunpack.c.l.b16 %v3500
    %v3629 = vunpack.c.l.b16 %v3501
    %v3630 = vunpack.c.l.b16 %v3502
    %v3631 = vunpack.c.l.b16 %v3503
    %v3632 = vunpack.c.l.b16 %v3504
    %v3633 = vunpack.c.l.b16 %v3505
    %v3634 = vunpack.c.l.b16 %v3506
    %v3635 = vunpack.c.l.b16 %v3507
    %v3636 = vunpack.c.l.b16 %v3508
    %v3637 = vunpack.c.l.b16 %v3509
    %v3638 = vunpack.c.l.b16 %v3510
    %v3639 = vunpack.c.l.b16 %v3511
    %v3640 = vunpack.c.l.b16 %v3512
    %v3641 = vunpack.c.l.b16 %v3513
    %v3642 = vunpack.c.l.b16 %v3514
    %v3643 = vpack.c.b16 %v3580, %v3579
    %v3644 = vpack.c.b16 %v3582, %v3581
    %v3645 = vpack.c.b16 %v3584, %v3583
    %v3646 = vpack.c.b16 %v3586, %v3585
    %v3647 = vpack.c.b16 %v3588, %v3587
    %v3648 = vpack.c.b16 %v3590, %v3589
    %v3649 = vpack.c.b16 %v3592, %v3591
    %v3650 = vpack.c.b16 %v3594, %v3593
    %v3651 = vpack.c.b16 %v3596, %v3595
    %v3652 = vpack.c.b16 %v3598, %v3597
    %v3653 = vpack.c.b16 %v3600, %v3599
    %v3654 = vpack.c.b16 %v3602, %v3601
    %v3655 = vpack.c.b16 %v3604, %v3603
    %v3656 = vpack.c.b16 %v3606, %v3605
    %v3657 = vpack.c.b16 %v3608, %v3607
    %v3658 = vpack.c.b16 %v3610, %v3609
    %v3659 = vpack.c.b16 %v3612, %v3611
    %v3660 = vpack.c.b16 %v3614, %v3613
    %v3661 = vpack.c.b16 %v3616, %v3615
    %v3662 = vpack.c.b16 %v3618, %v3617
    %v3663 = vpack.c.b16 %v3620, %v3619
    %v3664 = vpack.c.b16 %v3622, %v3621
    %v3665 = vpack.c.b16 %v3624, %v3623
    %v3666 = vpack.c.b16 %v3626, %v3625
    %v3667 = vpack.c.b16 %v3628, %v3627
    %v3668 = vpack.c.b16 %v3630, %v3629
    %v3669 = vpack.c.b16 %v3632, %v3631
    %v3670 = vpack.c.b16 %v3634, %v3633
    %v3671 = vpack.c.b16 %v3636, %v3635
    %v3672 = vpack.c.b16 %v3638, %v3637
    %v3673 = vpack.c.b16 %v3640, %v3639
    %v3674 = vpack.c.b16 %v3642, %v3641
    %3707 = vmatpush.bf16.msra.mxu0 %v3650
    %3708 = vmatpush.bf16.msra.mxu0 %v3649
    %3709 = vmatpush.bf16.msra.mxu0 %v3648
    %3710 = vmatpush.bf16.msra.mxu0 %v3647
    %3711 = vmatpush.bf16.msra.mxu0 %v3646
    %3712 = vmatpush.bf16.msra.mxu0 %v3645
    %3713 = vmatpush.bf16.msra.mxu0 %v3644
    %3714 = vmatpush.bf16.msra.mxu0 %v3643
    %3715 = vmatmul.bf16.gmra.mxu0 %v3447
    %v3716 = vpop.f32.mrf.mxu0
    %v3717 = vadd.f32 0.0, %v3716
    %v3718 = vpop.f32.mrf.mxu0
    %v3719 = vadd.f32 0.0, %v3718
    %3720 = vdwg.mxu0
    %3721 = vmatpush.bf16.msra.mxu0 %v3658
    %3722 = vmatpush.bf16.msra.mxu0 %v3657
    %3723 = vmatpush.bf16.msra.mxu0 %v3656
    %3724 = vmatpush.bf16.msra.mxu0 %v3655
    %3725 = vmatpush.bf16.msra.mxu0 %v3654
    %3726 = vmatpush.bf16.msra.mxu0 %v3653
    %3727 = vmatpush.bf16.msra.mxu0 %v3652
    %3728 = vmatpush.bf16.msra.mxu0 %v3651
    %3729 = vmatmul.bf16.gmra.mxu0 %v3448
    %v3730 = vpop.f32.mrf.mxu0
    %v3731 = vadd.f32 %v3717, %v3730
    %v3732 = vpop.f32.mrf.mxu0
    %v3733 = vadd.f32 %v3719, %v3732
    %3734 = vdwg.mxu0
    %3735 = vmatpush.bf16.msra.mxu0 %v3666
    %3736 = vmatpush.bf16.msra.mxu0 %v3665
    %3737 = vmatpush.bf16.msra.mxu0 %v3664
    %3738 = vmatpush.bf16.msra.mxu0 %v3663
    %3739 = vmatpush.bf16.msra.mxu0 %v3662
    %3740 = vmatpush.bf16.msra.mxu0 %v3661
    %3741 = vmatpush.bf16.msra.mxu0 %v3660
    %3742 = vmatpush.bf16.msra.mxu0 %v3659
    %3743 = vmatmul.bf16.gmra.mxu0 %v3449
    %v3744 = vpop.f32.mrf.mxu0
    %v3745 = vadd.f32 %v3731, %v3744
    %v3746 = vpop.f32.mrf.mxu0
    %v3747 = vadd.f32 %v3733, %v3746
    %3748 = vdwg.mxu0
    %3749 = vmatpush.bf16.msra.mxu0 %v3674
    %3750 = vmatpush.bf16.msra.mxu0 %v3673
    %3751 = vmatpush.bf16.msra.mxu0 %v3672
    %3752 = vmatpush.bf16.msra.mxu0 %v3671
    %3753 = vmatpush.bf16.msra.mxu0 %v3670
    %3754 = vmatpush.bf16.msra.mxu0 %v3669
    %3755 = vmatpush.bf16.msra.mxu0 %v3668
    %3756 = vmatpush.bf16.msra.mxu0 %v3667
    %3757 = vmatmul.bf16.gmra.mxu0 %v3450
    %v3758 = vpop.f32.mrf.mxu0
    %v3759 = vadd.f32 %v3745, %v3758
    %v3760 = vpop.f32.mrf.mxu0
    %v3761 = vadd.f32 %v3747, %v3760
    %3762 = vdwg.mxu0
    %v3763 = vadd.f32 %v2962, %v3759
    %v3764 = vadd.f32 %v2963, %v3761
    %v3765 = vld [vmem:[#allocation19] sm:$0x1]
    %v3767 = vperm.slane %v3765, 0
    %v3769 = vadd.f32 %v3763, %v3767
    %v3770 = vadd.f32 %v3764, %v3767
    %3771 = vadd.xlane.f32.xlu0 %v3769
    %v3772 = vpop.xlane.xlu0 %3771
    %3773 = vadd.xlane.f32.xlu0 %v3770
    %v3774 = vpop.xlane.xlu0 %3773
    %v3775 = vmul.f32 %v3772, %v520
    %v3776 = vmul.f32 %v3774, %v520
    %v3777 = vmul.f32 %v3769, %v3769
    %v3778 = vmul.f32 %v3770, %v3770
    %3779 = vadd.xlane.f32.xlu0 %v3777
    %v3780 = vpop.xlane.xlu0 %3779
    %3781 = vadd.xlane.f32.xlu0 %v3778
    %v3782 = vpop.xlane.xlu0 %3781
    %v3783 = vmul.f32 %v3780, %v520
    %v3784 = vmul.f32 %v3782, %v520
    %v3785 = vmul.f32 %v3775, %v3775
    %v3786 = vmul.f32 %v3776, %v3776
    %v3787 = vsub.f32 %v3783, %v3785
    %v3788 = vsub.f32 %v3784, %v3786
    %v3789 = vsub.f32 %v3769, %v3775
    %v3790 = vsub.f32 %v3770, %v3776
    %v3791 = vadd.f32 %v3787, 1e-05
    %v3792 = vadd.f32 %v3788, 1e-05
    %v3793 = vrsqrt.pop %v3791
    %v3794 = vmul.f32 %v3793, %v3791
    %v3795 = vmul.f32 %v3794, %v3793
    %v3796 = vmul.f32 0.5, %v3795
    %v3797 = vsub.f32 1.5, %v3796
    %v3798 = vmul.f32 %v3793, %v3797
    %vm3799 = vweird.f32 %v3791
    %vm3800 = vweird.f32 %v3793
    %vm3801 = vmor %vm3799, %vm3800
    %v3802 = vsel %vm3801, %v3793, %v3798
    %v3803 = vrsqrt.pop %v3792
    %v3804 = vmul.f32 %v3803, %v3792
    %v3805 = vmul.f32 %v3804, %v3803
    %v3806 = vmul.f32 0.5, %v3805
    %v3807 = vsub.f32 1.5, %v3806
    %v3808 = vmul.f32 %v3803, %v3807
    %vm3809 = vweird.f32 %v3792
    %vm3810 = vweird.f32 %v3803
    %vm3811 = vmor %vm3809, %vm3810
    %v3812 = vsel %vm3811, %v3803, %v3808
    %v3813 = vmul.f32 %v3789, %v3802
    %v3814 = vmul.f32 %v3790, %v3812
    %v3815 = vld [vmem:[%s77] sm:$0x1]
    %v3817 = vperm.slane %v3815, 0
    %v3819 = vmul.f32 %v3813, %v3817
    %v3820 = vmul.f32 %v3814, %v3817
    %v3821 = vld [vmem:[%s79] sm:$0x1]
    %v3823 = vperm.slane %v3821, 0
    %v3825 = vadd.f32 %v3819, %v3823
    %v3826 = vadd.f32 %v3820, %v3823
    %v3827 = vpack.c.bf16 %v3826, %v3825
    %v3828 = vld [vmem:[%s81] sm:$0xf]
    %v3829 = vld [vmem:[%s81 + $0x4] sm:$0xf]
    %v3830 = vld [vmem:[%s81 + $0x8] sm:$0xf]
    %v3831 = vld [vmem:[%s81 + $0xc] sm:$0xf]
    %v3832 = vld [vmem:[%s81 + $0x10] sm:$0xf]
    %v3833 = vld [vmem:[%s81 + $0x14] sm:$0xf]
    %v3834 = vld [vmem:[%s81 + $0x18] sm:$0xf]
    %v3835 = vld [vmem:[%s81 + $0x1c] sm:$0xf]
    %v3836 = vld [vmem:[%s81 + $0x20] sm:$0xf]
    %v3837 = vld [vmem:[%s81 + $0x24] sm:$0xf]
    %v3838 = vld [vmem:[%s81 + $0x28] sm:$0xf]
    %v3839 = vld [vmem:[%s81 + $0x2c] sm:$0xf]
    %v3840 = vld [vmem:[%s81 + $0x30] sm:$0xf]
    %v3841 = vld [vmem:[%s81 + $0x34] sm:$0xf]
    %v3842 = vld [vmem:[%s81 + $0x38] sm:$0xf]
    %v3843 = vld [vmem:[%s81 + $0x3c] sm:$0xf]
    %v3860 = vunpack.c.l.b16 %v3828
    %v3861 = vunpack.c.l.b16 %v3829
    %v3862 = vunpack.c.l.b16 %v3830
    %v3863 = vunpack.c.l.b16 %v3831
    %v3864 = vunpack.c.l.b16 %v3832
    %v3865 = vunpack.c.l.b16 %v3833
    %v3866 = vunpack.c.l.b16 %v3834
    %v3867 = vunpack.c.l.b16 %v3835
    %v3868 = vunpack.c.l.b16 %v3836
    %v3869 = vunpack.c.l.b16 %v3837
    %v3870 = vunpack.c.l.b16 %v3838
    %v3871 = vunpack.c.l.b16 %v3839
    %v3872 = vunpack.c.l.b16 %v3840
    %v3873 = vunpack.c.l.b16 %v3841
    %v3874 = vunpack.c.l.b16 %v3842
    %v3875 = vunpack.c.l.b16 %v3843
    %v3876 = vpack.c.b16 %v3861, %v3860
    %v3877 = vpack.c.b16 %v3863, %v3862
    %v3878 = vpack.c.b16 %v3865, %v3864
    %v3879 = vpack.c.b16 %v3867, %v3866
    %v3880 = vpack.c.b16 %v3869, %v3868
    %v3881 = vpack.c.b16 %v3871, %v3870
    %v3882 = vpack.c.b16 %v3873, %v3872
    %v3883 = vpack.c.b16 %v3875, %v3874
    %3892 = vmatpush.bf16.msra.mxu0 %v3883
    %3893 = vmatpush.bf16.msra.mxu0 %v3882
    %3894 = vmatpush.bf16.msra.mxu0 %v3881
    %3895 = vmatpush.bf16.msra.mxu0 %v3880
    %3896 = vmatpush.bf16.msra.mxu0 %v3879
    %3897 = vmatpush.bf16.msra.mxu0 %v3878
    %3898 = vmatpush.bf16.msra.mxu0 %v3877
    %3899 = vmatpush.bf16.msra.mxu0 %v3876
    %3900 = vmatmul.bf16.gmra.mxu0 %v3827
    %v3901 = vpop.f32.mrf.mxu0
    %v3902 = vadd.f32 0.0, %v3901
    %v3903 = vpop.f32.mrf.mxu0
    %v3904 = vadd.f32 0.0, %v3903
    %3905 = vdwg.mxu0
    %3906 = vst [vmem:[%s83] sm:$0xff] %v3902
    %3907 = vst [vmem:[%s83 + $0x8] sm:$0xff] %v3904
    // Predicated region
    $region214: #{vit_forward.1} parent=1 // pred_check
      _
    $region215: #{vit_forward.1} parent=1 // pred_check_branch
      %3909 = sbr.rel (0) target = $region217
    $region216: #{vit_forward.1} parent=1 // pred_region
      _
    $region217: #{vit_forward.1} parent=1 // pred_fallthru
      _
    // Predicated region
    $region218: #{vit_forward.1} parent=1 // pred_check
      _
    $region219: #{vit_forward.1} parent=1 // pred_check_branch
      %3911 = sbr.rel (0) target = $region221
    $region220: #{vit_forward.1} parent=1 // pred_region
      _
    $region221: #{vit_forward.1} parent=1 // pred_fallthru
      _
    %3912 = vsyncpa [#allocation3], 1
    %3913 = vsyncpa [#allocation5], 1
    %3914 = vsyncpa [#allocation8], 1
    %3915 = vsyncpa [#allocation11], 1
    %3916 = vsyncpa [#allocation14], 1
    %3917 = vsyncpa [#allocation17], 1
    %3918 = vsyncpa [#allocation20], 1

</llo_original>
